<compile_context>
chip_gen: v5e
topology: v5e:2x2
jax: 0.10.0
libtpu: 0.0.40
codegen_flags: <defaults>
</compile_context>

<pallas_src>
import functools

import jax
import jax.numpy as jnp
from jax.experimental import pallas as pl
from jax.experimental.pallas import tpu as pltpu


# ------------------------------ fused kernel -------------------------------

def _sa_fused_kernel(x_ref, w0_ref, b0_ref, w1_ref, b1_ref, o_ref,
                     xpad_ref, hpad_ref, *, H, W, K, pad, lp):
    """Fused SALayer for one batch element (NHWC block of shape (1, H, W, C))."""
    C = x_ref.shape[-1]
    Ch = w0_ref.shape[-1]
    Hp = H + 2 * pad
    HW = H * W

    x_blk = x_ref[0]                                          # (H, W, C) f32

    # Build the zero halo in VMEM (no padded HBM round trip).  Interior column
    # offset `lp` is a multiple of 8 so the interior store stays sublane-aligned.
    xpad_ref[...] = jnp.zeros_like(xpad_ref)
    xpad_ref[pad:pad + H, lp:lp + W, :] = x_blk.astype(xpad_ref.dtype)
    hpad_ref[...] = jnp.zeros_like(hpad_ref)

    # ---- conv0 (C -> C//2, KxK same) + bias + ReLU on the MXU -------------
    # dx (width) shift hoisted out of the tap loop: K retiled slices instead
    # of K*K; the dy shift is a contiguous row slice of the flattened plane.
    acc0 = jnp.zeros((HW, Ch), jnp.float32)
    for dx in range(K):
        col0 = lp - pad + dx
        plane = xpad_ref[:, col0:col0 + W, :].reshape(Hp * W, C)      # bf16
        for dy in range(K):
            patch = plane[dy * W:dy * W + HW, :]
            acc0 = acc0 + jnp.dot(patch, w0_ref[dy * K + dx],
                                  preferred_element_type=jnp.float32)
    h = jnp.maximum(acc0 + b0_ref[...], 0.0)                   # (HW, Ch) f32
    hpad_ref[pad:pad + H, lp:lp + W, :] = h.reshape(H, W, Ch)

    # ---- conv1 (C//2 -> 1, KxK same) + bias + sigmoid on the VPU ----------
    # Single output channel: accumulate per-tap weighted planes at full lane
    # width and do ONE lane reduction at the end (keeps the MXU free and
    # avoids lane-sparse accumulators/stores).
    att_acc = jnp.zeros((HW, Ch), jnp.float32)
    for dx in range(K):
        col0 = lp - pad + dx
        plane = hpad_ref[:, col0:col0 + W, :].reshape(Hp * W, Ch)     # f32
        for dy in range(K):
            tap = plane[dy * W:dy * W + HW, :]
            att_acc = att_acc + tap * w1_ref[dy * K + dx]             # (1, Ch) bcast
    logit = jnp.sum(att_acc, axis=-1, keepdims=True) + b1_ref[...]    # (HW, 1)
    atten = jax.nn.sigmoid(logit)

    out = atten * x_blk.reshape(HW, C).astype(jnp.float32)
    o_ref[0] = out.reshape(H, W, C).astype(o_ref.dtype)


# --------------------------------- wrapper ---------------------------------

def sa_layer(params, x):
    """SALayer forward.  x: (B, H, W, C) NHWC, returns same shape/dtype."""
    w0, b0 = params["w0"], params["b0"]          # (K*K, C, Ch), (1, Ch)
    w1, b1 = params["w1"], params["b1"]          # (K*K, Ch, 1), (1, 1)
    B, H, W, C = x.shape
    KK, _, Ch = w0.shape
    K = int(round(KK ** 0.5))
    pad = K // 2
    lp = ((pad + 7) // 8) * 8                    # sublane-aligned left halo
    Hp = H + 2 * pad
    Wp = lp + W + pad

    w0_bf16 = w0.astype(jnp.bfloat16)            # bf16 inputs for the MXU
    w1_v = jnp.transpose(w1, (0, 2, 1))          # (K*K, 1, Ch) for VPU broadcast

    itemsize = x.dtype.itemsize
    scratch_bytes = Hp * Wp * C * 2 + Hp * Wp * Ch * 4
    block_bytes = 2 * H * W * C * itemsize                       # x block + out block
    weight_bytes = KK * C * Ch * 2 + KK * Ch * 4 + (Ch + 1) * 4
    vmem_limit = int(min(max(4 * (block_bytes + weight_bytes) + 2 * scratch_bytes,
                             16 * 1024 * 1024),
                         48 * 1024 * 1024))
    cost = pl.CostEstimate(
        flops=B * H * W * (2 * KK * C * Ch + 2 * KK * Ch + C),
        transcendentals=B * H * W,
        bytes_accessed=2 * B * H * W * C * itemsize + weight_bytes,
    )

    # TODO(synk): for large images on v7x (64 MiB VMEM / 2 TCs), add a spatial
    # row-tiling grid axis with an H halo; full-image blocks per batch element
    # are used here since SR-sized tiles fit VMEM on all generations at demo
    # shapes.
    kernel = functools.partial(_sa_fused_kernel, H=H, W=W, K=K, pad=pad, lp=lp)
    return pl.pallas_call(
        kernel,
        out_shape=jax.ShapeDtypeStruct((B, H, W, C), x.dtype),
        grid=(B,),
        in_specs=[
            pl.BlockSpec((1, H, W, C), lambda b: (b, 0, 0, 0)),
            pl.BlockSpec((KK, C, Ch), lambda b: (0, 0, 0)),
            pl.BlockSpec((1, Ch), lambda b: (0, 0)),
            pl.BlockSpec((KK, 1, Ch), lambda b: (0, 0, 0)),
            pl.BlockSpec((1, 1), lambda b: (0, 0)),
        ],
        out_specs=pl.BlockSpec((1, H, W, C), lambda b: (b, 0, 0, 0)),
        scratch_shapes=[
            pltpu.VMEM((Hp, Wp, C), jnp.bfloat16),   # zero-padded x (MXU input)
            pltpu.VMEM((Hp, Wp, Ch), jnp.float32),   # zero-padded relu(conv0(x))
        ],
        compiler_params=pltpu.CompilerParams(
            dimension_semantics=("parallel",),
            vmem_limit_bytes=vmem_limit),
        cost_estimate=cost,
    )(x, w0_bf16, b0, w1_v, b1)


def sa_layer_nchw(params, x_nchw):
    """Convenience wrapper matching the PyTorch NCHW interface."""
    x = jnp.transpose(x_nchw, (0, 2, 3, 1))
    return jnp.transpose(sa_layer(params, x), (0, 3, 1, 2))


# ----------------------------- params / reference --------------------------

def build_sa_params(key, channel, k=3):
    ch = channel // 2
    k0w, k0b, k1w, k1b = jax.random.split(key, 4)
    return {
        "w0": jax.random.normal(k0w, (k * k, channel, ch), jnp.float32)
              / jnp.sqrt(channel * k * k),
        "b0": 0.01 * jax.random.normal(k0b, (1, ch), jnp.float32),
        "w1": jax.random.normal(k1w, (k * k, ch, 1), jnp.float32)
              / jnp.sqrt(ch * k * k),
        "b1": 0.01 * jax.random.normal(k1b, (1, 1), jnp.float32),
    }


def sa_layer_ref(params, x):
    """Pure-JAX reference (mirrors the kernel's bf16-MXU / f32-VPU numerics)."""
    w0, b0, w1, b1 = params["w0"], params["b0"], params["w1"], params["b1"]
    B, H, W, C = x.shape
    KK, _, Ch = w0.shape
    K = int(round(KK ** 0.5))
    pad = K // 2
    xp = jnp.pad(x.astype(jnp.bfloat16), ((0, 0), (pad, pad), (pad, pad), (0, 0)))
    w0b = w0.astype(jnp.bfloat16)
    acc = jnp.zeros((B, H, W, Ch), jnp.float32)
    for dy in range(K):
        for dx in range(K):
            acc = acc + jnp.einsum("bhwc,cf->bhwf",
                                   xp[:, dy:dy + H, dx:dx + W, :],
                                   w0b[dy * K + dx],
                                   preferred_element_type=jnp.float32)
    h = jnp.maximum(acc + b0[0], 0.0)
    hp = jnp.pad(h, ((0, 0), (pad, pad), (pad, pad), (0, 0)))
    att = jnp.zeros((B, H, W, 1), jnp.float32)
    for dy in range(K):
        for dx in range(K):
            att = att + jnp.sum(hp[:, dy:dy + H, dx:dx + W, :] * w1[dy * K + dx][:, 0],
                                axis=-1, keepdims=True)
    atten = jax.nn.sigmoid(att + b1[0, 0])
    return atten * x


# ----------------------------------- main -----------------------------------

if __name__ == "__main__":
    key = jax.random.PRNGKey(0)
    # SALayer in AIN is instantiated with channel = 2 * n_feats = 128.
    B, C, H, W = 2, 128, 16, 16
    params = build_sa_params(jax.random.fold_in(key, 1), channel=C)
    x_nchw = jax.random.normal(jax.random.fold_in(key, 2), (B, C, H, W), jnp.float32)

    fwd = jax.jit(sa_layer_nchw)
    out = jax.block_until_ready(fwd(params, x_nchw))

    assert out.shape == (B, C, H, W), out.shape
    assert bool(jnp.all(jnp.isfinite(out)))

    x_nhwc = jnp.transpose(x_nchw, (0, 2, 3, 1))
    ref = jnp.transpose(sa_layer_ref(params, x_nhwc), (0, 3, 1, 2))
    max_err = float(jnp.max(jnp.abs(out - ref)))
    assert max_err < 2e-2, f"max abs error {max_err}"

    print("KERNEL_OK")
</pallas_src>

<mosaic_0001>
module attributes {stable_mosaic.version = 11 : i64} {
  func.func @_sa_fused_kernel(%arg0: i32, %arg1: memref<1x16x16x128xf32, #tpu.memory_space<vmem>>, %arg2: memref<9x128x64xbf16, #tpu.memory_space<vmem>>, %arg3: memref<1x64xf32, #tpu.memory_space<vmem>>, %arg4: memref<9x1x64xf32, #tpu.memory_space<vmem>>, %arg5: memref<1x1xf32, #tpu.memory_space<vmem>>, %arg6: memref<1x16x16x128xf32, #tpu.memory_space<vmem>>, %arg7: memref<18x25x128xbf16, #tpu.memory_space<vmem>>, %arg8: memref<18x25x64xf32, #tpu.memory_space<vmem>>) attributes {dimension_semantics = [#tpu.dimension_semantics<parallel>], iteration_bounds = array<i64: 2>, scalar_prefetch = 0 : i64, scratch_operands = 2 : i64, tpu.core_type = #tpu.core_type<tc>, window_params = [{transform_indices = @transform_0, window_bounds = array<i64: 1, 16, 16, 128>}, {pipeline_mode = #tpu.pipeline_mode<synchronous>, transform_indices = @transform_1, window_bounds = array<i64: 9, 128, 64>}, {pipeline_mode = #tpu.pipeline_mode<synchronous>, transform_indices = @transform_2, window_bounds = array<i64: 1, 64>}, {pipeline_mode = #tpu.pipeline_mode<synchronous>, transform_indices = @transform_3, window_bounds = array<i64: 9, 1, 64>}, {pipeline_mode = #tpu.pipeline_mode<synchronous>, transform_indices = @transform_4, window_bounds = array<i64: 1, 1>}, {transform_indices = @transform_5, window_bounds = array<i64: 1, 16, 16, 128>}]} {
    %c0 = arith.constant 0 : index
    %c0_0 = arith.constant 0 : index
    %c0_1 = arith.constant 0 : index
    %c0_2 = arith.constant 0 : index
    %0 = vector.load %arg1[%c0, %c0_0, %c0_1, %c0_2] : memref<1x16x16x128xf32, #tpu.memory_space<vmem>>, vector<1x16x16x128xf32>
    %1 = vector.shape_cast %0 : vector<1x16x16x128xf32> to vector<16x16x128xf32>
    %cst = arith.constant 0.000000e+00 : bf16
    %2 = vector.broadcast %cst : bf16 to vector<18x25x128xbf16>
    %c0_3 = arith.constant 0 : index
    %c0_4 = arith.constant 0 : index
    %c0_5 = arith.constant 0 : index
    %3 = vector.load %arg7[%c0_3, %c0_4, %c0_5] : memref<18x25x128xbf16, #tpu.memory_space<vmem>>, vector<18x25x128xbf16>
    tpu.vector_store %arg7[%c0_3, %c0_4, %c0_5], %2 {strides = array<i32>} : memref<18x25x128xbf16, #tpu.memory_space<vmem>>, vector<18x25x128xbf16>,
    %4 = arith.truncf %1 : vector<16x16x128xf32> to vector<16x16x128xbf16>
    %c1 = arith.constant 1 : index
    %c8 = arith.constant 8 : index
    %c0_6 = arith.constant 0 : index
    %5 = vector.load %arg7[%c1, %c8, %c0_6] : memref<18x25x128xbf16, #tpu.memory_space<vmem>>, vector<16x16x128xbf16>
    tpu.vector_store %arg7[%c1, %c8, %c0_6], %4 {strides = array<i32>} : memref<18x25x128xbf16, #tpu.memory_space<vmem>>, vector<16x16x128xbf16>,
    %cst_7 = arith.constant 0.000000e+00 : f32
    %6 = vector.broadcast %cst_7 : f32 to vector<18x25x64xf32>
    %c0_8 = arith.constant 0 : index
    %c0_9 = arith.constant 0 : index
    %c0_10 = arith.constant 0 : index
    %7 = vector.load %arg8[%c0_8, %c0_9, %c0_10] : memref<18x25x64xf32, #tpu.memory_space<vmem>>, vector<18x25x64xf32>
    tpu.vector_store %arg8[%c0_8, %c0_9, %c0_10], %6 {strides = array<i32>} : memref<18x25x64xf32, #tpu.memory_space<vmem>>, vector<18x25x64xf32>,
    %cst_11 = arith.constant 0.000000e+00 : f32
    %8 = vector.broadcast %cst_11 : f32 to vector<256x64xf32>
    %c0_12 = arith.constant 0 : index
    %c7 = arith.constant 7 : index
    %c0_13 = arith.constant 0 : index
    %9 = vector.load %arg7[%c0_12, %c7, %c0_13] : memref<18x25x128xbf16, #tpu.memory_space<vmem>>, vector<18x16x128xbf16>
    %10 = vector.shape_cast %9 : vector<18x16x128xbf16> to vector<288x128xbf16>
    %11 = vector.extract_strided_slice %10 {offsets = [0, 0], sizes = [256, 128], strides = [1, 1]} : vector<288x128xbf16> to vector<256x128xbf16>
    %c0_14 = arith.constant 0 : index
    %c0_15 = arith.constant 0 : index
    %c0_16 = arith.constant 0 : index
    %12 = vector.load %arg2[%c0_14, %c0_15, %c0_16] : memref<9x128x64xbf16, #tpu.memory_space<vmem>>, vector<1x128x64xbf16>
    %13 = vector.shape_cast %12 : vector<1x128x64xbf16> to vector<128x64xbf16>
    %cst_17 = arith.constant dense<0.000000e+00> : vector<256x64xf32>
    %14 = tpu.matmul %11, %13, %cst_17 {dimension_numbers = #tpu.dot_dimension_numbers<[1], [0], [0], [1], [0, 0, 1, 1], [], []>} : vector<256x128xbf16>, vector<128x64xbf16>, vector<256x64xf32> -> vector<256x64xf32>
    %15 = arith.addf %8, %14 : vector<256x64xf32>
    %16 = vector.extract_strided_slice %10 {offsets = [16, 0], sizes = [256, 128], strides = [1, 1]} : vector<288x128xbf16> to vector<256x128xbf16>
    %c3 = arith.constant 3 : index
    %c0_18 = arith.constant 0 : index
    %c0_19 = arith.constant 0 : index
    %17 = vector.load %arg2[%c3, %c0_18, %c0_19] : memref<9x128x64xbf16, #tpu.memory_space<vmem>>, vector<1x128x64xbf16>
    %18 = vector.shape_cast %17 : vector<1x128x64xbf16> to vector<128x64xbf16>
    %cst_20 = arith.constant dense<0.000000e+00> : vector<256x64xf32>
    %19 = tpu.matmul %16, %18, %cst_20 {dimension_numbers = #tpu.dot_dimension_numbers<[1], [0], [0], [1], [0, 0, 1, 1], [], []>} : vector<256x128xbf16>, vector<128x64xbf16>, vector<256x64xf32> -> vector<256x64xf32>
    %20 = arith.addf %15, %19 : vector<256x64xf32>
    %21 = vector.extract_strided_slice %10 {offsets = [32, 0], sizes = [256, 128], strides = [1, 1]} : vector<288x128xbf16> to vector<256x128xbf16>
    %c6 = arith.constant 6 : index
    %c0_21 = arith.constant 0 : index
    %c0_22 = arith.constant 0 : index
    %22 = vector.load %arg2[%c6, %c0_21, %c0_22] : memref<9x128x64xbf16, #tpu.memory_space<vmem>>, vector<1x128x64xbf16>
    %23 = vector.shape_cast %22 : vector<1x128x64xbf16> to vector<128x64xbf16>
    %cst_23 = arith.constant dense<0.000000e+00> : vector<256x64xf32>
    %24 = tpu.matmul %21, %23, %cst_23 {dimension_numbers = #tpu.dot_dimension_numbers<[1], [0], [0], [1], [0, 0, 1, 1], [], []>} : vector<256x128xbf16>, vector<128x64xbf16>, vector<256x64xf32> -> vector<256x64xf32>
    %25 = arith.addf %20, %24 : vector<256x64xf32>
    %c0_24 = arith.constant 0 : index
    %c8_25 = arith.constant 8 : index
    %c0_26 = arith.constant 0 : index
    %26 = vector.load %arg7[%c0_24, %c8_25, %c0_26] : memref<18x25x128xbf16, #tpu.memory_space<vmem>>, vector<18x16x128xbf16>
    %27 = vector.shape_cast %26 : vector<18x16x128xbf16> to vector<288x128xbf16>
    %28 = vector.extract_strided_slice %27 {offsets = [0, 0], sizes = [256, 128], strides = [1, 1]} : vector<288x128xbf16> to vector<256x128xbf16>
    %c1_27 = arith.constant 1 : index
    %c0_28 = arith.constant 0 : index
    %c0_29 = arith.constant 0 : index
    %29 = vector.load %arg2[%c1_27, %c0_28, %c0_29] : memref<9x128x64xbf16, #tpu.memory_space<vmem>>, vector<1x128x64xbf16>
    %30 = vector.shape_cast %29 : vector<1x128x64xbf16> to vector<128x64xbf16>
    %cst_30 = arith.constant dense<0.000000e+00> : vector<256x64xf32>
    %31 = tpu.matmul %28, %30, %cst_30 {dimension_numbers = #tpu.dot_dimension_numbers<[1], [0], [0], [1], [0, 0, 1, 1], [], []>} : vector<256x128xbf16>, vector<128x64xbf16>, vector<256x64xf32> -> vector<256x64xf32>
    %32 = arith.addf %25, %31 : vector<256x64xf32>
    %33 = vector.extract_strided_slice %27 {offsets = [16, 0], sizes = [256, 128], strides = [1, 1]} : vector<288x128xbf16> to vector<256x128xbf16>
    %c4 = arith.constant 4 : index
    %c0_31 = arith.constant 0 : index
    %c0_32 = arith.constant 0 : index
    %34 = vector.load %arg2[%c4, %c0_31, %c0_32] : memref<9x128x64xbf16, #tpu.memory_space<vmem>>, vector<1x128x64xbf16>
    %35 = vector.shape_cast %34 : vector<1x128x64xbf16> to vector<128x64xbf16>
    %cst_33 = arith.constant dense<0.000000e+00> : vector<256x64xf32>
    %36 = tpu.matmul %33, %35, %cst_33 {dimension_numbers = #tpu.dot_dimension_numbers<[1], [0], [0], [1], [0, 0, 1, 1], [], []>} : vector<256x128xbf16>, vector<128x64xbf16>, vector<256x64xf32> -> vector<256x64xf32>
    %37 = arith.addf %32, %36 : vector<256x64xf32>
    %38 = vector.extract_strided_slice %27 {offsets = [32, 0], sizes = [256, 128], strides = [1, 1]} : vector<288x128xbf16> to vector<256x128xbf16>
    %c7_34 = arith.constant 7 : index
    %c0_35 = arith.constant 0 : index
    %c0_36 = arith.constant 0 : index
    %39 = vector.load %arg2[%c7_34, %c0_35, %c0_36] : memref<9x128x64xbf16, #tpu.memory_space<vmem>>, vector<1x128x64xbf16>
    %40 = vector.shape_cast %39 : vector<1x128x64xbf16> to vector<128x64xbf16>
    %cst_37 = arith.constant dense<0.000000e+00> : vector<256x64xf32>
    %41 = tpu.matmul %38, %40, %cst_37 {dimension_numbers = #tpu.dot_dimension_numbers<[1], [0], [0], [1], [0, 0, 1, 1], [], []>} : vector<256x128xbf16>, vector<128x64xbf16>, vector<256x64xf32> -> vector<256x64xf32>
    %42 = arith.addf %37, %41 : vector<256x64xf32>
    %c0_38 = arith.constant 0 : index
    %c9 = arith.constant 9 : index
    %c0_39 = arith.constant 0 : index
    %43 = vector.load %arg7[%c0_38, %c9, %c0_39] : memref<18x25x128xbf16, #tpu.memory_space<vmem>>, vector<18x16x128xbf16>
    %44 = vector.shape_cast %43 : vector<18x16x128xbf16> to vector<288x128xbf16>
    %45 = vector.extract_strided_slice %44 {offsets = [0, 0], sizes = [256, 128], strides = [1, 1]} : vector<288x128xbf16> to vector<256x128xbf16>
    %c2 = arith.constant 2 : index
    %c0_40 = arith.constant 0 : index
    %c0_41 = arith.constant 0 : index
    %46 = vector.load %arg2[%c2, %c0_40, %c0_41] : memref<9x128x64xbf16, #tpu.memory_space<vmem>>, vector<1x128x64xbf16>
    %47 = vector.shape_cast %46 : vector<1x128x64xbf16> to vector<128x64xbf16>
    %cst_42 = arith.constant dense<0.000000e+00> : vector<256x64xf32>
    %48 = tpu.matmul %45, %47, %cst_42 {dimension_numbers = #tpu.dot_dimension_numbers<[1], [0], [0], [1], [0, 0, 1, 1], [], []>} : vector<256x128xbf16>, vector<128x64xbf16>, vector<256x64xf32> -> vector<256x64xf32>
    %49 = arith.addf %42, %48 : vector<256x64xf32>
    %50 = vector.extract_strided_slice %44 {offsets = [16, 0], sizes = [256, 128], strides = [1, 1]} : vector<288x128xbf16> to vector<256x128xbf16>
    %c5 = arith.constant 5 : index
    %c0_43 = arith.constant 0 : index
    %c0_44 = arith.constant 0 : index
    %51 = vector.load %arg2[%c5, %c0_43, %c0_44] : memref<9x128x64xbf16, #tpu.memory_space<vmem>>, vector<1x128x64xbf16>
    %52 = vector.shape_cast %51 : vector<1x128x64xbf16> to vector<128x64xbf16>
    %cst_45 = arith.constant dense<0.000000e+00> : vector<256x64xf32>
    %53 = tpu.matmul %50, %52, %cst_45 {dimension_numbers = #tpu.dot_dimension_numbers<[1], [0], [0], [1], [0, 0, 1, 1], [], []>} : vector<256x128xbf16>, vector<128x64xbf16>, vector<256x64xf32> -> vector<256x64xf32>
    %54 = arith.addf %49, %53 : vector<256x64xf32>
    %55 = vector.extract_strided_slice %44 {offsets = [32, 0], sizes = [256, 128], strides = [1, 1]} : vector<288x128xbf16> to vector<256x128xbf16>
    %c8_46 = arith.constant 8 : index
    %c0_47 = arith.constant 0 : index
    %c0_48 = arith.constant 0 : index
    %56 = vector.load %arg2[%c8_46, %c0_47, %c0_48] : memref<9x128x64xbf16, #tpu.memory_space<vmem>>, vector<1x128x64xbf16>
    %57 = vector.shape_cast %56 : vector<1x128x64xbf16> to vector<128x64xbf16>
    %cst_49 = arith.constant dense<0.000000e+00> : vector<256x64xf32>
    %58 = tpu.matmul %55, %57, %cst_49 {dimension_numbers = #tpu.dot_dimension_numbers<[1], [0], [0], [1], [0, 0, 1, 1], [], []>} : vector<256x128xbf16>, vector<128x64xbf16>, vector<256x64xf32> -> vector<256x64xf32>
    %59 = arith.addf %54, %58 : vector<256x64xf32>
    %c0_50 = arith.constant 0 : index
    %c0_51 = arith.constant 0 : index
    %60 = vector.load %arg3[%c0_50, %c0_51] : memref<1x64xf32, #tpu.memory_space<vmem>>, vector<1x64xf32>
    %61 = vector.broadcast %60 : vector<1x64xf32> to vector<256x64xf32>
    %62 = arith.addf %59, %61 : vector<256x64xf32>
    %cst_52 = arith.constant 0.000000e+00 : f32
    %63 = vector.broadcast %cst_52 : f32 to vector<256x64xf32>
    %64 = arith.maximumf %62, %63 : vector<256x64xf32>
    %65 = vector.shape_cast %64 : vector<256x64xf32> to vector<16x16x64xf32>
    %c1_53 = arith.constant 1 : index
    %c8_54 = arith.constant 8 : index
    %c0_55 = arith.constant 0 : index
    %66 = vector.load %arg8[%c1_53, %c8_54, %c0_55] : memref<18x25x64xf32, #tpu.memory_space<vmem>>, vector<16x16x64xf32>
    tpu.vector_store %arg8[%c1_53, %c8_54, %c0_55], %65 {strides = array<i32>} : memref<18x25x64xf32, #tpu.memory_space<vmem>>, vector<16x16x64xf32>,
    %cst_56 = arith.constant 0.000000e+00 : f32
    %67 = vector.broadcast %cst_56 : f32 to vector<256x64xf32>
    %c0_57 = arith.constant 0 : index
    %c7_58 = arith.constant 7 : index
    %c0_59 = arith.constant 0 : index
    %68 = vector.load %arg8[%c0_57, %c7_58, %c0_59] : memref<18x25x64xf32, #tpu.memory_space<vmem>>, vector<18x16x64xf32>
    %69 = vector.shape_cast %68 : vector<18x16x64xf32> to vector<288x64xf32>
    %70 = vector.extract_strided_slice %69 {offsets = [0, 0], sizes = [256, 64], strides = [1, 1]} : vector<288x64xf32> to vector<256x64xf32>
    %c0_60 = arith.constant 0 : index
    %c0_61 = arith.constant 0 : index
    %c0_62 = arith.constant 0 : index
    %71 = vector.load %arg4[%c0_60, %c0_61, %c0_62] : memref<9x1x64xf32, #tpu.memory_space<vmem>>, vector<1x1x64xf32>
    %72 = vector.shape_cast %71 : vector<1x1x64xf32> to vector<1x64xf32>
    %73 = vector.broadcast %72 : vector<1x64xf32> to vector<256x64xf32>
    %74 = arith.mulf %70, %73 : vector<256x64xf32>
    %75 = arith.addf %67, %74 : vector<256x64xf32>
    %76 = vector.extract_strided_slice %69 {offsets = [16, 0], sizes = [256, 64], strides = [1, 1]} : vector<288x64xf32> to vector<256x64xf32>
    %c3_63 = arith.constant 3 : index
    %c0_64 = arith.constant 0 : index
    %c0_65 = arith.constant 0 : index
    %77 = vector.load %arg4[%c3_63, %c0_64, %c0_65] : memref<9x1x64xf32, #tpu.memory_space<vmem>>, vector<1x1x64xf32>
    %78 = vector.shape_cast %77 : vector<1x1x64xf32> to vector<1x64xf32>
    %79 = vector.broadcast %78 : vector<1x64xf32> to vector<256x64xf32>
    %80 = arith.mulf %76, %79 : vector<256x64xf32>
    %81 = arith.addf %75, %80 : vector<256x64xf32>
    %82 = vector.extract_strided_slice %69 {offsets = [32, 0], sizes = [256, 64], strides = [1, 1]} : vector<288x64xf32> to vector<256x64xf32>
    %c6_66 = arith.constant 6 : index
    %c0_67 = arith.constant 0 : index
    %c0_68 = arith.constant 0 : index
    %83 = vector.load %arg4[%c6_66, %c0_67, %c0_68] : memref<9x1x64xf32, #tpu.memory_space<vmem>>, vector<1x1x64xf32>
    %84 = vector.shape_cast %83 : vector<1x1x64xf32> to vector<1x64xf32>
    %85 = vector.broadcast %84 : vector<1x64xf32> to vector<256x64xf32>
    %86 = arith.mulf %82, %85 : vector<256x64xf32>
    %87 = arith.addf %81, %86 : vector<256x64xf32>
    %c0_69 = arith.constant 0 : index
    %c8_70 = arith.constant 8 : index
    %c0_71 = arith.constant 0 : index
    %88 = vector.load %arg8[%c0_69, %c8_70, %c0_71] : memref<18x25x64xf32, #tpu.memory_space<vmem>>, vector<18x16x64xf32>
    %89 = vector.shape_cast %88 : vector<18x16x64xf32> to vector<288x64xf32>
    %90 = vector.extract_strided_slice %89 {offsets = [0, 0], sizes = [256, 64], strides = [1, 1]} : vector<288x64xf32> to vector<256x64xf32>
    %c1_72 = arith.constant 1 : index
    %c0_73 = arith.constant 0 : index
    %c0_74 = arith.constant 0 : index
    %91 = vector.load %arg4[%c1_72, %c0_73, %c0_74] : memref<9x1x64xf32, #tpu.memory_space<vmem>>, vector<1x1x64xf32>
    %92 = vector.shape_cast %91 : vector<1x1x64xf32> to vector<1x64xf32>
    %93 = vector.broadcast %92 : vector<1x64xf32> to vector<256x64xf32>
    %94 = arith.mulf %90, %93 : vector<256x64xf32>
    %95 = arith.addf %87, %94 : vector<256x64xf32>
    %96 = vector.extract_strided_slice %89 {offsets = [16, 0], sizes = [256, 64], strides = [1, 1]} : vector<288x64xf32> to vector<256x64xf32>
    %c4_75 = arith.constant 4 : index
    %c0_76 = arith.constant 0 : index
    %c0_77 = arith.constant 0 : index
    %97 = vector.load %arg4[%c4_75, %c0_76, %c0_77] : memref<9x1x64xf32, #tpu.memory_space<vmem>>, vector<1x1x64xf32>
    %98 = vector.shape_cast %97 : vector<1x1x64xf32> to vector<1x64xf32>
    %99 = vector.broadcast %98 : vector<1x64xf32> to vector<256x64xf32>
    %100 = arith.mulf %96, %99 : vector<256x64xf32>
    %101 = arith.addf %95, %100 : vector<256x64xf32>
    %102 = vector.extract_strided_slice %89 {offsets = [32, 0], sizes = [256, 64], strides = [1, 1]} : vector<288x64xf32> to vector<256x64xf32>
    %c7_78 = arith.constant 7 : index
    %c0_79 = arith.constant 0 : index
    %c0_80 = arith.constant 0 : index
    %103 = vector.load %arg4[%c7_78, %c0_79, %c0_80] : memref<9x1x64xf32, #tpu.memory_space<vmem>>, vector<1x1x64xf32>
    %104 = vector.shape_cast %103 : vector<1x1x64xf32> to vector<1x64xf32>
    %105 = vector.broadcast %104 : vector<1x64xf32> to vector<256x64xf32>
    %106 = arith.mulf %102, %105 : vector<256x64xf32>
    %107 = arith.addf %101, %106 : vector<256x64xf32>
    %c0_81 = arith.constant 0 : index
    %c9_82 = arith.constant 9 : index
    %c0_83 = arith.constant 0 : index
    %108 = vector.load %arg8[%c0_81, %c9_82, %c0_83] : memref<18x25x64xf32, #tpu.memory_space<vmem>>, vector<18x16x64xf32>
    %109 = vector.shape_cast %108 : vector<18x16x64xf32> to vector<288x64xf32>
    %110 = vector.extract_strided_slice %109 {offsets = [0, 0], sizes = [256, 64], strides = [1, 1]} : vector<288x64xf32> to vector<256x64xf32>
    %c2_84 = arith.constant 2 : index
    %c0_85 = arith.constant 0 : index
    %c0_86 = arith.constant 0 : index
    %111 = vector.load %arg4[%c2_84, %c0_85, %c0_86] : memref<9x1x64xf32, #tpu.memory_space<vmem>>, vector<1x1x64xf32>
    %112 = vector.shape_cast %111 : vector<1x1x64xf32> to vector<1x64xf32>
    %113 = vector.broadcast %112 : vector<1x64xf32> to vector<256x64xf32>
    %114 = arith.mulf %110, %113 : vector<256x64xf32>
    %115 = arith.addf %107, %114 : vector<256x64xf32>
    %116 = vector.extract_strided_slice %109 {offsets = [16, 0], sizes = [256, 64], strides = [1, 1]} : vector<288x64xf32> to vector<256x64xf32>
    %c5_87 = arith.constant 5 : index
    %c0_88 = arith.constant 0 : index
    %c0_89 = arith.constant 0 : index
    %117 = vector.load %arg4[%c5_87, %c0_88, %c0_89] : memref<9x1x64xf32, #tpu.memory_space<vmem>>, vector<1x1x64xf32>
    %118 = vector.shape_cast %117 : vector<1x1x64xf32> to vector<1x64xf32>
    %119 = vector.broadcast %118 : vector<1x64xf32> to vector<256x64xf32>
    %120 = arith.mulf %116, %119 : vector<256x64xf32>
    %121 = arith.addf %115, %120 : vector<256x64xf32>
    %122 = vector.extract_strided_slice %109 {offsets = [32, 0], sizes = [256, 64], strides = [1, 1]} : vector<288x64xf32> to vector<256x64xf32>
    %c8_90 = arith.constant 8 : index
    %c0_91 = arith.constant 0 : index
    %c0_92 = arith.constant 0 : index
    %123 = vector.load %arg4[%c8_90, %c0_91, %c0_92] : memref<9x1x64xf32, #tpu.memory_space<vmem>>, vector<1x1x64xf32>
    %124 = vector.shape_cast %123 : vector<1x1x64xf32> to vector<1x64xf32>
    %125 = vector.broadcast %124 : vector<1x64xf32> to vector<256x64xf32>
    %126 = arith.mulf %122, %125 : vector<256x64xf32>
    %127 = arith.addf %121, %126 : vector<256x64xf32>
    %cst_93 = arith.constant dense<0.000000e+00> : vector<256xf32>
    %128 = vector.multi_reduction <add>, %127, %cst_93 [1] : vector<256x64xf32> to vector<256xf32>
    %129 = vector.shape_cast %128 : vector<256xf32> to vector<256x1xf32>
    %c0_94 = arith.constant 0 : index
    %c0_95 = arith.constant 0 : index
    %130 = vector.load %arg5[%c0_94, %c0_95] : memref<1x1xf32, #tpu.memory_space<vmem>>, vector<1x1xf32>
    %131 = vector.broadcast %130 : vector<1x1xf32> to vector<256x1xf32>
    %132 = arith.addf %129, %131 : vector<256x1xf32>
    %133 = arith.negf %132 : vector<256x1xf32>
    %134 = math.exp %133 : vector<256x1xf32>
    %cst_96 = arith.constant 1.000000e+00 : f32
    %135 = vector.broadcast %cst_96 : f32 to vector<256x1xf32>
    %136 = arith.addf %135, %134 : vector<256x1xf32>
    %137 = arith.divf %135, %136 : vector<256x1xf32>
    %138 = vector.shape_cast %1 : vector<16x16x128xf32> to vector<256x128xf32>
    %139 = vector.broadcast %137 : vector<256x1xf32> to vector<256x128xf32>
    %140 = arith.mulf %139, %138 : vector<256x128xf32>
    %141 = vector.shape_cast %140 : vector<256x128xf32> to vector<16x16x128xf32>
    %c0_97 = arith.constant 0 : index
    %c0_98 = arith.constant 0 : index
    %c0_99 = arith.constant 0 : index
    %c0_100 = arith.constant 0 : index
    %142 = vector.load %arg6[%c0_97, %c0_98, %c0_99, %c0_100] : memref<1x16x16x128xf32, #tpu.memory_space<vmem>>, vector<1x16x16x128xf32>
    %143 = vector.shape_cast %142 : vector<1x16x16x128xf32> to vector<16x16x128xf32>
    %144 = vector.shape_cast %141 : vector<16x16x128xf32> to vector<1x16x16x128xf32>
    tpu.vector_store %arg6[%c0_97, %c0_98, %c0_99, %c0_100], %144 {strides = array<i32>} : memref<1x16x16x128xf32, #tpu.memory_space<vmem>>, vector<1x16x16x128xf32>,
    return
  }
  func.func @transform_0(%arg0: i32) -> (i32, i32, i32, i32) {
    %c0_i32 = arith.constant 0 : i32
    %c0_i32_0 = arith.constant 0 : i32
    %c0_i32_1 = arith.constant 0 : i32
    %c0_i32_2 = arith.constant 0 : i32
    return %arg0, %c0_i32, %c0_i32_0, %c0_i32_1 : i32, i32, i32, i32
  }
  func.func @transform_1(%arg0: i32) -> (i32, i32, i32) {
    %c0_i32 = arith.constant 0 : i32
    %c0_i32_0 = arith.constant 0 : i32
    %c0_i32_1 = arith.constant 0 : i32
    %c0_i32_2 = arith.constant 0 : i32
    return %c0_i32, %c0_i32_0, %c0_i32_1 : i32, i32, i32
  }
  func.func @transform_2(%arg0: i32) -> (i32, i32) {
    %c0_i32 = arith.constant 0 : i32
    %c0_i32_0 = arith.constant 0 : i32
    %c0_i32_1 = arith.constant 0 : i32
    return %c0_i32, %c0_i32_0 : i32, i32
  }
  func.func @transform_3(%arg0: i32) -> (i32, i32, i32) {
    %c0_i32 = arith.constant 0 : i32
    %c0_i32_0 = arith.constant 0 : i32
    %c0_i32_1 = arith.constant 0 : i32
    %c0_i32_2 = arith.constant 0 : i32
    return %c0_i32, %c0_i32_0, %c0_i32_1 : i32, i32, i32
  }
  func.func @transform_4(%arg0: i32) -> (i32, i32) {
    %c0_i32 = arith.constant 0 : i32
    %c0_i32_0 = arith.constant 0 : i32
    %c0_i32_1 = arith.constant 0 : i32
    return %c0_i32, %c0_i32_0 : i32, i32
  }
  func.func @transform_5(%arg0: i32) -> (i32, i32, i32, i32) {
    %c0_i32 = arith.constant 0 : i32
    %c0_i32_0 = arith.constant 0 : i32
    %c0_i32_1 = arith.constant 0 : i32
    %c0_i32_2 = arith.constant 0 : i32
    return %arg0, %c0_i32, %c0_i32_0, %c0_i32_1 : i32, i32, i32, i32
  }
}

</mosaic_0001>

<llo_original>
// kernel: sa_layer_nchw.1
$region0: #{sa_layer_nchw.1}
  #allocation0 [shape = 'u32[]', space=smem, size = 0x4, offset = 0x4, fixed_abs, tag = 'smem constant byte address 0x4 - core index']
  #allocation1 [shape = 'u32[72,128]{1,0:T(1,128)}', space=vmem, size = 0x9000, scoped, tag = 'internal scratch']
  #allocation2 [shape = 'bf16[18,25,128]{2,1,0:T(8,128)(2,1)}', space=vmem, size = 0x24000, scoped, tag = 'scratch operand']
  #allocation3 [shape = 'f32[18,25,64]{2,1,0:T(8,128)}', space=vmem, size = 0x48000, scoped, tag = 'scratch operand']
  #allocation4 [shape = 'f32[1,1]{1,0:T(1,128)S(1)}', space=vmem, size = 0x200, scoped, tag = 'scoped memory for sa_layer_nchw.1']
  %s0 = inlined_call_operand.vmem [shape: f32[2,16,16,128], index: 0, kind: input, shape index: {}]
  %s1 = inlined_call_operand.vmem [shape: bf16[9,128,64], index: 1, kind: input, shape index: {}]
  %s2 = inlined_call_operand.vmem [shape: f32[1,64], index: 2, kind: input, shape index: {}]
  %s3 = inlined_call_operand.vmem [shape: f32[9,1,64], index: 3, kind: input, shape index: {}]
  %s4 = inlined_call_operand.<no memory space> [shape: f32[1,1], index: 4, kind: input, shape index: {}]
  %s5 = inlined_call_operand.hbm [shape: f32[2,16,16,128], index: 5, kind: output, shape index: {}]
  %s6 = sld [smem:[#allocation0]]
  $region53: #{sa_layer_nchw.1} parent=0
    _
  %s8 = ssub.s32 1, %s6
  %s9 = scalar_select 0, %s8, %s6
  %v10 = vstv %s4
  %11 = vst [vmem:[#allocation4] sm:$0x1] %v10
  $region1: #{sa_layer_nchw.1} parent=0
    #allocation5 [shape = 'u8[262144]{0}', space=vmem, size = 0x40000, scoped, tag = 'output window, operand 0']
    #allocation6 [shape = 's32[2]{0}', space=sflag, size = 0x8, scoped, tag = 'scoped memory for sa_layer_nchw.1']
    %12 = vsyncpa [#allocation6], 0
    %s13 = scalar_lea.sflag [#allocation6], 1
    %14 = vsyncpa %s13, 0
    loop: start=0, step=1, limit=4
    $region2: #{sa_layer_nchw.1} parent=1 // loop_pre_header
      _
    $region3: #{sa_layer_nchw.1} parent=1 // loop_header
      %s16 = sphi 0, %s20
      %p17 = scmp.ge.s32.totalorder %s16, 4
      %s26 = sphi 0, %s28
      %s29 = sphi 0, %s26
      %s30 = sphi 0, %s29
      %s46 = sphi 0, %s30
      %s50 = sphi 0, %s50
      %s52 = sphi 0, %s50
      %s53 = sphi 0, %s52
      %s67 = sphi 0, %s53
      %s71 = sphi 0, %s71
      %s73 = sphi 0, %s71
      %s74 = sphi 0, %s73
      %s88 = sphi 0, %s74
      %s92 = sphi 0, %s92
      %s94 = sphi 0, %s92
      %s95 = sphi 0, %s94
      %s109 = sphi 0, %s95
      %s113 = sphi 0, %s113
      %s115 = sphi 0, %s113
      %s116 = sphi 0, %s115
      %s130 = sphi 0, %s116
      %s136 = sphi 0, %s138
      %s139 = sphi 0, %s136
      %s140 = sphi 0, %s139
      %s156 = sphi 0, %s140
    $region4: #{sa_layer_nchw.1} parent=1 // loop_header_branch
      %19 = sbr.rel (%p17) target = $region8
    $region5: #{sa_layer_nchw.1} parent=1 // loop_body
      %s21 = ssub.s32 %s16, 1
      %s22 = ssub.s32 %s16, 2
      %s23 = sadd.s32 %s16, 1
      %s24 = ssub.s32 %s16, %s23
      %p25 = scmp.eq.s32.totalorder %s24, 0
      %s27 = sadd.s32 %s26, 1
      %s28 = scalar_select %p25, %s26, %s27
      %p31 = pneg %p25
      %p32 = scmp.eq.s32.totalorder %s16, 1
      %p33 = por %p31, %p32
      %p34 = scmp.ne.s32.totalorder %s26, %s29
      %p35 = scmp.eq.s32.totalorder %s16, 0
      %p36 = por %p34, %p35
      %p37 = scmp.ne.s32.totalorder %s26, %s29
      %p38 = scmp.eq.s32.totalorder %s21, 1
      %p39 = por %p37, %p38
      %p40 = scmp.ne.s32.totalorder %s29, %s30
      %p41 = scmp.eq.s32.totalorder %s21, 0
      %p42 = por %p40, %p41
      %p43 = scmp.ne.s32.totalorder %s29, %s30
      %p44 = scmp.eq.s32.totalorder %s22, 1
      %p45 = por %p43, %p44
      %p47 = scmp.ne.s32.totalorder %s30, %s46
      %p48 = scmp.eq.s32.totalorder %s22, 0
      %p49 = por %p47, %p48
      %s51 = sadd.s32 %s50, 1
      %p54 = scmp.eq.s32.totalorder %s16, 1
      %p55 = scmp.ne.s32.totalorder %s50, %s52
      %p56 = scmp.eq.s32.totalorder %s16, 0
      %p57 = por %p55, %p56
      %p58 = scmp.ne.s32.totalorder %s50, %s52
      %p59 = scmp.eq.s32.totalorder %s21, 1
      %p60 = por %p58, %p59
      %p61 = scmp.ne.s32.totalorder %s52, %s53
      %p62 = scmp.eq.s32.totalorder %s21, 0
      %p63 = por %p61, %p62
      %p64 = scmp.ne.s32.totalorder %s52, %s53
      %p65 = scmp.eq.s32.totalorder %s22, 1
      %p66 = por %p64, %p65
      %p68 = scmp.ne.s32.totalorder %s53, %s67
      %p69 = scmp.eq.s32.totalorder %s22, 0
      %p70 = por %p68, %p69
      %s72 = sadd.s32 %s71, 1
      %p75 = scmp.eq.s32.totalorder %s16, 1
      %p76 = scmp.ne.s32.totalorder %s71, %s73
      %p77 = scmp.eq.s32.totalorder %s16, 0
      %p78 = por %p76, %p77
      %p79 = scmp.ne.s32.totalorder %s71, %s73
      %p80 = scmp.eq.s32.totalorder %s21, 1
      %p81 = por %p79, %p80
      %p82 = scmp.ne.s32.totalorder %s73, %s74
      %p83 = scmp.eq.s32.totalorder %s21, 0
      %p84 = por %p82, %p83
      %p85 = scmp.ne.s32.totalorder %s73, %s74
      %p86 = scmp.eq.s32.totalorder %s22, 1
      %p87 = por %p85, %p86
      %p89 = scmp.ne.s32.totalorder %s74, %s88
      %p90 = scmp.eq.s32.totalorder %s22, 0
      %p91 = por %p89, %p90
      %s93 = sadd.s32 %s92, 1
      %p96 = scmp.eq.s32.totalorder %s16, 1
      %p97 = scmp.ne.s32.totalorder %s92, %s94
      %p98 = scmp.eq.s32.totalorder %s16, 0
      %p99 = por %p97, %p98
      %p100 = scmp.ne.s32.totalorder %s92, %s94
      %p101 = scmp.eq.s32.totalorder %s21, 1
      %p102 = por %p100, %p101
      %p103 = scmp.ne.s32.totalorder %s94, %s95
      %p104 = scmp.eq.s32.totalorder %s21, 0
      %p105 = por %p103, %p104
      %p106 = scmp.ne.s32.totalorder %s94, %s95
      %p107 = scmp.eq.s32.totalorder %s22, 1
      %p108 = por %p106, %p107
      %p110 = scmp.ne.s32.totalorder %s95, %s109
      %p111 = scmp.eq.s32.totalorder %s22, 0
      %p112 = por %p110, %p111
      %s114 = sadd.s32 %s113, 1
      %p117 = scmp.eq.s32.totalorder %s16, 1
      %p118 = scmp.ne.s32.totalorder %s113, %s115
      %p119 = scmp.eq.s32.totalorder %s16, 0
      %p120 = por %p118, %p119
      %p121 = scmp.ne.s32.totalorder %s113, %s115
      %p122 = scmp.eq.s32.totalorder %s21, 1
      %p123 = por %p121, %p122
      %p124 = scmp.ne.s32.totalorder %s115, %s116
      %p125 = scmp.eq.s32.totalorder %s21, 0
      %p126 = por %p124, %p125
      %p127 = scmp.ne.s32.totalorder %s115, %s116
      %p128 = scmp.eq.s32.totalorder %s22, 1
      %p129 = por %p127, %p128
      %p131 = scmp.ne.s32.totalorder %s116, %s130
      %p132 = scmp.eq.s32.totalorder %s22, 0
      %p133 = por %p131, %p132
      %s134 = ssub.s32 %s16, %s23
      %p135 = scmp.eq.s32.totalorder %s134, 0
      %s137 = sadd.s32 %s136, 1
      %s138 = scalar_select %p135, %s136, %s137
      %p141 = pneg %p135
      %p142 = scmp.eq.s32.totalorder %s16, 1
      %p143 = por %p141, %p142
      %p144 = scmp.ne.s32.totalorder %s136, %s139
      %p145 = scmp.eq.s32.totalorder %s16, 0
      %p146 = por %p144, %p145
      %p147 = scmp.ne.s32.totalorder %s136, %s139
      %p148 = scmp.eq.s32.totalorder %s21, 1
      %p149 = por %p147, %p148
      %p150 = scmp.ne.s32.totalorder %s139, %s140
      %p151 = scmp.eq.s32.totalorder %s21, 0
      %p152 = por %p150, %p151
      %p153 = scmp.ne.s32.totalorder %s139, %s140
      %p154 = scmp.eq.s32.totalorder %s22, 1
      %p155 = por %p153, %p154
      %p157 = scmp.ne.s32.totalorder %s140, %s156
      %p158 = scmp.eq.s32.totalorder %s22, 0
      %p159 = por %p157, %p158
      %p160 = scmp.le.s32.totalorder 1, %s16
      %p161 = scmp.lt.s32.totalorder %s16, 3
      %p162 = pnand %p160, %p161
      %p163 = pneg %p162
      // Predicated region
      $region9: #{sa_layer_nchw.1} parent=5 // pred_check
        _
      $region10: #{sa_layer_nchw.1} parent=5 // pred_check_branch
        %165 = sbr.rel (%p162) target = $region12
      $region11: #{sa_layer_nchw.1} parent=5 // pred_region
        %s166 = ssub.s32 %s16, 1
        // Predicated region
        $region13: #{sa_layer_nchw.1} parent=11 // pred_check
          %p167 = pneg %p63
        $region14: #{sa_layer_nchw.1} parent=11 // pred_check_branch
          %169 = sbr.rel (%p167) target = $region16
        $region15: #{sa_layer_nchw.1} parent=11 // pred_region
          _
        $region16: #{sa_layer_nchw.1} parent=11 // pred_fallthru
          _
        // Predicated region
        $region17: #{sa_layer_nchw.1} parent=11 // pred_check
          %p170 = pneg %p84
        $region18: #{sa_layer_nchw.1} parent=11 // pred_check_branch
          %172 = sbr.rel (%p170) target = $region20
        $region19: #{sa_layer_nchw.1} parent=11 // pred_region
          _
        $region20: #{sa_layer_nchw.1} parent=11 // pred_fallthru
          _
        // Predicated region
        $region21: #{sa_layer_nchw.1} parent=11 // pred_check
          %p173 = pneg %p105
        $region22: #{sa_layer_nchw.1} parent=11 // pred_check_branch
          %175 = sbr.rel (%p173) target = $region24
        $region23: #{sa_layer_nchw.1} parent=11 // pred_region
          _
        $region24: #{sa_layer_nchw.1} parent=11 // pred_fallthru
          _
        // Predicated region
        $region25: #{sa_layer_nchw.1} parent=11 // pred_check
          %p176 = pneg %p126
        $region26: #{sa_layer_nchw.1} parent=11 // pred_check_branch
          %178 = sbr.rel (%p176) target = $region28
        $region27: #{sa_layer_nchw.1} parent=11 // pred_region
          _
        $region28: #{sa_layer_nchw.1} parent=11 // pred_fallthru
          _
      $region12: #{sa_layer_nchw.1} parent=5 // pred_fallthru
        _
      %p179 = scmp.lt.s32.totalorder %s16, 2
      // Predicated region
      $region29: #{sa_layer_nchw.1} parent=5 // pred_check
        %p180 = pneg %p179
      $region30: #{sa_layer_nchw.1} parent=5 // pred_check_branch
        %182 = sbr.rel (%p180) target = $region32
      $region31: #{sa_layer_nchw.1} parent=5 // pred_region
        // Predicated region
        $region33: #{sa_layer_nchw.1} parent=31 // pred_check
          %p183 = pneg %p36
        $region34: #{sa_layer_nchw.1} parent=31 // pred_check_branch
          %185 = sbr.rel (%p183) target = $region36
        $region35: #{sa_layer_nchw.1} parent=31 // pred_region
          %p186 = scmp.lt.s32.totalorder %s16, 1
          %s187 = scalar_select %p186, %s16, 1
          %s188 = smul.addr %s187, 32
          %s189 = smul.addr %s188, 8
          %s190 = scalar_lea.vmem %s0, %s189
        $region36: #{sa_layer_nchw.1} parent=31 // pred_fallthru
          _
      $region32: #{sa_layer_nchw.1} parent=5 // pred_fallthru
        _
      %p191 = scmp.le.s32.totalorder 1, %s16
      %p192 = scmp.lt.s32.totalorder %s16, 3
      %p193 = pnand %p191, %p192
      %p194 = pneg %p193
      // Predicated region
      $region37: #{sa_layer_nchw.1} parent=5 // pred_check
        _
      $region38: #{sa_layer_nchw.1} parent=5 // pred_check_branch
        %196 = sbr.rel (%p193) target = $region40
      $region39: #{sa_layer_nchw.1} parent=5 // pred_region
        %s197 = ssub.s32 %s16, 1
        %p198 = scmp.lt.s32.totalorder %s21, 1
        %s199 = scalar_select %p198, %s21, 1
        %s200 = smul.addr %s199, 32
        %s201 = smul.addr %s200, 8
        %s202 = scalar_lea.vmem %s0, %s201
        %p203 = pneg %p42
        %p204 = pneg %p39
        %p205 = pneg %p63
        %p206 = pneg %p60
        %p207 = pneg %p84
        %p208 = pneg %p81
        %p209 = pneg %p105
        %p210 = pneg %p102
        %p211 = pneg %p126
        %p212 = pneg %p123
        %p213 = pneg %p152
        %p214 = pneg %p149
        %s215 = sand.u32 %s139, 1
        %s216 = scalar_lea.sflag [#allocation6], %s215
        %s217 = sand.u32 %s139, 1
        %s218 = smul.addr %s217, 256
        %s219 = scalar_lea.vmem [#allocation5], %s218
        %p220 = scmp.lt.s32.totalorder %s21, 1
        %s221 = scalar_select %p220, %s21, 1
        %s222 = smul.addr %s221, 32
        %s223 = smul.addr %s222, 8
        %s224 = scalar_lea.vmem %s0, %s223
        %v226 = vld [vmem:[%s224] sm:$0xff]
        %v227 = vld [vmem:[%s224 + $0x8] sm:$0xff]
        %v228 = vld [vmem:[%s224 + $0x10] sm:$0xff]
        %v229 = vld [vmem:[%s224 + $0x18] sm:$0xff]
        %v230 = vld [vmem:[%s224 + $0x20] sm:$0xff]
        %v231 = vld [vmem:[%s224 + $0x28] sm:$0xff]
        %v232 = vld [vmem:[%s224 + $0x30] sm:$0xff]
        %v233 = vld [vmem:[%s224 + $0x38] sm:$0xff]
        %v234 = vld [vmem:[%s224 + $0x40] sm:$0xff]
        %v235 = vld [vmem:[%s224 + $0x48] sm:$0xff]
        %v236 = vld [vmem:[%s224 + $0x50] sm:$0xff]
        %v237 = vld [vmem:[%s224 + $0x58] sm:$0xff]
        %v238 = vld [vmem:[%s224 + $0x60] sm:$0xff]
        %v239 = vld [vmem:[%s224 + $0x68] sm:$0xff]
        %v240 = vld [vmem:[%s224 + $0x70] sm:$0xff]
        %v241 = vld [vmem:[%s224 + $0x78] sm:$0xff]
        %v242 = vld [vmem:[%s224 + $0x80] sm:$0xff]
        %v243 = vld [vmem:[%s224 + $0x88] sm:$0xff]
        %v244 = vld [vmem:[%s224 + $0x90] sm:$0xff]
        %v245 = vld [vmem:[%s224 + $0x98] sm:$0xff]
        %v246 = vld [vmem:[%s224 + $0xa0] sm:$0xff]
        %v247 = vld [vmem:[%s224 + $0xa8] sm:$0xff]
        %v248 = vld [vmem:[%s224 + $0xb0] sm:$0xff]
        %v249 = vld [vmem:[%s224 + $0xb8] sm:$0xff]
        %v250 = vld [vmem:[%s224 + $0xc0] sm:$0xff]
        %v251 = vld [vmem:[%s224 + $0xc8] sm:$0xff]
        %v252 = vld [vmem:[%s224 + $0xd0] sm:$0xff]
        %v253 = vld [vmem:[%s224 + $0xd8] sm:$0xff]
        %v254 = vld [vmem:[%s224 + $0xe0] sm:$0xff]
        %v255 = vld [vmem:[%s224 + $0xe8] sm:$0xff]
        %v256 = vld [vmem:[%s224 + $0xf0] sm:$0xff]
        %v257 = vld [vmem:[%s224 + $0xf8] sm:$0xff]
        %258 = vst [vmem:[#allocation2] sm:$0xf] 0
        %259 = vst [vmem:[#allocation2 + $0x4] sm:$0xf] 0
        %260 = vst [vmem:[#allocation2 + $0x8] sm:$0xf] 0
        %vm261 = vcmask 1040384
        %vm262 = vsmask.f32 256
        %vm263 = vmand %vm261, %vm262
        %v264 = vld [vmem:[#allocation2 + $0xc] sm:$0x1]
        %v265 = vsel %vm263, 0, %v264
        %266 = vst [vmem:[#allocation2 + $0xc] sm:$0x1] %v265
        %267 = vst [vmem:[#allocation2 + $0x10] sm:$0xf] 0
        %268 = vst [vmem:[#allocation2 + $0x14] sm:$0xf] 0
        %269 = vst [vmem:[#allocation2 + $0x18] sm:$0xf] 0
        %v270 = vld [vmem:[#allocation2 + $0x1c] sm:$0x1]
        %v271 = vsel %vm263, 0, %v270
        %272 = vst [vmem:[#allocation2 + $0x1c] sm:$0x1] %v271
        %273 = vst [vmem:[#allocation2 + $0x20] sm:$0xf] 0
        %274 = vst [vmem:[#allocation2 + $0x24] sm:$0xf] 0
        %275 = vst [vmem:[#allocation2 + $0x28] sm:$0xf] 0
        %v276 = vld [vmem:[#allocation2 + $0x2c] sm:$0x1]
        %v277 = vsel %vm263, 0, %v276
        %278 = vst [vmem:[#allocation2 + $0x2c] sm:$0x1] %v277
        %279 = vst [vmem:[#allocation2 + $0x30] sm:$0xf] 0
        %280 = vst [vmem:[#allocation2 + $0x34] sm:$0xf] 0
        %281 = vst [vmem:[#allocation2 + $0x38] sm:$0xf] 0
        %v282 = vld [vmem:[#allocation2 + $0x3c] sm:$0x1]
        %v283 = vsel %vm263, 0, %v282
        %284 = vst [vmem:[#allocation2 + $0x3c] sm:$0x1] %v283
        %285 = vst [vmem:[#allocation2 + $0x40] sm:$0xf] 0
        %286 = vst [vmem:[#allocation2 + $0x44] sm:$0xf] 0
        %287 = vst [vmem:[#allocation2 + $0x48] sm:$0xf] 0
        %v288 = vld [vmem:[#allocation2 + $0x4c] sm:$0x1]
        %v289 = vsel %vm263, 0, %v288
        %290 = vst [vmem:[#allocation2 + $0x4c] sm:$0x1] %v289
        %291 = vst [vmem:[#allocation2 + $0x50] sm:$0xf] 0
        %292 = vst [vmem:[#allocation2 + $0x54] sm:$0xf] 0
        %293 = vst [vmem:[#allocation2 + $0x58] sm:$0xf] 0
        %v294 = vld [vmem:[#allocation2 + $0x5c] sm:$0x1]
        %v295 = vsel %vm263, 0, %v294
        %296 = vst [vmem:[#allocation2 + $0x5c] sm:$0x1] %v295
        %297 = vst [vmem:[#allocation2 + $0x60] sm:$0xf] 0
        %298 = vst [vmem:[#allocation2 + $0x64] sm:$0xf] 0
        %299 = vst [vmem:[#allocation2 + $0x68] sm:$0xf] 0
        %v300 = vld [vmem:[#allocation2 + $0x6c] sm:$0x1]
        %v301 = vsel %vm263, 0, %v300
        %302 = vst [vmem:[#allocation2 + $0x6c] sm:$0x1] %v301
        %303 = vst [vmem:[#allocation2 + $0x70] sm:$0xf] 0
        %304 = vst [vmem:[#allocation2 + $0x74] sm:$0xf] 0
        %305 = vst [vmem:[#allocation2 + $0x78] sm:$0xf] 0
        %v306 = vld [vmem:[#allocation2 + $0x7c] sm:$0x1]
        %v307 = vsel %vm263, 0, %v306
        %308 = vst [vmem:[#allocation2 + $0x7c] sm:$0x1] %v307
        %309 = vst [vmem:[#allocation2 + $0x80] sm:$0xf] 0
        %310 = vst [vmem:[#allocation2 + $0x84] sm:$0xf] 0
        %311 = vst [vmem:[#allocation2 + $0x88] sm:$0xf] 0
        %v312 = vld [vmem:[#allocation2 + $0x8c] sm:$0x1]
        %v313 = vsel %vm263, 0, %v312
        %314 = vst [vmem:[#allocation2 + $0x8c] sm:$0x1] %v313
        %315 = vst [vmem:[#allocation2 + $0x90] sm:$0xf] 0
        %316 = vst [vmem:[#allocation2 + $0x94] sm:$0xf] 0
        %317 = vst [vmem:[#allocation2 + $0x98] sm:$0xf] 0
        %v318 = vld [vmem:[#allocation2 + $0x9c] sm:$0x1]
        %v319 = vsel %vm263, 0, %v318
        %320 = vst [vmem:[#allocation2 + $0x9c] sm:$0x1] %v319
        %321 = vst [vmem:[#allocation2 + $0xa0] sm:$0xf] 0
        %322 = vst [vmem:[#allocation2 + $0xa4] sm:$0xf] 0
        %323 = vst [vmem:[#allocation2 + $0xa8] sm:$0xf] 0
        %v324 = vld [vmem:[#allocation2 + $0xac] sm:$0x1]
        %v325 = vsel %vm263, 0, %v324
        %326 = vst [vmem:[#allocation2 + $0xac] sm:$0x1] %v325
        %327 = vst [vmem:[#allocation2 + $0xb0] sm:$0xf] 0
        %328 = vst [vmem:[#allocation2 + $0xb4] sm:$0xf] 0
        %329 = vst [vmem:[#allocation2 + $0xb8] sm:$0xf] 0
        %v330 = vld [vmem:[#allocation2 + $0xbc] sm:$0x1]
        %v331 = vsel %vm263, 0, %v330
        %332 = vst [vmem:[#allocation2 + $0xbc] sm:$0x1] %v331
        %333 = vst [vmem:[#allocation2 + $0xc0] sm:$0xf] 0
        %334 = vst [vmem:[#allocation2 + $0xc4] sm:$0xf] 0
        %335 = vst [vmem:[#allocation2 + $0xc8] sm:$0xf] 0
        %v336 = vld [vmem:[#allocation2 + $0xcc] sm:$0x1]
        %v337 = vsel %vm263, 0, %v336
        %338 = vst [vmem:[#allocation2 + $0xcc] sm:$0x1] %v337
        %339 = vst [vmem:[#allocation2 + $0xd0] sm:$0xf] 0
        %340 = vst [vmem:[#allocation2 + $0xd4] sm:$0xf] 0
        %341 = vst [vmem:[#allocation2 + $0xd8] sm:$0xf] 0
        %v342 = vld [vmem:[#allocation2 + $0xdc] sm:$0x1]
        %v343 = vsel %vm263, 0, %v342
        %344 = vst [vmem:[#allocation2 + $0xdc] sm:$0x1] %v343
        %345 = vst [vmem:[#allocation2 + $0xe0] sm:$0xf] 0
        %346 = vst [vmem:[#allocation2 + $0xe4] sm:$0xf] 0
        %347 = vst [vmem:[#allocation2 + $0xe8] sm:$0xf] 0
        %v348 = vld [vmem:[#allocation2 + $0xec] sm:$0x1]
        %v349 = vsel %vm263, 0, %v348
        %350 = vst [vmem:[#allocation2 + $0xec] sm:$0x1] %v349
        %351 = vst [vmem:[#allocation2 + $0xf0] sm:$0xf] 0
        %352 = vst [vmem:[#allocation2 + $0xf4] sm:$0xf] 0
        %353 = vst [vmem:[#allocation2 + $0xf8] sm:$0xf] 0
        %v354 = vld [vmem:[#allocation2 + $0xfc] sm:$0x1]
        %v355 = vsel %vm263, 0, %v354
        %356 = vst [vmem:[#allocation2 + $0xfc] sm:$0x1] %v355
        %357 = vst [vmem:[#allocation2 + $0x100] sm:$0xf] 0
        %358 = vst [vmem:[#allocation2 + $0x104] sm:$0xf] 0
        %359 = vst [vmem:[#allocation2 + $0x108] sm:$0xf] 0
        %v360 = vld [vmem:[#allocation2 + $0x10c] sm:$0x1]
        %v361 = vsel %vm263, 0, %v360
        %362 = vst [vmem:[#allocation2 + $0x10c] sm:$0x1] %v361
        %363 = vst [vmem:[#allocation2 + $0x110] sm:$0xf] 0
        %364 = vst [vmem:[#allocation2 + $0x114] sm:$0xf] 0
        %365 = vst [vmem:[#allocation2 + $0x118] sm:$0xf] 0
        %v366 = vld [vmem:[#allocation2 + $0x11c] sm:$0x1]
        %v367 = vsel %vm263, 0, %v366
        %368 = vst [vmem:[#allocation2 + $0x11c] sm:$0x1] %v367
        %v369 = vpack.c.bf16 %v226, %v226
        %v370 = vpack.c.bf16 %v227, %v227
        %v371 = vpack.c.bf16 %v228, %v228
        %v372 = vpack.c.bf16 %v229, %v229
        %v373 = vpack.c.bf16 %v230, %v230
        %v374 = vpack.c.bf16 %v231, %v231
        %v375 = vpack.c.bf16 %v232, %v232
        %v376 = vpack.c.bf16 %v233, %v233
        %v377 = vpack.c.bf16 %v234, %v234
        %v378 = vpack.c.bf16 %v235, %v235
        %v379 = vpack.c.bf16 %v236, %v236
        %v380 = vpack.c.bf16 %v237, %v237
        %v381 = vpack.c.bf16 %v238, %v238
        %v382 = vpack.c.bf16 %v239, %v239
        %v383 = vpack.c.bf16 %v240, %v240
        %v384 = vpack.c.bf16 %v241, %v241
        %v385 = vpack.c.bf16 %v242, %v242
        %v386 = vpack.c.bf16 %v243, %v243
        %v387 = vpack.c.bf16 %v244, %v244
        %v388 = vpack.c.bf16 %v245, %v245
        %v389 = vpack.c.bf16 %v246, %v246
        %v390 = vpack.c.bf16 %v247, %v247
        %v391 = vpack.c.bf16 %v248, %v248
        %v392 = vpack.c.bf16 %v249, %v249
        %v393 = vpack.c.bf16 %v250, %v250
        %v394 = vpack.c.bf16 %v251, %v251
        %v395 = vpack.c.bf16 %v252, %v252
        %v396 = vpack.c.bf16 %v253, %v253
        %v397 = vpack.c.bf16 %v254, %v254
        %v398 = vpack.c.bf16 %v255, %v255
        %v399 = vpack.c.bf16 %v256, %v256
        %v400 = vpack.c.bf16 %v257, %v257
        %s401 = scalar_lea.vmem [#allocation2], 16
        %402 = vst [vmem:[%s401 + $0x4] sm:$0xf] %v369
        %403 = vst [vmem:[%s401 + $0x8] sm:$0xf] %v370
        %404 = vst [vmem:[%s401 + $0x14] sm:$0xf] %v371
        %405 = vst [vmem:[%s401 + $0x18] sm:$0xf] %v372
        %406 = vst [vmem:[%s401 + $0x24] sm:$0xf] %v373
        %407 = vst [vmem:[%s401 + $0x28] sm:$0xf] %v374
        %408 = vst [vmem:[%s401 + $0x34] sm:$0xf] %v375
        %409 = vst [vmem:[%s401 + $0x38] sm:$0xf] %v376
        %410 = vst [vmem:[%s401 + $0x44] sm:$0xf] %v377
        %411 = vst [vmem:[%s401 + $0x48] sm:$0xf] %v378
        %412 = vst [vmem:[%s401 + $0x54] sm:$0xf] %v379
        %413 = vst [vmem:[%s401 + $0x58] sm:$0xf] %v380
        %414 = vst [vmem:[%s401 + $0x64] sm:$0xf] %v381
        %415 = vst [vmem:[%s401 + $0x68] sm:$0xf] %v382
        %416 = vst [vmem:[%s401 + $0x74] sm:$0xf] %v383
        %417 = vst [vmem:[%s401 + $0x78] sm:$0xf] %v384
        %418 = vst [vmem:[%s401 + $0x84] sm:$0xf] %v385
        %419 = vst [vmem:[%s401 + $0x88] sm:$0xf] %v386
        %420 = vst [vmem:[%s401 + $0x94] sm:$0xf] %v387
        %421 = vst [vmem:[%s401 + $0x98] sm:$0xf] %v388
        %422 = vst [vmem:[%s401 + $0xa4] sm:$0xf] %v389
        %423 = vst [vmem:[%s401 + $0xa8] sm:$0xf] %v390
        %424 = vst [vmem:[%s401 + $0xb4] sm:$0xf] %v391
        %425 = vst [vmem:[%s401 + $0xb8] sm:$0xf] %v392
        %426 = vst [vmem:[%s401 + $0xc4] sm:$0xf] %v393
        %427 = vst [vmem:[%s401 + $0xc8] sm:$0xf] %v394
        %428 = vst [vmem:[%s401 + $0xd4] sm:$0xf] %v395
        %429 = vst [vmem:[%s401 + $0xd8] sm:$0xf] %v396
        %430 = vst [vmem:[%s401 + $0xe4] sm:$0xf] %v397
        %431 = vst [vmem:[%s401 + $0xe8] sm:$0xf] %v398
        %432 = vst [vmem:[%s401 + $0xf4] sm:$0xf] %v399
        %433 = vst [vmem:[%s401 + $0xf8] sm:$0xf] %v400
        %vm434 = vcmask 523264
        %435 = vst.msk [vmem:[#allocation3] sm:$0xff] %vm434, 0.0
        %436 = vst.msk [vmem:[#allocation3 + $0x8] sm:$0xff] %vm434, 0.0
        %437 = vst.msk [vmem:[#allocation3 + $0x10] sm:$0xff] %vm434, 0.0
        %vm438 = vcmask 516096
        %439 = vst.msk [vmem:[#allocation3 + $0x18] sm:$0x1] %vm438, 0.0
        %440 = vst.msk [vmem:[#allocation3 + $0x20] sm:$0xff] %vm434, 0.0
        %441 = vst.msk [vmem:[#allocation3 + $0x28] sm:$0xff] %vm434, 0.0
        %442 = vst.msk [vmem:[#allocation3 + $0x30] sm:$0xff] %vm434, 0.0
        %443 = vst.msk [vmem:[#allocation3 + $0x38] sm:$0x1] %vm438, 0.0
        %444 = vst.msk [vmem:[#allocation3 + $0x40] sm:$0xff] %vm434, 0.0
        %445 = vst.msk [vmem:[#allocation3 + $0x48] sm:$0xff] %vm434, 0.0
        %446 = vst.msk [vmem:[#allocation3 + $0x50] sm:$0xff] %vm434, 0.0
        %447 = vst.msk [vmem:[#allocation3 + $0x58] sm:$0x1] %vm438, 0.0
        %448 = vst.msk [vmem:[#allocation3 + $0x60] sm:$0xff] %vm434, 0.0
        %449 = vst.msk [vmem:[#allocation3 + $0x68] sm:$0xff] %vm434, 0.0
        %450 = vst.msk [vmem:[#allocation3 + $0x70] sm:$0xff] %vm434, 0.0
        %451 = vst.msk [vmem:[#allocation3 + $0x78] sm:$0x1] %vm438, 0.0
        %452 = vst.msk [vmem:[#allocation3 + $0x80] sm:$0xff] %vm434, 0.0
        %453 = vst.msk [vmem:[#allocation3 + $0x88] sm:$0xff] %vm434, 0.0
        %454 = vst.msk [vmem:[#allocation3 + $0x90] sm:$0xff] %vm434, 0.0
        %455 = vst.msk [vmem:[#allocation3 + $0x98] sm:$0x1] %vm438, 0.0
        %456 = vst.msk [vmem:[#allocation3 + $0xa0] sm:$0xff] %vm434, 0.0
        %457 = vst.msk [vmem:[#allocation3 + $0xa8] sm:$0xff] %vm434, 0.0
        %458 = vst.msk [vmem:[#allocation3 + $0xb0] sm:$0xff] %vm434, 0.0
        %459 = vst.msk [vmem:[#allocation3 + $0xb8] sm:$0x1] %vm438, 0.0
        %460 = vst.msk [vmem:[#allocation3 + $0xc0] sm:$0xff] %vm434, 0.0
        %461 = vst.msk [vmem:[#allocation3 + $0xc8] sm:$0xff] %vm434, 0.0
        %462 = vst.msk [vmem:[#allocation3 + $0xd0] sm:$0xff] %vm434, 0.0
        %463 = vst.msk [vmem:[#allocation3 + $0xd8] sm:$0x1] %vm438, 0.0
        %464 = vst.msk [vmem:[#allocation3 + $0xe0] sm:$0xff] %vm434, 0.0
        %465 = vst.msk [vmem:[#allocation3 + $0xe8] sm:$0xff] %vm434, 0.0
        %466 = vst.msk [vmem:[#allocation3 + $0xf0] sm:$0xff] %vm434, 0.0
        %467 = vst.msk [vmem:[#allocation3 + $0xf8] sm:$0x1] %vm438, 0.0
        %468 = vst.msk [vmem:[#allocation3 + $0x100] sm:$0xff] %vm434, 0.0
        %469 = vst.msk [vmem:[#allocation3 + $0x108] sm:$0xff] %vm434, 0.0
        %470 = vst.msk [vmem:[#allocation3 + $0x110] sm:$0xff] %vm434, 0.0
        %471 = vst.msk [vmem:[#allocation3 + $0x118] sm:$0x1] %vm438, 0.0
        %472 = vst.msk [vmem:[#allocation3 + $0x120] sm:$0xff] %vm434, 0.0
        %473 = vst.msk [vmem:[#allocation3 + $0x128] sm:$0xff] %vm434, 0.0
        %474 = vst.msk [vmem:[#allocation3 + $0x130] sm:$0xff] %vm434, 0.0
        %475 = vst.msk [vmem:[#allocation3 + $0x138] sm:$0x1] %vm438, 0.0
        %476 = vst.msk [vmem:[#allocation3 + $0x140] sm:$0xff] %vm434, 0.0
        %477 = vst.msk [vmem:[#allocation3 + $0x148] sm:$0xff] %vm434, 0.0
        %478 = vst.msk [vmem:[#allocation3 + $0x150] sm:$0xff] %vm434, 0.0
        %479 = vst.msk [vmem:[#allocation3 + $0x158] sm:$0x1] %vm438, 0.0
        %480 = vst.msk [vmem:[#allocation3 + $0x160] sm:$0xff] %vm434, 0.0
        %481 = vst.msk [vmem:[#allocation3 + $0x168] sm:$0xff] %vm434, 0.0
        %482 = vst.msk [vmem:[#allocation3 + $0x170] sm:$0xff] %vm434, 0.0
        %483 = vst.msk [vmem:[#allocation3 + $0x178] sm:$0x1] %vm438, 0.0
        %484 = vst.msk [vmem:[#allocation3 + $0x180] sm:$0xff] %vm434, 0.0
        %485 = vst.msk [vmem:[#allocation3 + $0x188] sm:$0xff] %vm434, 0.0
        %486 = vst.msk [vmem:[#allocation3 + $0x190] sm:$0xff] %vm434, 0.0
        %487 = vst.msk [vmem:[#allocation3 + $0x198] sm:$0x1] %vm438, 0.0
        %488 = vst.msk [vmem:[#allocation3 + $0x1a0] sm:$0xff] %vm434, 0.0
        %489 = vst.msk [vmem:[#allocation3 + $0x1a8] sm:$0xff] %vm434, 0.0
        %490 = vst.msk [vmem:[#allocation3 + $0x1b0] sm:$0xff] %vm434, 0.0
        %491 = vst.msk [vmem:[#allocation3 + $0x1b8] sm:$0x1] %vm438, 0.0
        %492 = vst.msk [vmem:[#allocation3 + $0x1c0] sm:$0xff] %vm434, 0.0
        %493 = vst.msk [vmem:[#allocation3 + $0x1c8] sm:$0xff] %vm434, 0.0
        %494 = vst.msk [vmem:[#allocation3 + $0x1d0] sm:$0xff] %vm434, 0.0
        %495 = vst.msk [vmem:[#allocation3 + $0x1d8] sm:$0x1] %vm438, 0.0
        %496 = vst.msk [vmem:[#allocation3 + $0x1e0] sm:$0xff] %vm434, 0.0
        %497 = vst.msk [vmem:[#allocation3 + $0x1e8] sm:$0xff] %vm434, 0.0
        %498 = vst.msk [vmem:[#allocation3 + $0x1f0] sm:$0xff] %vm434, 0.0
        %499 = vst.msk [vmem:[#allocation3 + $0x1f8] sm:$0x1] %vm438, 0.0
        %500 = vst.msk [vmem:[#allocation3 + $0x200] sm:$0xff] %vm434, 0.0
        %501 = vst.msk [vmem:[#allocation3 + $0x208] sm:$0xff] %vm434, 0.0
        %502 = vst.msk [vmem:[#allocation3 + $0x210] sm:$0xff] %vm434, 0.0
        %503 = vst.msk [vmem:[#allocation3 + $0x218] sm:$0x1] %vm438, 0.0
        %504 = vst.msk [vmem:[#allocation3 + $0x220] sm:$0xff] %vm434, 0.0
        %505 = vst.msk [vmem:[#allocation3 + $0x228] sm:$0xff] %vm434, 0.0
        %506 = vst.msk [vmem:[#allocation3 + $0x230] sm:$0xff] %vm434, 0.0
        %507 = vst.msk [vmem:[#allocation3 + $0x238] sm:$0x1] %vm438, 0.0
        %v508 = vld [vmem:[#allocation2] sm:$0x8]
        %v509 = vld [vmem:[#allocation2 + $0x4] sm:$0xf]
        %v510 = vld [vmem:[#allocation2 + $0x8] sm:$0xf]
        %v511 = vld [vmem:[#allocation2 + $0x10] sm:$0x8]
        %v512 = vld [vmem:[#allocation2 + $0x14] sm:$0xf]
        %v513 = vld [vmem:[#allocation2 + $0x18] sm:$0xf]
        %v514 = vld [vmem:[#allocation2 + $0x20] sm:$0x8]
        %v515 = vld [vmem:[#allocation2 + $0x24] sm:$0xf]
        %v516 = vld [vmem:[#allocation2 + $0x28] sm:$0xf]
        %v517 = vld [vmem:[#allocation2 + $0x30] sm:$0x8]
        %v518 = vld [vmem:[#allocation2 + $0x34] sm:$0xf]
        %v519 = vld [vmem:[#allocation2 + $0x38] sm:$0xf]
        %v520 = vld [vmem:[#allocation2 + $0x40] sm:$0x8]
        %v521 = vld [vmem:[#allocation2 + $0x44] sm:$0xf]
        %v522 = vld [vmem:[#allocation2 + $0x48] sm:$0xf]
        %v523 = vld [vmem:[#allocation2 + $0x50] sm:$0x8]
        %v524 = vld [vmem:[#allocation2 + $0x54] sm:$0xf]
        %v525 = vld [vmem:[#allocation2 + $0x58] sm:$0xf]
        %v526 = vld [vmem:[#allocation2 + $0x60] sm:$0x8]
        %v527 = vld [vmem:[#allocation2 + $0x64] sm:$0xf]
        %v528 = vld [vmem:[#allocation2 + $0x68] sm:$0xf]
        %v529 = vld [vmem:[#allocation2 + $0x70] sm:$0x8]
        %v530 = vld [vmem:[#allocation2 + $0x74] sm:$0xf]
        %v531 = vld [vmem:[#allocation2 + $0x78] sm:$0xf]
        %v532 = vld [vmem:[#allocation2 + $0x80] sm:$0x8]
        %v533 = vld [vmem:[#allocation2 + $0x84] sm:$0xf]
        %v534 = vld [vmem:[#allocation2 + $0x88] sm:$0xf]
        %v535 = vld [vmem:[#allocation2 + $0x90] sm:$0x8]
        %v536 = vld [vmem:[#allocation2 + $0x94] sm:$0xf]
        %v537 = vld [vmem:[#allocation2 + $0x98] sm:$0xf]
        %v538 = vld [vmem:[#allocation2 + $0xa0] sm:$0x8]
        %v539 = vld [vmem:[#allocation2 + $0xa4] sm:$0xf]
        %v540 = vld [vmem:[#allocation2 + $0xa8] sm:$0xf]
        %v541 = vld [vmem:[#allocation2 + $0xb0] sm:$0x8]
        %v542 = vld [vmem:[#allocation2 + $0xb4] sm:$0xf]
        %v543 = vld [vmem:[#allocation2 + $0xb8] sm:$0xf]
        %v544 = vld [vmem:[#allocation2 + $0xc0] sm:$0x8]
        %v545 = vld [vmem:[#allocation2 + $0xc4] sm:$0xf]
        %v546 = vld [vmem:[#allocation2 + $0xc8] sm:$0xf]
        %v547 = vld [vmem:[#allocation2 + $0xd0] sm:$0x8]
        %v548 = vld [vmem:[#allocation2 + $0xd4] sm:$0xf]
        %v549 = vld [vmem:[#allocation2 + $0xd8] sm:$0xf]
        %v550 = vld [vmem:[#allocation2 + $0xe0] sm:$0x8]
        %v551 = vld [vmem:[#allocation2 + $0xe4] sm:$0xf]
        %v552 = vld [vmem:[#allocation2 + $0xe8] sm:$0xf]
        %v553 = vld [vmem:[#allocation2 + $0xf0] sm:$0x8]
        %v554 = vld [vmem:[#allocation2 + $0xf4] sm:$0xf]
        %v555 = vld [vmem:[#allocation2 + $0xf8] sm:$0xf]
        %v556 = vld [vmem:[#allocation2 + $0x100] sm:$0x8]
        %v557 = vld [vmem:[#allocation2 + $0x104] sm:$0xf]
        %v558 = vld [vmem:[#allocation2 + $0x108] sm:$0xf]
        %v559 = vld [vmem:[#allocation2 + $0x110] sm:$0x8]
        %v560 = vld [vmem:[#allocation2 + $0x114] sm:$0xf]
        %v561 = vld [vmem:[#allocation2 + $0x118] sm:$0xf]
        %vm562 = vsmask.f32 4368
        %vm563 = vmor %vm262, %vm562
        %v565 = vshrl.u32 %v508, 16
        %v567 = vrot.slane %v565, 7
        %v568 = vrot.slane %v567, 4
        %v570 = vshrl.u32 %v509, 16
        %v572 = vrot.slane %v570, 7
        %v573 = vshll.u32 %v509, 16
        %v575 = vor.u32 %v572, %v573
        %v576 = vsel %vm563, %v568, %v575
        %v577 = vrot.slane %v572, 4
        %v579 = vshrl.u32 %v510, 16
        %v581 = vrot.slane %v579, 7
        %v582 = vshll.u32 %v510, 16
        %v584 = vor.u32 %v581, %v582
        %v585 = vsel %vm563, %v577, %v584
        %v587 = vshrl.u32 %v511, 16
        %v589 = vrot.slane %v587, 7
        %v590 = vrot.slane %v589, 4
        %v592 = vshrl.u32 %v512, 16
        %v594 = vrot.slane %v592, 7
        %v595 = vshll.u32 %v512, 16
        %v597 = vor.u32 %v594, %v595
        %v598 = vsel %vm563, %v590, %v597
        %v599 = vrot.slane %v594, 4
        %v601 = vshrl.u32 %v513, 16
        %v603 = vrot.slane %v601, 7
        %v604 = vshll.u32 %v513, 16
        %v606 = vor.u32 %v603, %v604
        %v607 = vsel %vm563, %v599, %v606
        %v609 = vshrl.u32 %v514, 16
        %v611 = vrot.slane %v609, 7
        %v612 = vrot.slane %v611, 4
        %v614 = vshrl.u32 %v515, 16
        %v616 = vrot.slane %v614, 7
        %v617 = vshll.u32 %v515, 16
        %v619 = vor.u32 %v616, %v617
        %v620 = vsel %vm563, %v612, %v619
        %v621 = vrot.slane %v616, 4
        %v623 = vshrl.u32 %v516, 16
        %v625 = vrot.slane %v623, 7
        %v626 = vshll.u32 %v516, 16
        %v628 = vor.u32 %v625, %v626
        %v629 = vsel %vm563, %v621, %v628
        %v631 = vshrl.u32 %v517, 16
        %v633 = vrot.slane %v631, 7
        %v634 = vrot.slane %v633, 4
        %v636 = vshrl.u32 %v518, 16
        %v638 = vrot.slane %v636, 7
        %v639 = vshll.u32 %v518, 16
        %v641 = vor.u32 %v638, %v639
        %v642 = vsel %vm563, %v634, %v641
        %v643 = vrot.slane %v638, 4
        %v645 = vshrl.u32 %v519, 16
        %v647 = vrot.slane %v645, 7
        %v648 = vshll.u32 %v519, 16
        %v650 = vor.u32 %v647, %v648
        %v651 = vsel %vm563, %v643, %v650
        %v653 = vshrl.u32 %v520, 16
        %v655 = vrot.slane %v653, 7
        %v656 = vrot.slane %v655, 4
        %v658 = vshrl.u32 %v521, 16
        %v660 = vrot.slane %v658, 7
        %v661 = vshll.u32 %v521, 16
        %v663 = vor.u32 %v660, %v661
        %v664 = vsel %vm563, %v656, %v663
        %v665 = vrot.slane %v660, 4
        %v667 = vshrl.u32 %v522, 16
        %v669 = vrot.slane %v667, 7
        %v670 = vshll.u32 %v522, 16
        %v672 = vor.u32 %v669, %v670
        %v673 = vsel %vm563, %v665, %v672
        %v675 = vshrl.u32 %v523, 16
        %v677 = vrot.slane %v675, 7
        %v678 = vrot.slane %v677, 4
        %v680 = vshrl.u32 %v524, 16
        %v682 = vrot.slane %v680, 7
        %v683 = vshll.u32 %v524, 16
        %v685 = vor.u32 %v682, %v683
        %v686 = vsel %vm563, %v678, %v685
        %v687 = vrot.slane %v682, 4
        %v689 = vshrl.u32 %v525, 16
        %v691 = vrot.slane %v689, 7
        %v692 = vshll.u32 %v525, 16
        %v694 = vor.u32 %v691, %v692
        %v695 = vsel %vm563, %v687, %v694
        %v697 = vshrl.u32 %v526, 16
        %v699 = vrot.slane %v697, 7
        %v700 = vrot.slane %v699, 4
        %v702 = vshrl.u32 %v527, 16
        %v704 = vrot.slane %v702, 7
        %v705 = vshll.u32 %v527, 16
        %v707 = vor.u32 %v704, %v705
        %v708 = vsel %vm563, %v700, %v707
        %v709 = vrot.slane %v704, 4
        %v711 = vshrl.u32 %v528, 16
        %v713 = vrot.slane %v711, 7
        %v714 = vshll.u32 %v528, 16
        %v716 = vor.u32 %v713, %v714
        %v717 = vsel %vm563, %v709, %v716
        %v719 = vshrl.u32 %v529, 16
        %v721 = vrot.slane %v719, 7
        %v722 = vrot.slane %v721, 4
        %v724 = vshrl.u32 %v530, 16
        %v726 = vrot.slane %v724, 7
        %v727 = vshll.u32 %v530, 16
        %v729 = vor.u32 %v726, %v727
        %v730 = vsel %vm563, %v722, %v729
        %v731 = vrot.slane %v726, 4
        %v733 = vshrl.u32 %v531, 16
        %v735 = vrot.slane %v733, 7
        %v736 = vshll.u32 %v531, 16
        %v738 = vor.u32 %v735, %v736
        %v739 = vsel %vm563, %v731, %v738
        %v741 = vshrl.u32 %v532, 16
        %v743 = vrot.slane %v741, 7
        %v744 = vrot.slane %v743, 4
        %v746 = vshrl.u32 %v533, 16
        %v748 = vrot.slane %v746, 7
        %v749 = vshll.u32 %v533, 16
        %v751 = vor.u32 %v748, %v749
        %v752 = vsel %vm563, %v744, %v751
        %v753 = vrot.slane %v748, 4
        %v755 = vshrl.u32 %v534, 16
        %v757 = vrot.slane %v755, 7
        %v758 = vshll.u32 %v534, 16
        %v760 = vor.u32 %v757, %v758
        %v761 = vsel %vm563, %v753, %v760
        %v763 = vshrl.u32 %v535, 16
        %v765 = vrot.slane %v763, 7
        %v766 = vrot.slane %v765, 4
        %v768 = vshrl.u32 %v536, 16
        %v770 = vrot.slane %v768, 7
        %v771 = vshll.u32 %v536, 16
        %v773 = vor.u32 %v770, %v771
        %v774 = vsel %vm563, %v766, %v773
        %v775 = vrot.slane %v770, 4
        %v777 = vshrl.u32 %v537, 16
        %v779 = vrot.slane %v777, 7
        %v780 = vshll.u32 %v537, 16
        %v782 = vor.u32 %v779, %v780
        %v783 = vsel %vm563, %v775, %v782
        %v785 = vshrl.u32 %v538, 16
        %v787 = vrot.slane %v785, 7
        %v788 = vrot.slane %v787, 4
        %v790 = vshrl.u32 %v539, 16
        %v792 = vrot.slane %v790, 7
        %v793 = vshll.u32 %v539, 16
        %v795 = vor.u32 %v792, %v793
        %v796 = vsel %vm563, %v788, %v795
        %v797 = vrot.slane %v792, 4
        %v799 = vshrl.u32 %v540, 16
        %v801 = vrot.slane %v799, 7
        %v802 = vshll.u32 %v540, 16
        %v804 = vor.u32 %v801, %v802
        %v805 = vsel %vm563, %v797, %v804
        %v807 = vshrl.u32 %v541, 16
        %v809 = vrot.slane %v807, 7
        %v810 = vrot.slane %v809, 4
        %v812 = vshrl.u32 %v542, 16
        %v814 = vrot.slane %v812, 7
        %v815 = vshll.u32 %v542, 16
        %v817 = vor.u32 %v814, %v815
        %v818 = vsel %vm563, %v810, %v817
        %v819 = vrot.slane %v814, 4
        %v821 = vshrl.u32 %v543, 16
        %v823 = vrot.slane %v821, 7
        %v824 = vshll.u32 %v543, 16
        %v826 = vor.u32 %v823, %v824
        %v827 = vsel %vm563, %v819, %v826
        %v829 = vshrl.u32 %v544, 16
        %v831 = vrot.slane %v829, 7
        %v832 = vrot.slane %v831, 4
        %v834 = vshrl.u32 %v545, 16
        %v836 = vrot.slane %v834, 7
        %v837 = vshll.u32 %v545, 16
        %v839 = vor.u32 %v836, %v837
        %v840 = vsel %vm563, %v832, %v839
        %v841 = vrot.slane %v836, 4
        %v843 = vshrl.u32 %v546, 16
        %v845 = vrot.slane %v843, 7
        %v846 = vshll.u32 %v546, 16
        %v848 = vor.u32 %v845, %v846
        %v849 = vsel %vm563, %v841, %v848
        %v851 = vshrl.u32 %v547, 16
        %v853 = vrot.slane %v851, 7
        %v854 = vrot.slane %v853, 4
        %v856 = vshrl.u32 %v548, 16
        %v858 = vrot.slane %v856, 7
        %v859 = vshll.u32 %v548, 16
        %v861 = vor.u32 %v858, %v859
        %v862 = vsel %vm563, %v854, %v861
        %v863 = vrot.slane %v858, 4
        %v865 = vshrl.u32 %v549, 16
        %v867 = vrot.slane %v865, 7
        %v868 = vshll.u32 %v549, 16
        %v870 = vor.u32 %v867, %v868
        %v871 = vsel %vm563, %v863, %v870
        %v873 = vshrl.u32 %v550, 16
        %v875 = vrot.slane %v873, 7
        %v876 = vrot.slane %v875, 4
        %v878 = vshrl.u32 %v551, 16
        %v880 = vrot.slane %v878, 7
        %v881 = vshll.u32 %v551, 16
        %v883 = vor.u32 %v880, %v881
        %v884 = vsel %vm563, %v876, %v883
        %v885 = vrot.slane %v880, 4
        %v887 = vshrl.u32 %v552, 16
        %v889 = vrot.slane %v887, 7
        %v890 = vshll.u32 %v552, 16
        %v892 = vor.u32 %v889, %v890
        %v893 = vsel %vm563, %v885, %v892
        %v895 = vshrl.u32 %v553, 16
        %v897 = vrot.slane %v895, 7
        %v898 = vrot.slane %v897, 4
        %v900 = vshrl.u32 %v554, 16
        %v902 = vrot.slane %v900, 7
        %v903 = vshll.u32 %v554, 16
        %v905 = vor.u32 %v902, %v903
        %v906 = vsel %vm563, %v898, %v905
        %v907 = vrot.slane %v902, 4
        %v909 = vshrl.u32 %v555, 16
        %v911 = vrot.slane %v909, 7
        %v912 = vshll.u32 %v555, 16
        %v914 = vor.u32 %v911, %v912
        %v915 = vsel %vm563, %v907, %v914
        %v917 = vshrl.u32 %v556, 16
        %v919 = vrot.slane %v917, 7
        %v920 = vrot.slane %v919, 4
        %v922 = vshrl.u32 %v557, 16
        %v924 = vrot.slane %v922, 7
        %v925 = vshll.u32 %v557, 16
        %v927 = vor.u32 %v924, %v925
        %v928 = vsel %vm563, %v920, %v927
        %v929 = vrot.slane %v924, 4
        %v931 = vshrl.u32 %v558, 16
        %v933 = vrot.slane %v931, 7
        %v934 = vshll.u32 %v558, 16
        %v936 = vor.u32 %v933, %v934
        %v937 = vsel %vm563, %v929, %v936
        %v939 = vshrl.u32 %v559, 16
        %v941 = vrot.slane %v939, 7
        %v942 = vrot.slane %v941, 4
        %v944 = vshrl.u32 %v560, 16
        %v946 = vrot.slane %v944, 7
        %v947 = vshll.u32 %v560, 16
        %v949 = vor.u32 %v946, %v947
        %v950 = vsel %vm563, %v942, %v949
        %v951 = vrot.slane %v946, 4
        %v953 = vshrl.u32 %v561, 16
        %v955 = vrot.slane %v953, 7
        %v956 = vshll.u32 %v561, 16
        %v958 = vor.u32 %v955, %v956
        %v959 = vsel %vm563, %v951, %v958
        %v960 = vld [vmem:[%s1] sm:$0xf]
        %v961 = vld [vmem:[%s1 + $0x4] sm:$0xf]
        %v962 = vld [vmem:[%s1 + $0x8] sm:$0xf]
        %v963 = vld [vmem:[%s1 + $0xc] sm:$0xf]
        %v964 = vld [vmem:[%s1 + $0x10] sm:$0xf]
        %v965 = vld [vmem:[%s1 + $0x14] sm:$0xf]
        %v966 = vld [vmem:[%s1 + $0x18] sm:$0xf]
        %v967 = vld [vmem:[%s1 + $0x1c] sm:$0xf]
        %v968 = vld [vmem:[%s1 + $0x20] sm:$0xf]
        %v969 = vld [vmem:[%s1 + $0x24] sm:$0xf]
        %v970 = vld [vmem:[%s1 + $0x28] sm:$0xf]
        %v971 = vld [vmem:[%s1 + $0x2c] sm:$0xf]
        %v972 = vld [vmem:[%s1 + $0x30] sm:$0xf]
        %v973 = vld [vmem:[%s1 + $0x34] sm:$0xf]
        %v974 = vld [vmem:[%s1 + $0x38] sm:$0xf]
        %v975 = vld [vmem:[%s1 + $0x3c] sm:$0xf]
        %s976 = scalar_lea.vmem %s1, 192
        %v977 = vld [vmem:[%s976] sm:$0xf]
        %v978 = vld [vmem:[%s976 + $0x4] sm:$0xf]
        %v979 = vld [vmem:[%s976 + $0x8] sm:$0xf]
        %v980 = vld [vmem:[%s976 + $0xc] sm:$0xf]
        %v981 = vld [vmem:[%s976 + $0x10] sm:$0xf]
        %v982 = vld [vmem:[%s976 + $0x14] sm:$0xf]
        %v983 = vld [vmem:[%s976 + $0x18] sm:$0xf]
        %v984 = vld [vmem:[%s976 + $0x1c] sm:$0xf]
        %v985 = vld [vmem:[%s976 + $0x20] sm:$0xf]
        %v986 = vld [vmem:[%s976 + $0x24] sm:$0xf]
        %v987 = vld [vmem:[%s976 + $0x28] sm:$0xf]
        %v988 = vld [vmem:[%s976 + $0x2c] sm:$0xf]
        %v989 = vld [vmem:[%s976 + $0x30] sm:$0xf]
        %v990 = vld [vmem:[%s976 + $0x34] sm:$0xf]
        %v991 = vld [vmem:[%s976 + $0x38] sm:$0xf]
        %v992 = vld [vmem:[%s976 + $0x3c] sm:$0xf]
        %v993 = vunpack.c.l.b16 %v598
        %v994 = vunpack.c.l.b16 %v607
        %v995 = vunpack.c.l.b16 %v620
        %v996 = vunpack.c.l.b16 %v629
        %v997 = vunpack.c.l.b16 %v642
        %v998 = vunpack.c.l.b16 %v651
        %v999 = vunpack.c.l.b16 %v664
        %v1000 = vunpack.c.l.b16 %v673
        %v1001 = vunpack.c.l.b16 %v686
        %v1002 = vunpack.c.l.b16 %v695
        %v1003 = vunpack.c.l.b16 %v708
        %v1004 = vunpack.c.l.b16 %v717
        %v1005 = vunpack.c.l.b16 %v730
        %v1006 = vunpack.c.l.b16 %v739
        %v1007 = vunpack.c.l.b16 %v752
        %v1008 = vunpack.c.l.b16 %v761
        %v1009 = vunpack.c.l.b16 %v774
        %v1010 = vunpack.c.l.b16 %v783
        %v1011 = vunpack.c.l.b16 %v796
        %v1012 = vunpack.c.l.b16 %v805
        %v1013 = vunpack.c.l.b16 %v818
        %v1014 = vunpack.c.l.b16 %v827
        %v1015 = vunpack.c.l.b16 %v840
        %v1016 = vunpack.c.l.b16 %v849
        %v1017 = vunpack.c.l.b16 %v862
        %v1018 = vunpack.c.l.b16 %v871
        %v1019 = vunpack.c.l.b16 %v884
        %v1020 = vunpack.c.l.b16 %v893
        %v1021 = vunpack.c.l.b16 %v906
        %v1022 = vunpack.c.l.b16 %v915
        %v1023 = vunpack.c.l.b16 %v928
        %v1024 = vunpack.c.l.b16 %v937
        %v1025 = vpack.c.b16 %v994, %v993
        %v1026 = vpack.c.b16 %v996, %v995
        %v1027 = vpack.c.b16 %v998, %v997
        %v1028 = vpack.c.b16 %v1000, %v999
        %v1029 = vpack.c.b16 %v1002, %v1001
        %v1030 = vpack.c.b16 %v1004, %v1003
        %v1031 = vpack.c.b16 %v1006, %v1005
        %v1032 = vpack.c.b16 %v1008, %v1007
        %v1033 = vpack.c.b16 %v1010, %v1009
        %v1034 = vpack.c.b16 %v1012, %v1011
        %v1035 = vpack.c.b16 %v1014, %v1013
        %v1036 = vpack.c.b16 %v1016, %v1015
        %v1037 = vpack.c.b16 %v1018, %v1017
        %v1038 = vpack.c.b16 %v1020, %v1019
        %v1039 = vpack.c.b16 %v1022, %v1021
        %v1040 = vpack.c.b16 %v1024, %v1023
        %v1073 = vunpack.c.l.b16 %v977
        %v1074 = vunpack.c.l.b16 %v978
        %v1075 = vunpack.c.l.b16 %v979
        %v1076 = vunpack.c.l.b16 %v980
        %v1077 = vunpack.c.l.b16 %v981
        %v1078 = vunpack.c.l.b16 %v982
        %v1079 = vunpack.c.l.b16 %v983
        %v1080 = vunpack.c.l.b16 %v984
        %v1081 = vunpack.c.l.b16 %v985
        %v1082 = vunpack.c.l.b16 %v986
        %v1083 = vunpack.c.l.b16 %v987
        %v1084 = vunpack.c.l.b16 %v988
        %v1085 = vunpack.c.l.b16 %v989
        %v1086 = vunpack.c.l.b16 %v990
        %v1087 = vunpack.c.l.b16 %v991
        %v1088 = vunpack.c.l.b16 %v992
        %v1089 = vpack.c.b16 %v1074, %v1073
        %v1090 = vpack.c.b16 %v1076, %v1075
        %v1091 = vpack.c.b16 %v1078, %v1077
        %v1092 = vpack.c.b16 %v1080, %v1079
        %v1093 = vpack.c.b16 %v1082, %v1081
        %v1094 = vpack.c.b16 %v1084, %v1083
        %v1095 = vpack.c.b16 %v1086, %v1085
        %v1096 = vpack.c.b16 %v1088, %v1087
        %1105 = vmatpush.bf16.msra.mxu0 %v1096
        %1106 = vmatpush.bf16.msra.mxu0 %v1095
        %1107 = vmatpush.bf16.msra.mxu0 %v1094
        %1108 = vmatpush.bf16.msra.mxu0 %v1093
        %1109 = vmatpush.bf16.msra.mxu0 %v1092
        %1110 = vmatpush.bf16.msra.mxu0 %v1091
        %1111 = vmatpush.bf16.msra.mxu0 %v1090
        %1112 = vmatpush.bf16.msra.mxu0 %v1089
        %1113 = vmatmul.bf16.gmra.mxu0 %v1025
        %v1114 = vpop.f32.mrf.mxu0
        %v1115 = vadd.f32 0.0, %v1114
        %v1116 = vpop.f32.mrf.mxu0
        %v1117 = vadd.f32 0.0, %v1116
        %1118 = vmatmul.bf16.gmra.mxu0 %v1026
        %v1119 = vpop.f32.mrf.mxu0
        %v1120 = vadd.f32 0.0, %v1119
        %v1121 = vpop.f32.mrf.mxu0
        %v1122 = vadd.f32 0.0, %v1121
        %1123 = vmatmul.bf16.gmra.mxu0 %v1027
        %v1124 = vpop.f32.mrf.mxu0
        %v1125 = vadd.f32 0.0, %v1124
        %v1126 = vpop.f32.mrf.mxu0
        %v1127 = vadd.f32 0.0, %v1126
        %1128 = vmatmul.bf16.gmra.mxu0 %v1028
        %v1129 = vpop.f32.mrf.mxu0
        %v1130 = vadd.f32 0.0, %v1129
        %v1131 = vpop.f32.mrf.mxu0
        %v1132 = vadd.f32 0.0, %v1131
        %1133 = vmatmul.bf16.gmra.mxu0 %v1029
        %v1134 = vpop.f32.mrf.mxu0
        %v1135 = vadd.f32 0.0, %v1134
        %v1136 = vpop.f32.mrf.mxu0
        %v1137 = vadd.f32 0.0, %v1136
        %1138 = vmatmul.bf16.gmra.mxu0 %v1030
        %v1139 = vpop.f32.mrf.mxu0
        %v1140 = vadd.f32 0.0, %v1139
        %v1141 = vpop.f32.mrf.mxu0
        %v1142 = vadd.f32 0.0, %v1141
        %1143 = vmatmul.bf16.gmra.mxu0 %v1031
        %v1144 = vpop.f32.mrf.mxu0
        %v1145 = vadd.f32 0.0, %v1144
        %v1146 = vpop.f32.mrf.mxu0
        %v1147 = vadd.f32 0.0, %v1146
        %1148 = vmatmul.bf16.gmra.mxu0 %v1032
        %v1149 = vpop.f32.mrf.mxu0
        %v1150 = vadd.f32 0.0, %v1149
        %v1151 = vpop.f32.mrf.mxu0
        %v1152 = vadd.f32 0.0, %v1151
        %1153 = vmatmul.bf16.gmra.mxu0 %v1033
        %v1154 = vpop.f32.mrf.mxu0
        %v1155 = vadd.f32 0.0, %v1154
        %v1156 = vpop.f32.mrf.mxu0
        %v1157 = vadd.f32 0.0, %v1156
        %1158 = vmatmul.bf16.gmra.mxu0 %v1034
        %v1159 = vpop.f32.mrf.mxu0
        %v1160 = vadd.f32 0.0, %v1159
        %v1161 = vpop.f32.mrf.mxu0
        %v1162 = vadd.f32 0.0, %v1161
        %1163 = vmatmul.bf16.gmra.mxu0 %v1035
        %v1164 = vpop.f32.mrf.mxu0
        %v1165 = vadd.f32 0.0, %v1164
        %v1166 = vpop.f32.mrf.mxu0
        %v1167 = vadd.f32 0.0, %v1166
        %1168 = vmatmul.bf16.gmra.mxu0 %v1036
        %v1169 = vpop.f32.mrf.mxu0
        %v1170 = vadd.f32 0.0, %v1169
        %v1171 = vpop.f32.mrf.mxu0
        %v1172 = vadd.f32 0.0, %v1171
        %1173 = vmatmul.bf16.gmra.mxu0 %v1037
        %v1174 = vpop.f32.mrf.mxu0
        %v1175 = vadd.f32 0.0, %v1174
        %v1176 = vpop.f32.mrf.mxu0
        %v1177 = vadd.f32 0.0, %v1176
        %1178 = vmatmul.bf16.gmra.mxu0 %v1038
        %v1179 = vpop.f32.mrf.mxu0
        %v1180 = vadd.f32 0.0, %v1179
        %v1181 = vpop.f32.mrf.mxu0
        %v1182 = vadd.f32 0.0, %v1181
        %1183 = vmatmul.bf16.gmra.mxu0 %v1039
        %v1184 = vpop.f32.mrf.mxu0
        %v1185 = vadd.f32 0.0, %v1184
        %v1186 = vpop.f32.mrf.mxu0
        %v1187 = vadd.f32 0.0, %v1186
        %1188 = vmatmul.bf16.gmra.mxu0 %v1040
        %v1189 = vpop.f32.mrf.mxu0
        %v1190 = vadd.f32 0.0, %v1189
        %v1191 = vpop.f32.mrf.mxu0
        %v1192 = vadd.f32 0.0, %v1191
        %1193 = vdwg.mxu0
        %v1194 = vunpack.c.l.b16 %v576
        %v1195 = vunpack.c.l.b16 %v585
        %v1196 = vpack.c.b16 %v1195, %v1194
        %v1214 = vunpack.c.l.b16 %v960
        %v1215 = vunpack.c.l.b16 %v961
        %v1216 = vunpack.c.l.b16 %v962
        %v1217 = vunpack.c.l.b16 %v963
        %v1218 = vunpack.c.l.b16 %v964
        %v1219 = vunpack.c.l.b16 %v965
        %v1220 = vunpack.c.l.b16 %v966
        %v1221 = vunpack.c.l.b16 %v967
        %v1222 = vunpack.c.l.b16 %v968
        %v1223 = vunpack.c.l.b16 %v969
        %v1224 = vunpack.c.l.b16 %v970
        %v1225 = vunpack.c.l.b16 %v971
        %v1226 = vunpack.c.l.b16 %v972
        %v1227 = vunpack.c.l.b16 %v973
        %v1228 = vunpack.c.l.b16 %v974
        %v1229 = vunpack.c.l.b16 %v975
        %v1230 = vpack.c.b16 %v1215, %v1214
        %v1231 = vpack.c.b16 %v1217, %v1216
        %v1232 = vpack.c.b16 %v1219, %v1218
        %v1233 = vpack.c.b16 %v1221, %v1220
        %v1234 = vpack.c.b16 %v1223, %v1222
        %v1235 = vpack.c.b16 %v1225, %v1224
        %v1236 = vpack.c.b16 %v1227, %v1226
        %v1237 = vpack.c.b16 %v1229, %v1228
        %1246 = vmatpush.bf16.msra.mxu0 %v1237
        %1247 = vmatpush.bf16.msra.mxu0 %v1236
        %1248 = vmatpush.bf16.msra.mxu0 %v1235
        %1249 = vmatpush.bf16.msra.mxu0 %v1234
        %1250 = vmatpush.bf16.msra.mxu0 %v1233
        %1251 = vmatpush.bf16.msra.mxu0 %v1232
        %1252 = vmatpush.bf16.msra.mxu0 %v1231
        %1253 = vmatpush.bf16.msra.mxu0 %v1230
        %1254 = vmatmul.bf16.gmra.mxu0 %v1196
        %v1255 = vpop.f32.mrf.mxu0
        %v1256 = vadd.f32 %v1115, %v1255
        %v1257 = vpop.f32.mrf.mxu0
        %v1258 = vadd.f32 %v1117, %v1257
        %1259 = vmatmul.bf16.gmra.mxu0 %v1025
        %v1260 = vpop.f32.mrf.mxu0
        %v1261 = vadd.f32 %v1120, %v1260
        %v1262 = vpop.f32.mrf.mxu0
        %v1263 = vadd.f32 %v1122, %v1262
        %1264 = vmatmul.bf16.gmra.mxu0 %v1026
        %v1265 = vpop.f32.mrf.mxu0
        %v1266 = vadd.f32 %v1125, %v1265
        %v1267 = vpop.f32.mrf.mxu0
        %v1268 = vadd.f32 %v1127, %v1267
        %1269 = vmatmul.bf16.gmra.mxu0 %v1027
        %v1270 = vpop.f32.mrf.mxu0
        %v1271 = vadd.f32 %v1130, %v1270
        %v1272 = vpop.f32.mrf.mxu0
        %v1273 = vadd.f32 %v1132, %v1272
        %1274 = vmatmul.bf16.gmra.mxu0 %v1028
        %v1275 = vpop.f32.mrf.mxu0
        %v1276 = vadd.f32 %v1135, %v1275
        %v1277 = vpop.f32.mrf.mxu0
        %v1278 = vadd.f32 %v1137, %v1277
        %1279 = vmatmul.bf16.gmra.mxu0 %v1029
        %v1280 = vpop.f32.mrf.mxu0
        %v1281 = vadd.f32 %v1140, %v1280
        %v1282 = vpop.f32.mrf.mxu0
        %v1283 = vadd.f32 %v1142, %v1282
        %1284 = vmatmul.bf16.gmra.mxu0 %v1030
        %v1285 = vpop.f32.mrf.mxu0
        %v1286 = vadd.f32 %v1145, %v1285
        %v1287 = vpop.f32.mrf.mxu0
        %v1288 = vadd.f32 %v1147, %v1287
        %1289 = vmatmul.bf16.gmra.mxu0 %v1031
        %v1290 = vpop.f32.mrf.mxu0
        %v1291 = vadd.f32 %v1150, %v1290
        %v1292 = vpop.f32.mrf.mxu0
        %v1293 = vadd.f32 %v1152, %v1292
        %1294 = vmatmul.bf16.gmra.mxu0 %v1032
        %v1295 = vpop.f32.mrf.mxu0
        %v1296 = vadd.f32 %v1155, %v1295
        %v1297 = vpop.f32.mrf.mxu0
        %v1298 = vadd.f32 %v1157, %v1297
        %1299 = vmatmul.bf16.gmra.mxu0 %v1033
        %v1300 = vpop.f32.mrf.mxu0
        %v1301 = vadd.f32 %v1160, %v1300
        %v1302 = vpop.f32.mrf.mxu0
        %v1303 = vadd.f32 %v1162, %v1302
        %1304 = vmatmul.bf16.gmra.mxu0 %v1034
        %v1305 = vpop.f32.mrf.mxu0
        %v1306 = vadd.f32 %v1165, %v1305
        %v1307 = vpop.f32.mrf.mxu0
        %v1308 = vadd.f32 %v1167, %v1307
        %1309 = vmatmul.bf16.gmra.mxu0 %v1035
        %v1310 = vpop.f32.mrf.mxu0
        %v1311 = vadd.f32 %v1170, %v1310
        %v1312 = vpop.f32.mrf.mxu0
        %v1313 = vadd.f32 %v1172, %v1312
        %1314 = vmatmul.bf16.gmra.mxu0 %v1036
        %v1315 = vpop.f32.mrf.mxu0
        %v1316 = vadd.f32 %v1175, %v1315
        %v1317 = vpop.f32.mrf.mxu0
        %v1318 = vadd.f32 %v1177, %v1317
        %1319 = vmatmul.bf16.gmra.mxu0 %v1037
        %v1320 = vpop.f32.mrf.mxu0
        %v1321 = vadd.f32 %v1180, %v1320
        %v1322 = vpop.f32.mrf.mxu0
        %v1323 = vadd.f32 %v1182, %v1322
        %1324 = vmatmul.bf16.gmra.mxu0 %v1038
        %v1325 = vpop.f32.mrf.mxu0
        %v1326 = vadd.f32 %v1185, %v1325
        %v1327 = vpop.f32.mrf.mxu0
        %v1328 = vadd.f32 %v1187, %v1327
        %1329 = vmatmul.bf16.gmra.mxu0 %v1039
        %v1330 = vpop.f32.mrf.mxu0
        %v1331 = vadd.f32 %v1190, %v1330
        %v1332 = vpop.f32.mrf.mxu0
        %v1333 = vadd.f32 %v1192, %v1332
        %1334 = vdwg.mxu0
        %s1335 = scalar_lea.vmem %s1, 384
        %v1336 = vld [vmem:[%s1335] sm:$0xf]
        %v1337 = vld [vmem:[%s1335 + $0x4] sm:$0xf]
        %v1338 = vld [vmem:[%s1335 + $0x8] sm:$0xf]
        %v1339 = vld [vmem:[%s1335 + $0xc] sm:$0xf]
        %v1340 = vld [vmem:[%s1335 + $0x10] sm:$0xf]
        %v1341 = vld [vmem:[%s1335 + $0x14] sm:$0xf]
        %v1342 = vld [vmem:[%s1335 + $0x18] sm:$0xf]
        %v1343 = vld [vmem:[%s1335 + $0x1c] sm:$0xf]
        %v1344 = vld [vmem:[%s1335 + $0x20] sm:$0xf]
        %v1345 = vld [vmem:[%s1335 + $0x24] sm:$0xf]
        %v1346 = vld [vmem:[%s1335 + $0x28] sm:$0xf]
        %v1347 = vld [vmem:[%s1335 + $0x2c] sm:$0xf]
        %v1348 = vld [vmem:[%s1335 + $0x30] sm:$0xf]
        %v1349 = vld [vmem:[%s1335 + $0x34] sm:$0xf]
        %v1350 = vld [vmem:[%s1335 + $0x38] sm:$0xf]
        %v1351 = vld [vmem:[%s1335 + $0x3c] sm:$0xf]
        %v1352 = vunpack.c.l.b16 %v950
        %v1353 = vunpack.c.l.b16 %v959
        %v1354 = vpack.c.b16 %v1353, %v1352
        %v1372 = vunpack.c.l.b16 %v1336
        %v1373 = vunpack.c.l.b16 %v1337
        %v1374 = vunpack.c.l.b16 %v1338
        %v1375 = vunpack.c.l.b16 %v1339
        %v1376 = vunpack.c.l.b16 %v1340
        %v1377 = vunpack.c.l.b16 %v1341
        %v1378 = vunpack.c.l.b16 %v1342
        %v1379 = vunpack.c.l.b16 %v1343
        %v1380 = vunpack.c.l.b16 %v1344
        %v1381 = vunpack.c.l.b16 %v1345
        %v1382 = vunpack.c.l.b16 %v1346
        %v1383 = vunpack.c.l.b16 %v1347
        %v1384 = vunpack.c.l.b16 %v1348
        %v1385 = vunpack.c.l.b16 %v1349
        %v1386 = vunpack.c.l.b16 %v1350
        %v1387 = vunpack.c.l.b16 %v1351
        %v1388 = vpack.c.b16 %v1373, %v1372
        %v1389 = vpack.c.b16 %v1375, %v1374
        %v1390 = vpack.c.b16 %v1377, %v1376
        %v1391 = vpack.c.b16 %v1379, %v1378
        %v1392 = vpack.c.b16 %v1381, %v1380
        %v1393 = vpack.c.b16 %v1383, %v1382
        %v1394 = vpack.c.b16 %v1385, %v1384
        %v1395 = vpack.c.b16 %v1387, %v1386
        %1404 = vmatpush.bf16.msra.mxu0 %v1395
        %1405 = vmatpush.bf16.msra.mxu0 %v1394
        %1406 = vmatpush.bf16.msra.mxu0 %v1393
        %1407 = vmatpush.bf16.msra.mxu0 %v1392
        %1408 = vmatpush.bf16.msra.mxu0 %v1391
        %1409 = vmatpush.bf16.msra.mxu0 %v1390
        %1410 = vmatpush.bf16.msra.mxu0 %v1389
        %1411 = vmatpush.bf16.msra.mxu0 %v1388
        %1412 = vmatmul.bf16.gmra.mxu0 %v1026
        %v1413 = vpop.f32.mrf.mxu0
        %v1414 = vadd.f32 0.0, %v1413
        %v1415 = vpop.f32.mrf.mxu0
        %v1416 = vadd.f32 0.0, %v1415
        %1417 = vmatmul.bf16.gmra.mxu0 %v1027
        %v1418 = vpop.f32.mrf.mxu0
        %v1419 = vadd.f32 0.0, %v1418
        %v1420 = vpop.f32.mrf.mxu0
        %v1421 = vadd.f32 0.0, %v1420
        %1422 = vmatmul.bf16.gmra.mxu0 %v1028
        %v1423 = vpop.f32.mrf.mxu0
        %v1424 = vadd.f32 0.0, %v1423
        %v1425 = vpop.f32.mrf.mxu0
        %v1426 = vadd.f32 0.0, %v1425
        %1427 = vmatmul.bf16.gmra.mxu0 %v1029
        %v1428 = vpop.f32.mrf.mxu0
        %v1429 = vadd.f32 0.0, %v1428
        %v1430 = vpop.f32.mrf.mxu0
        %v1431 = vadd.f32 0.0, %v1430
        %1432 = vmatmul.bf16.gmra.mxu0 %v1030
        %v1433 = vpop.f32.mrf.mxu0
        %v1434 = vadd.f32 0.0, %v1433
        %v1435 = vpop.f32.mrf.mxu0
        %v1436 = vadd.f32 0.0, %v1435
        %1437 = vmatmul.bf16.gmra.mxu0 %v1031
        %v1438 = vpop.f32.mrf.mxu0
        %v1439 = vadd.f32 0.0, %v1438
        %v1440 = vpop.f32.mrf.mxu0
        %v1441 = vadd.f32 0.0, %v1440
        %1442 = vmatmul.bf16.gmra.mxu0 %v1032
        %v1443 = vpop.f32.mrf.mxu0
        %v1444 = vadd.f32 0.0, %v1443
        %v1445 = vpop.f32.mrf.mxu0
        %v1446 = vadd.f32 0.0, %v1445
        %1447 = vmatmul.bf16.gmra.mxu0 %v1033
        %v1448 = vpop.f32.mrf.mxu0
        %v1449 = vadd.f32 0.0, %v1448
        %v1450 = vpop.f32.mrf.mxu0
        %v1451 = vadd.f32 0.0, %v1450
        %1452 = vmatmul.bf16.gmra.mxu0 %v1034
        %v1453 = vpop.f32.mrf.mxu0
        %v1454 = vadd.f32 0.0, %v1453
        %v1455 = vpop.f32.mrf.mxu0
        %v1456 = vadd.f32 0.0, %v1455
        %1457 = vmatmul.bf16.gmra.mxu0 %v1035
        %v1458 = vpop.f32.mrf.mxu0
        %v1459 = vadd.f32 0.0, %v1458
        %v1460 = vpop.f32.mrf.mxu0
        %v1461 = vadd.f32 0.0, %v1460
        %1462 = vmatmul.bf16.gmra.mxu0 %v1036
        %v1463 = vpop.f32.mrf.mxu0
        %v1464 = vadd.f32 0.0, %v1463
        %v1465 = vpop.f32.mrf.mxu0
        %v1466 = vadd.f32 0.0, %v1465
        %1467 = vmatmul.bf16.gmra.mxu0 %v1037
        %v1468 = vpop.f32.mrf.mxu0
        %v1469 = vadd.f32 0.0, %v1468
        %v1470 = vpop.f32.mrf.mxu0
        %v1471 = vadd.f32 0.0, %v1470
        %1472 = vmatmul.bf16.gmra.mxu0 %v1038
        %v1473 = vpop.f32.mrf.mxu0
        %v1474 = vadd.f32 0.0, %v1473
        %v1475 = vpop.f32.mrf.mxu0
        %v1476 = vadd.f32 0.0, %v1475
        %1477 = vmatmul.bf16.gmra.mxu0 %v1039
        %v1478 = vpop.f32.mrf.mxu0
        %v1479 = vadd.f32 0.0, %v1478
        %v1480 = vpop.f32.mrf.mxu0
        %v1481 = vadd.f32 0.0, %v1480
        %1482 = vmatmul.bf16.gmra.mxu0 %v1040
        %v1483 = vpop.f32.mrf.mxu0
        %v1484 = vadd.f32 0.0, %v1483
        %v1485 = vpop.f32.mrf.mxu0
        %v1486 = vadd.f32 0.0, %v1485
        %1487 = vmatmul.bf16.gmra.mxu0 %v1354
        %v1488 = vpop.f32.mrf.mxu0
        %v1489 = vadd.f32 0.0, %v1488
        %v1490 = vpop.f32.mrf.mxu0
        %v1491 = vadd.f32 0.0, %v1490
        %1492 = vdwg.mxu0
        %v1493 = vadd.f32 %v1256, %v1414
        %v1494 = vadd.f32 %v1258, %v1416
        %v1495 = vadd.f32 %v1261, %v1419
        %v1496 = vadd.f32 %v1263, %v1421
        %v1497 = vadd.f32 %v1266, %v1424
        %v1498 = vadd.f32 %v1268, %v1426
        %v1499 = vadd.f32 %v1271, %v1429
        %v1500 = vadd.f32 %v1273, %v1431
        %v1501 = vadd.f32 %v1276, %v1434
        %v1502 = vadd.f32 %v1278, %v1436
        %v1503 = vadd.f32 %v1281, %v1439
        %v1504 = vadd.f32 %v1283, %v1441
        %v1505 = vadd.f32 %v1286, %v1444
        %v1506 = vadd.f32 %v1288, %v1446
        %v1507 = vadd.f32 %v1291, %v1449
        %v1508 = vadd.f32 %v1293, %v1451
        %v1509 = vadd.f32 %v1296, %v1454
        %v1510 = vadd.f32 %v1298, %v1456
        %v1511 = vadd.f32 %v1301, %v1459
        %v1512 = vadd.f32 %v1303, %v1461
        %v1513 = vadd.f32 %v1306, %v1464
        %v1514 = vadd.f32 %v1308, %v1466
        %v1515 = vadd.f32 %v1311, %v1469
        %v1516 = vadd.f32 %v1313, %v1471
        %v1517 = vadd.f32 %v1316, %v1474
        %v1518 = vadd.f32 %v1318, %v1476
        %v1519 = vadd.f32 %v1321, %v1479
        %v1520 = vadd.f32 %v1323, %v1481
        %v1521 = vadd.f32 %v1326, %v1484
        %v1522 = vadd.f32 %v1328, %v1486
        %v1523 = vadd.f32 %v1331, %v1489
        %v1524 = vadd.f32 %v1333, %v1491
        %s1525 = scalar_lea.vmem %s1, 64
        %v1526 = vld [vmem:[%s1525] sm:$0xf]
        %v1527 = vld [vmem:[%s1525 + $0x4] sm:$0xf]
        %v1528 = vld [vmem:[%s1525 + $0x8] sm:$0xf]
        %v1529 = vld [vmem:[%s1525 + $0xc] sm:$0xf]
        %v1530 = vld [vmem:[%s1525 + $0x10] sm:$0xf]
        %v1531 = vld [vmem:[%s1525 + $0x14] sm:$0xf]
        %v1532 = vld [vmem:[%s1525 + $0x18] sm:$0xf]
        %v1533 = vld [vmem:[%s1525 + $0x1c] sm:$0xf]
        %v1534 = vld [vmem:[%s1525 + $0x20] sm:$0xf]
        %v1535 = vld [vmem:[%s1525 + $0x24] sm:$0xf]
        %v1536 = vld [vmem:[%s1525 + $0x28] sm:$0xf]
        %v1537 = vld [vmem:[%s1525 + $0x2c] sm:$0xf]
        %v1538 = vld [vmem:[%s1525 + $0x30] sm:$0xf]
        %v1539 = vld [vmem:[%s1525 + $0x34] sm:$0xf]
        %v1540 = vld [vmem:[%s1525 + $0x38] sm:$0xf]
        %v1541 = vld [vmem:[%s1525 + $0x3c] sm:$0xf]
        %v1574 = vunpack.c.l.b16 %v509
        %v1575 = vunpack.c.l.b16 %v510
        %v1576 = vunpack.c.l.b16 %v512
        %v1577 = vunpack.c.l.b16 %v513
        %v1578 = vunpack.c.l.b16 %v515
        %v1579 = vunpack.c.l.b16 %v516
        %v1580 = vunpack.c.l.b16 %v518
        %v1581 = vunpack.c.l.b16 %v519
        %v1582 = vunpack.c.l.b16 %v521
        %v1583 = vunpack.c.l.b16 %v522
        %v1584 = vunpack.c.l.b16 %v524
        %v1585 = vunpack.c.l.b16 %v525
        %v1586 = vunpack.c.l.b16 %v527
        %v1587 = vunpack.c.l.b16 %v528
        %v1588 = vunpack.c.l.b16 %v530
        %v1589 = vunpack.c.l.b16 %v531
        %v1590 = vunpack.c.l.b16 %v533
        %v1591 = vunpack.c.l.b16 %v534
        %v1592 = vunpack.c.l.b16 %v536
        %v1593 = vunpack.c.l.b16 %v537
        %v1594 = vunpack.c.l.b16 %v539
        %v1595 = vunpack.c.l.b16 %v540
        %v1596 = vunpack.c.l.b16 %v542
        %v1597 = vunpack.c.l.b16 %v543
        %v1598 = vunpack.c.l.b16 %v545
        %v1599 = vunpack.c.l.b16 %v546
        %v1600 = vunpack.c.l.b16 %v548
        %v1601 = vunpack.c.l.b16 %v549
        %v1602 = vunpack.c.l.b16 %v551
        %v1603 = vunpack.c.l.b16 %v552
        %v1604 = vunpack.c.l.b16 %v554
        %v1605 = vunpack.c.l.b16 %v555
        %v1606 = vpack.c.b16 %v1575, %v1574
        %v1607 = vpack.c.b16 %v1577, %v1576
        %v1608 = vpack.c.b16 %v1579, %v1578
        %v1609 = vpack.c.b16 %v1581, %v1580
        %v1610 = vpack.c.b16 %v1583, %v1582
        %v1611 = vpack.c.b16 %v1585, %v1584
        %v1612 = vpack.c.b16 %v1587, %v1586
        %v1613 = vpack.c.b16 %v1589, %v1588
        %v1614 = vpack.c.b16 %v1591, %v1590
        %v1615 = vpack.c.b16 %v1593, %v1592
        %v1616 = vpack.c.b16 %v1595, %v1594
        %v1617 = vpack.c.b16 %v1597, %v1596
        %v1618 = vpack.c.b16 %v1599, %v1598
        %v1619 = vpack.c.b16 %v1601, %v1600
        %v1620 = vpack.c.b16 %v1603, %v1602
        %v1621 = vpack.c.b16 %v1605, %v1604
        %v1654 = vunpack.c.l.b16 %v1526
        %v1655 = vunpack.c.l.b16 %v1527
        %v1656 = vunpack.c.l.b16 %v1528
        %v1657 = vunpack.c.l.b16 %v1529
        %v1658 = vunpack.c.l.b16 %v1530
        %v1659 = vunpack.c.l.b16 %v1531
        %v1660 = vunpack.c.l.b16 %v1532
        %v1661 = vunpack.c.l.b16 %v1533
        %v1662 = vunpack.c.l.b16 %v1534
        %v1663 = vunpack.c.l.b16 %v1535
        %v1664 = vunpack.c.l.b16 %v1536
        %v1665 = vunpack.c.l.b16 %v1537
        %v1666 = vunpack.c.l.b16 %v1538
        %v1667 = vunpack.c.l.b16 %v1539
        %v1668 = vunpack.c.l.b16 %v1540
        %v1669 = vunpack.c.l.b16 %v1541
        %v1670 = vpack.c.b16 %v1655, %v1654
        %v1671 = vpack.c.b16 %v1657, %v1656
        %v1672 = vpack.c.b16 %v1659, %v1658
        %v1673 = vpack.c.b16 %v1661, %v1660
        %v1674 = vpack.c.b16 %v1663, %v1662
        %v1675 = vpack.c.b16 %v1665, %v1664
        %v1676 = vpack.c.b16 %v1667, %v1666
        %v1677 = vpack.c.b16 %v1669, %v1668
        %1686 = vmatpush.bf16.msra.mxu0 %v1677
        %1687 = vmatpush.bf16.msra.mxu0 %v1676
        %1688 = vmatpush.bf16.msra.mxu0 %v1675
        %1689 = vmatpush.bf16.msra.mxu0 %v1674
        %1690 = vmatpush.bf16.msra.mxu0 %v1673
        %1691 = vmatpush.bf16.msra.mxu0 %v1672
        %1692 = vmatpush.bf16.msra.mxu0 %v1671
        %1693 = vmatpush.bf16.msra.mxu0 %v1670
        %1694 = vmatmul.bf16.gmra.mxu0 %v1606
        %v1695 = vpop.f32.mrf.mxu0
        %v1696 = vadd.f32 0.0, %v1695
        %v1697 = vpop.f32.mrf.mxu0
        %v1698 = vadd.f32 0.0, %v1697
        %1699 = vmatmul.bf16.gmra.mxu0 %v1607
        %v1700 = vpop.f32.mrf.mxu0
        %v1701 = vadd.f32 0.0, %v1700
        %v1702 = vpop.f32.mrf.mxu0
        %v1703 = vadd.f32 0.0, %v1702
        %1704 = vmatmul.bf16.gmra.mxu0 %v1608
        %v1705 = vpop.f32.mrf.mxu0
        %v1706 = vadd.f32 0.0, %v1705
        %v1707 = vpop.f32.mrf.mxu0
        %v1708 = vadd.f32 0.0, %v1707
        %1709 = vmatmul.bf16.gmra.mxu0 %v1609
        %v1710 = vpop.f32.mrf.mxu0
        %v1711 = vadd.f32 0.0, %v1710
        %v1712 = vpop.f32.mrf.mxu0
        %v1713 = vadd.f32 0.0, %v1712
        %1714 = vmatmul.bf16.gmra.mxu0 %v1610
        %v1715 = vpop.f32.mrf.mxu0
        %v1716 = vadd.f32 0.0, %v1715
        %v1717 = vpop.f32.mrf.mxu0
        %v1718 = vadd.f32 0.0, %v1717
        %1719 = vmatmul.bf16.gmra.mxu0 %v1611
        %v1720 = vpop.f32.mrf.mxu0
        %v1721 = vadd.f32 0.0, %v1720
        %v1722 = vpop.f32.mrf.mxu0
        %v1723 = vadd.f32 0.0, %v1722
        %1724 = vmatmul.bf16.gmra.mxu0 %v1612
        %v1725 = vpop.f32.mrf.mxu0
        %v1726 = vadd.f32 0.0, %v1725
        %v1727 = vpop.f32.mrf.mxu0
        %v1728 = vadd.f32 0.0, %v1727
        %1729 = vmatmul.bf16.gmra.mxu0 %v1613
        %v1730 = vpop.f32.mrf.mxu0
        %v1731 = vadd.f32 0.0, %v1730
        %v1732 = vpop.f32.mrf.mxu0
        %v1733 = vadd.f32 0.0, %v1732
        %1734 = vmatmul.bf16.gmra.mxu0 %v1614
        %v1735 = vpop.f32.mrf.mxu0
        %v1736 = vadd.f32 0.0, %v1735
        %v1737 = vpop.f32.mrf.mxu0
        %v1738 = vadd.f32 0.0, %v1737
        %1739 = vmatmul.bf16.gmra.mxu0 %v1615
        %v1740 = vpop.f32.mrf.mxu0
        %v1741 = vadd.f32 0.0, %v1740
        %v1742 = vpop.f32.mrf.mxu0
        %v1743 = vadd.f32 0.0, %v1742
        %1744 = vmatmul.bf16.gmra.mxu0 %v1616
        %v1745 = vpop.f32.mrf.mxu0
        %v1746 = vadd.f32 0.0, %v1745
        %v1747 = vpop.f32.mrf.mxu0
        %v1748 = vadd.f32 0.0, %v1747
        %1749 = vmatmul.bf16.gmra.mxu0 %v1617
        %v1750 = vpop.f32.mrf.mxu0
        %v1751 = vadd.f32 0.0, %v1750
        %v1752 = vpop.f32.mrf.mxu0
        %v1753 = vadd.f32 0.0, %v1752
        %1754 = vmatmul.bf16.gmra.mxu0 %v1618
        %v1755 = vpop.f32.mrf.mxu0
        %v1756 = vadd.f32 0.0, %v1755
        %v1757 = vpop.f32.mrf.mxu0
        %v1758 = vadd.f32 0.0, %v1757
        %1759 = vmatmul.bf16.gmra.mxu0 %v1619
        %v1760 = vpop.f32.mrf.mxu0
        %v1761 = vadd.f32 0.0, %v1760
        %v1762 = vpop.f32.mrf.mxu0
        %v1763 = vadd.f32 0.0, %v1762
        %1764 = vmatmul.bf16.gmra.mxu0 %v1620
        %v1765 = vpop.f32.mrf.mxu0
        %v1766 = vadd.f32 0.0, %v1765
        %v1767 = vpop.f32.mrf.mxu0
        %v1768 = vadd.f32 0.0, %v1767
        %1769 = vmatmul.bf16.gmra.mxu0 %v1621
        %v1770 = vpop.f32.mrf.mxu0
        %v1771 = vadd.f32 0.0, %v1770
        %v1772 = vpop.f32.mrf.mxu0
        %v1773 = vadd.f32 0.0, %v1772
        %1774 = vdwg.mxu0
        %v1775 = vadd.f32 %v1493, %v1696
        %v1776 = vadd.f32 %v1494, %v1698
        %v1777 = vadd.f32 %v1495, %v1701
        %v1778 = vadd.f32 %v1496, %v1703
        %v1779 = vadd.f32 %v1497, %v1706
        %v1780 = vadd.f32 %v1498, %v1708
        %v1781 = vadd.f32 %v1499, %v1711
        %v1782 = vadd.f32 %v1500, %v1713
        %v1783 = vadd.f32 %v1501, %v1716
        %v1784 = vadd.f32 %v1502, %v1718
        %v1785 = vadd.f32 %v1503, %v1721
        %v1786 = vadd.f32 %v1504, %v1723
        %v1787 = vadd.f32 %v1505, %v1726
        %v1788 = vadd.f32 %v1506, %v1728
        %v1789 = vadd.f32 %v1507, %v1731
        %v1790 = vadd.f32 %v1508, %v1733
        %v1791 = vadd.f32 %v1509, %v1736
        %v1792 = vadd.f32 %v1510, %v1738
        %v1793 = vadd.f32 %v1511, %v1741
        %v1794 = vadd.f32 %v1512, %v1743
        %v1795 = vadd.f32 %v1513, %v1746
        %v1796 = vadd.f32 %v1514, %v1748
        %v1797 = vadd.f32 %v1515, %v1751
        %v1798 = vadd.f32 %v1516, %v1753
        %v1799 = vadd.f32 %v1517, %v1756
        %v1800 = vadd.f32 %v1518, %v1758
        %v1801 = vadd.f32 %v1519, %v1761
        %v1802 = vadd.f32 %v1520, %v1763
        %v1803 = vadd.f32 %v1521, %v1766
        %v1804 = vadd.f32 %v1522, %v1768
        %v1805 = vadd.f32 %v1523, %v1771
        %v1806 = vadd.f32 %v1524, %v1773
        %s1807 = scalar_lea.vmem %s1, 256
        %v1808 = vld [vmem:[%s1807] sm:$0xf]
        %v1809 = vld [vmem:[%s1807 + $0x4] sm:$0xf]
        %v1810 = vld [vmem:[%s1807 + $0x8] sm:$0xf]
        %v1811 = vld [vmem:[%s1807 + $0xc] sm:$0xf]
        %v1812 = vld [vmem:[%s1807 + $0x10] sm:$0xf]
        %v1813 = vld [vmem:[%s1807 + $0x14] sm:$0xf]
        %v1814 = vld [vmem:[%s1807 + $0x18] sm:$0xf]
        %v1815 = vld [vmem:[%s1807 + $0x1c] sm:$0xf]
        %v1816 = vld [vmem:[%s1807 + $0x20] sm:$0xf]
        %v1817 = vld [vmem:[%s1807 + $0x24] sm:$0xf]
        %v1818 = vld [vmem:[%s1807 + $0x28] sm:$0xf]
        %v1819 = vld [vmem:[%s1807 + $0x2c] sm:$0xf]
        %v1820 = vld [vmem:[%s1807 + $0x30] sm:$0xf]
        %v1821 = vld [vmem:[%s1807 + $0x34] sm:$0xf]
        %v1822 = vld [vmem:[%s1807 + $0x38] sm:$0xf]
        %v1823 = vld [vmem:[%s1807 + $0x3c] sm:$0xf]
        %v1826 = vunpack.c.l.b16 %v557
        %v1827 = vunpack.c.l.b16 %v558
        %v1828 = vpack.c.b16 %v1827, %v1826
        %v1846 = vunpack.c.l.b16 %v1808
        %v1847 = vunpack.c.l.b16 %v1809
        %v1848 = vunpack.c.l.b16 %v1810
        %v1849 = vunpack.c.l.b16 %v1811
        %v1850 = vunpack.c.l.b16 %v1812
        %v1851 = vunpack.c.l.b16 %v1813
        %v1852 = vunpack.c.l.b16 %v1814
        %v1853 = vunpack.c.l.b16 %v1815
        %v1854 = vunpack.c.l.b16 %v1816
        %v1855 = vunpack.c.l.b16 %v1817
        %v1856 = vunpack.c.l.b16 %v1818
        %v1857 = vunpack.c.l.b16 %v1819
        %v1858 = vunpack.c.l.b16 %v1820
        %v1859 = vunpack.c.l.b16 %v1821
        %v1860 = vunpack.c.l.b16 %v1822
        %v1861 = vunpack.c.l.b16 %v1823
        %v1862 = vpack.c.b16 %v1847, %v1846
        %v1863 = vpack.c.b16 %v1849, %v1848
        %v1864 = vpack.c.b16 %v1851, %v1850
        %v1865 = vpack.c.b16 %v1853, %v1852
        %v1866 = vpack.c.b16 %v1855, %v1854
        %v1867 = vpack.c.b16 %v1857, %v1856
        %v1868 = vpack.c.b16 %v1859, %v1858
        %v1869 = vpack.c.b16 %v1861, %v1860
        %1878 = vmatpush.bf16.msra.mxu0 %v1869
        %1879 = vmatpush.bf16.msra.mxu0 %v1868
        %1880 = vmatpush.bf16.msra.mxu0 %v1867
        %1881 = vmatpush.bf16.msra.mxu0 %v1866
        %1882 = vmatpush.bf16.msra.mxu0 %v1865
        %1883 = vmatpush.bf16.msra.mxu0 %v1864
        %1884 = vmatpush.bf16.msra.mxu0 %v1863
        %1885 = vmatpush.bf16.msra.mxu0 %v1862
        %1886 = vmatmul.bf16.gmra.mxu0 %v1607
        %v1887 = vpop.f32.mrf.mxu0
        %v1888 = vadd.f32 0.0, %v1887
        %v1889 = vpop.f32.mrf.mxu0
        %v1890 = vadd.f32 0.0, %v1889
        %1891 = vmatmul.bf16.gmra.mxu0 %v1608
        %v1892 = vpop.f32.mrf.mxu0
        %v1893 = vadd.f32 0.0, %v1892
        %v1894 = vpop.f32.mrf.mxu0
        %v1895 = vadd.f32 0.0, %v1894
        %1896 = vmatmul.bf16.gmra.mxu0 %v1609
        %v1897 = vpop.f32.mrf.mxu0
        %v1898 = vadd.f32 0.0, %v1897
        %v1899 = vpop.f32.mrf.mxu0
        %v1900 = vadd.f32 0.0, %v1899
        %1901 = vmatmul.bf16.gmra.mxu0 %v1610
        %v1902 = vpop.f32.mrf.mxu0
        %v1903 = vadd.f32 0.0, %v1902
        %v1904 = vpop.f32.mrf.mxu0
        %v1905 = vadd.f32 0.0, %v1904
        %1906 = vmatmul.bf16.gmra.mxu0 %v1611
        %v1907 = vpop.f32.mrf.mxu0
        %v1908 = vadd.f32 0.0, %v1907
        %v1909 = vpop.f32.mrf.mxu0
        %v1910 = vadd.f32 0.0, %v1909
        %1911 = vmatmul.bf16.gmra.mxu0 %v1612
        %v1912 = vpop.f32.mrf.mxu0
        %v1913 = vadd.f32 0.0, %v1912
        %v1914 = vpop.f32.mrf.mxu0
        %v1915 = vadd.f32 0.0, %v1914
        %1916 = vmatmul.bf16.gmra.mxu0 %v1613
        %v1917 = vpop.f32.mrf.mxu0
        %v1918 = vadd.f32 0.0, %v1917
        %v1919 = vpop.f32.mrf.mxu0
        %v1920 = vadd.f32 0.0, %v1919
        %1921 = vmatmul.bf16.gmra.mxu0 %v1614
        %v1922 = vpop.f32.mrf.mxu0
        %v1923 = vadd.f32 0.0, %v1922
        %v1924 = vpop.f32.mrf.mxu0
        %v1925 = vadd.f32 0.0, %v1924
        %1926 = vmatmul.bf16.gmra.mxu0 %v1615
        %v1927 = vpop.f32.mrf.mxu0
        %v1928 = vadd.f32 0.0, %v1927
        %v1929 = vpop.f32.mrf.mxu0
        %v1930 = vadd.f32 0.0, %v1929
        %1931 = vmatmul.bf16.gmra.mxu0 %v1616
        %v1932 = vpop.f32.mrf.mxu0
        %v1933 = vadd.f32 0.0, %v1932
        %v1934 = vpop.f32.mrf.mxu0
        %v1935 = vadd.f32 0.0, %v1934
        %1936 = vmatmul.bf16.gmra.mxu0 %v1617
        %v1937 = vpop.f32.mrf.mxu0
        %v1938 = vadd.f32 0.0, %v1937
        %v1939 = vpop.f32.mrf.mxu0
        %v1940 = vadd.f32 0.0, %v1939
        %1941 = vmatmul.bf16.gmra.mxu0 %v1618
        %v1942 = vpop.f32.mrf.mxu0
        %v1943 = vadd.f32 0.0, %v1942
        %v1944 = vpop.f32.mrf.mxu0
        %v1945 = vadd.f32 0.0, %v1944
        %1946 = vmatmul.bf16.gmra.mxu0 %v1619
        %v1947 = vpop.f32.mrf.mxu0
        %v1948 = vadd.f32 0.0, %v1947
        %v1949 = vpop.f32.mrf.mxu0
        %v1950 = vadd.f32 0.0, %v1949
        %1951 = vmatmul.bf16.gmra.mxu0 %v1620
        %v1952 = vpop.f32.mrf.mxu0
        %v1953 = vadd.f32 0.0, %v1952
        %v1954 = vpop.f32.mrf.mxu0
        %v1955 = vadd.f32 0.0, %v1954
        %1956 = vmatmul.bf16.gmra.mxu0 %v1621
        %v1957 = vpop.f32.mrf.mxu0
        %v1958 = vadd.f32 0.0, %v1957
        %v1959 = vpop.f32.mrf.mxu0
        %v1960 = vadd.f32 0.0, %v1959
        %1961 = vmatmul.bf16.gmra.mxu0 %v1828
        %v1962 = vpop.f32.mrf.mxu0
        %v1963 = vadd.f32 0.0, %v1962
        %v1964 = vpop.f32.mrf.mxu0
        %v1965 = vadd.f32 0.0, %v1964
        %1966 = vdwg.mxu0
        %v1967 = vadd.f32 %v1775, %v1888
        %v1968 = vadd.f32 %v1776, %v1890
        %v1969 = vadd.f32 %v1777, %v1893
        %v1970 = vadd.f32 %v1778, %v1895
        %v1971 = vadd.f32 %v1779, %v1898
        %v1972 = vadd.f32 %v1780, %v1900
        %v1973 = vadd.f32 %v1781, %v1903
        %v1974 = vadd.f32 %v1782, %v1905
        %v1975 = vadd.f32 %v1783, %v1908
        %v1976 = vadd.f32 %v1784, %v1910
        %v1977 = vadd.f32 %v1785, %v1913
        %v1978 = vadd.f32 %v1786, %v1915
        %v1979 = vadd.f32 %v1787, %v1918
        %v1980 = vadd.f32 %v1788, %v1920
        %v1981 = vadd.f32 %v1789, %v1923
        %v1982 = vadd.f32 %v1790, %v1925
        %v1983 = vadd.f32 %v1791, %v1928
        %v1984 = vadd.f32 %v1792, %v1930
        %v1985 = vadd.f32 %v1793, %v1933
        %v1986 = vadd.f32 %v1794, %v1935
        %v1987 = vadd.f32 %v1795, %v1938
        %v1988 = vadd.f32 %v1796, %v1940
        %v1989 = vadd.f32 %v1797, %v1943
        %v1990 = vadd.f32 %v1798, %v1945
        %v1991 = vadd.f32 %v1799, %v1948
        %v1992 = vadd.f32 %v1800, %v1950
        %v1993 = vadd.f32 %v1801, %v1953
        %v1994 = vadd.f32 %v1802, %v1955
        %v1995 = vadd.f32 %v1803, %v1958
        %v1996 = vadd.f32 %v1804, %v1960
        %v1997 = vadd.f32 %v1805, %v1963
        %v1998 = vadd.f32 %v1806, %v1965
        %s1999 = scalar_lea.vmem %s1, 448
        %v2000 = vld [vmem:[%s1999] sm:$0xf]
        %v2001 = vld [vmem:[%s1999 + $0x4] sm:$0xf]
        %v2002 = vld [vmem:[%s1999 + $0x8] sm:$0xf]
        %v2003 = vld [vmem:[%s1999 + $0xc] sm:$0xf]
        %v2004 = vld [vmem:[%s1999 + $0x10] sm:$0xf]
        %v2005 = vld [vmem:[%s1999 + $0x14] sm:$0xf]
        %v2006 = vld [vmem:[%s1999 + $0x18] sm:$0xf]
        %v2007 = vld [vmem:[%s1999 + $0x1c] sm:$0xf]
        %v2008 = vld [vmem:[%s1999 + $0x20] sm:$0xf]
        %v2009 = vld [vmem:[%s1999 + $0x24] sm:$0xf]
        %v2010 = vld [vmem:[%s1999 + $0x28] sm:$0xf]
        %v2011 = vld [vmem:[%s1999 + $0x2c] sm:$0xf]
        %v2012 = vld [vmem:[%s1999 + $0x30] sm:$0xf]
        %v2013 = vld [vmem:[%s1999 + $0x34] sm:$0xf]
        %v2014 = vld [vmem:[%s1999 + $0x38] sm:$0xf]
        %v2015 = vld [vmem:[%s1999 + $0x3c] sm:$0xf]
        %v2018 = vunpack.c.l.b16 %v560
        %v2019 = vunpack.c.l.b16 %v561
        %v2020 = vpack.c.b16 %v2019, %v2018
        %v2038 = vunpack.c.l.b16 %v2000
        %v2039 = vunpack.c.l.b16 %v2001
        %v2040 = vunpack.c.l.b16 %v2002
        %v2041 = vunpack.c.l.b16 %v2003
        %v2042 = vunpack.c.l.b16 %v2004
        %v2043 = vunpack.c.l.b16 %v2005
        %v2044 = vunpack.c.l.b16 %v2006
        %v2045 = vunpack.c.l.b16 %v2007
        %v2046 = vunpack.c.l.b16 %v2008
        %v2047 = vunpack.c.l.b16 %v2009
        %v2048 = vunpack.c.l.b16 %v2010
        %v2049 = vunpack.c.l.b16 %v2011
        %v2050 = vunpack.c.l.b16 %v2012
        %v2051 = vunpack.c.l.b16 %v2013
        %v2052 = vunpack.c.l.b16 %v2014
        %v2053 = vunpack.c.l.b16 %v2015
        %v2054 = vpack.c.b16 %v2039, %v2038
        %v2055 = vpack.c.b16 %v2041, %v2040
        %v2056 = vpack.c.b16 %v2043, %v2042
        %v2057 = vpack.c.b16 %v2045, %v2044
        %v2058 = vpack.c.b16 %v2047, %v2046
        %v2059 = vpack.c.b16 %v2049, %v2048
        %v2060 = vpack.c.b16 %v2051, %v2050
        %v2061 = vpack.c.b16 %v2053, %v2052
        %2070 = vmatpush.bf16.msra.mxu0 %v2061
        %2071 = vmatpush.bf16.msra.mxu0 %v2060
        %2072 = vmatpush.bf16.msra.mxu0 %v2059
        %2073 = vmatpush.bf16.msra.mxu0 %v2058
        %2074 = vmatpush.bf16.msra.mxu0 %v2057
        %2075 = vmatpush.bf16.msra.mxu0 %v2056
        %2076 = vmatpush.bf16.msra.mxu0 %v2055
        %2077 = vmatpush.bf16.msra.mxu0 %v2054
        %2078 = vmatmul.bf16.gmra.mxu0 %v1608
        %v2079 = vpop.f32.mrf.mxu0
        %v2080 = vadd.f32 0.0, %v2079
        %v2081 = vpop.f32.mrf.mxu0
        %v2082 = vadd.f32 0.0, %v2081
        %2083 = vmatmul.bf16.gmra.mxu0 %v1609
        %v2084 = vpop.f32.mrf.mxu0
        %v2085 = vadd.f32 0.0, %v2084
        %v2086 = vpop.f32.mrf.mxu0
        %v2087 = vadd.f32 0.0, %v2086
        %2088 = vmatmul.bf16.gmra.mxu0 %v1610
        %v2089 = vpop.f32.mrf.mxu0
        %v2090 = vadd.f32 0.0, %v2089
        %v2091 = vpop.f32.mrf.mxu0
        %v2092 = vadd.f32 0.0, %v2091
        %2093 = vmatmul.bf16.gmra.mxu0 %v1611
        %v2094 = vpop.f32.mrf.mxu0
        %v2095 = vadd.f32 0.0, %v2094
        %v2096 = vpop.f32.mrf.mxu0
        %v2097 = vadd.f32 0.0, %v2096
        %2098 = vmatmul.bf16.gmra.mxu0 %v1612
        %v2099 = vpop.f32.mrf.mxu0
        %v2100 = vadd.f32 0.0, %v2099
        %v2101 = vpop.f32.mrf.mxu0
        %v2102 = vadd.f32 0.0, %v2101
        %2103 = vmatmul.bf16.gmra.mxu0 %v1613
        %v2104 = vpop.f32.mrf.mxu0
        %v2105 = vadd.f32 0.0, %v2104
        %v2106 = vpop.f32.mrf.mxu0
        %v2107 = vadd.f32 0.0, %v2106
        %2108 = vmatmul.bf16.gmra.mxu0 %v1614
        %v2109 = vpop.f32.mrf.mxu0
        %v2110 = vadd.f32 0.0, %v2109
        %v2111 = vpop.f32.mrf.mxu0
        %v2112 = vadd.f32 0.0, %v2111
        %2113 = vmatmul.bf16.gmra.mxu0 %v1615
        %v2114 = vpop.f32.mrf.mxu0
        %v2115 = vadd.f32 0.0, %v2114
        %v2116 = vpop.f32.mrf.mxu0
        %v2117 = vadd.f32 0.0, %v2116
        %2118 = vmatmul.bf16.gmra.mxu0 %v1616
        %v2119 = vpop.f32.mrf.mxu0
        %v2120 = vadd.f32 0.0, %v2119
        %v2121 = vpop.f32.mrf.mxu0
        %v2122 = vadd.f32 0.0, %v2121
        %2123 = vmatmul.bf16.gmra.mxu0 %v1617
        %v2124 = vpop.f32.mrf.mxu0
        %v2125 = vadd.f32 0.0, %v2124
        %v2126 = vpop.f32.mrf.mxu0
        %v2127 = vadd.f32 0.0, %v2126
        %2128 = vmatmul.bf16.gmra.mxu0 %v1618
        %v2129 = vpop.f32.mrf.mxu0
        %v2130 = vadd.f32 0.0, %v2129
        %v2131 = vpop.f32.mrf.mxu0
        %v2132 = vadd.f32 0.0, %v2131
        %2133 = vmatmul.bf16.gmra.mxu0 %v1619
        %v2134 = vpop.f32.mrf.mxu0
        %v2135 = vadd.f32 0.0, %v2134
        %v2136 = vpop.f32.mrf.mxu0
        %v2137 = vadd.f32 0.0, %v2136
        %2138 = vmatmul.bf16.gmra.mxu0 %v1620
        %v2139 = vpop.f32.mrf.mxu0
        %v2140 = vadd.f32 0.0, %v2139
        %v2141 = vpop.f32.mrf.mxu0
        %v2142 = vadd.f32 0.0, %v2141
        %2143 = vmatmul.bf16.gmra.mxu0 %v1621
        %v2144 = vpop.f32.mrf.mxu0
        %v2145 = vadd.f32 0.0, %v2144
        %v2146 = vpop.f32.mrf.mxu0
        %v2147 = vadd.f32 0.0, %v2146
        %2148 = vmatmul.bf16.gmra.mxu0 %v1828
        %v2149 = vpop.f32.mrf.mxu0
        %v2150 = vadd.f32 0.0, %v2149
        %v2151 = vpop.f32.mrf.mxu0
        %v2152 = vadd.f32 0.0, %v2151
        %2153 = vmatmul.bf16.gmra.mxu0 %v2020
        %v2154 = vpop.f32.mrf.mxu0
        %v2155 = vadd.f32 0.0, %v2154
        %v2156 = vpop.f32.mrf.mxu0
        %v2157 = vadd.f32 0.0, %v2156
        %2158 = vdwg.mxu0
        %v2159 = vadd.f32 %v1967, %v2080
        %v2160 = vadd.f32 %v1968, %v2082
        %v2161 = vadd.f32 %v1969, %v2085
        %v2162 = vadd.f32 %v1970, %v2087
        %v2163 = vadd.f32 %v1971, %v2090
        %v2164 = vadd.f32 %v1972, %v2092
        %v2165 = vadd.f32 %v1973, %v2095
        %v2166 = vadd.f32 %v1974, %v2097
        %v2167 = vadd.f32 %v1975, %v2100
        %v2168 = vadd.f32 %v1976, %v2102
        %v2169 = vadd.f32 %v1977, %v2105
        %v2170 = vadd.f32 %v1978, %v2107
        %v2171 = vadd.f32 %v1979, %v2110
        %v2172 = vadd.f32 %v1980, %v2112
        %v2173 = vadd.f32 %v1981, %v2115
        %v2174 = vadd.f32 %v1982, %v2117
        %v2175 = vadd.f32 %v1983, %v2120
        %v2176 = vadd.f32 %v1984, %v2122
        %v2177 = vadd.f32 %v1985, %v2125
        %v2178 = vadd.f32 %v1986, %v2127
        %v2179 = vadd.f32 %v1987, %v2130
        %v2180 = vadd.f32 %v1988, %v2132
        %v2181 = vadd.f32 %v1989, %v2135
        %v2182 = vadd.f32 %v1990, %v2137
        %v2183 = vadd.f32 %v1991, %v2140
        %v2184 = vadd.f32 %v1992, %v2142
        %v2185 = vadd.f32 %v1993, %v2145
        %v2186 = vadd.f32 %v1994, %v2147
        %v2187 = vadd.f32 %v1995, %v2150
        %v2188 = vadd.f32 %v1996, %v2152
        %v2189 = vadd.f32 %v1997, %v2155
        %v2190 = vadd.f32 %v1998, %v2157
        %v2191 = vld [vmem:[#allocation2 + $0x4] sm:$0xf]
        %v2192 = vld [vmem:[#allocation2 + $0x8] sm:$0xf]
        %v2193 = vld [vmem:[#allocation2 + $0xc] sm:$0x1]
        %v2194 = vld [vmem:[#allocation2 + $0x14] sm:$0xf]
        %v2195 = vld [vmem:[#allocation2 + $0x18] sm:$0xf]
        %v2196 = vld [vmem:[#allocation2 + $0x1c] sm:$0x1]
        %v2197 = vld [vmem:[#allocation2 + $0x24] sm:$0xf]
        %v2198 = vld [vmem:[#allocation2 + $0x28] sm:$0xf]
        %v2199 = vld [vmem:[#allocation2 + $0x2c] sm:$0x1]
        %v2200 = vld [vmem:[#allocation2 + $0x34] sm:$0xf]
        %v2201 = vld [vmem:[#allocation2 + $0x38] sm:$0xf]
        %v2202 = vld [vmem:[#allocation2 + $0x3c] sm:$0x1]
        %v2203 = vld [vmem:[#allocation2 + $0x44] sm:$0xf]
        %v2204 = vld [vmem:[#allocation2 + $0x48] sm:$0xf]
        %v2205 = vld [vmem:[#allocation2 + $0x4c] sm:$0x1]
        %v2206 = vld [vmem:[#allocation2 + $0x54] sm:$0xf]
        %v2207 = vld [vmem:[#allocation2 + $0x58] sm:$0xf]
        %v2208 = vld [vmem:[#allocation2 + $0x5c] sm:$0x1]
        %v2209 = vld [vmem:[#allocation2 + $0x64] sm:$0xf]
        %v2210 = vld [vmem:[#allocation2 + $0x68] sm:$0xf]
        %v2211 = vld [vmem:[#allocation2 + $0x6c] sm:$0x1]
        %v2212 = vld [vmem:[#allocation2 + $0x74] sm:$0xf]
        %v2213 = vld [vmem:[#allocation2 + $0x78] sm:$0xf]
        %v2214 = vld [vmem:[#allocation2 + $0x7c] sm:$0x1]
        %v2215 = vld [vmem:[#allocation2 + $0x84] sm:$0xf]
        %v2216 = vld [vmem:[#allocation2 + $0x88] sm:$0xf]
        %v2217 = vld [vmem:[#allocation2 + $0x8c] sm:$0x1]
        %v2218 = vld [vmem:[#allocation2 + $0x94] sm:$0xf]
        %v2219 = vld [vmem:[#allocation2 + $0x98] sm:$0xf]
        %v2220 = vld [vmem:[#allocation2 + $0x9c] sm:$0x1]
        %v2221 = vld [vmem:[#allocation2 + $0xa4] sm:$0xf]
        %v2222 = vld [vmem:[#allocation2 + $0xa8] sm:$0xf]
        %v2223 = vld [vmem:[#allocation2 + $0xac] sm:$0x1]
        %v2224 = vld [vmem:[#allocation2 + $0xb4] sm:$0xf]
        %v2225 = vld [vmem:[#allocation2 + $0xb8] sm:$0xf]
        %v2226 = vld [vmem:[#allocation2 + $0xbc] sm:$0x1]
        %v2227 = vld [vmem:[#allocation2 + $0xc4] sm:$0xf]
        %v2228 = vld [vmem:[#allocation2 + $0xc8] sm:$0xf]
        %v2229 = vld [vmem:[#allocation2 + $0xcc] sm:$0x1]
        %v2230 = vld [vmem:[#allocation2 + $0xd4] sm:$0xf]
        %v2231 = vld [vmem:[#allocation2 + $0xd8] sm:$0xf]
        %v2232 = vld [vmem:[#allocation2 + $0xdc] sm:$0x1]
        %v2233 = vld [vmem:[#allocation2 + $0xe4] sm:$0xf]
        %v2234 = vld [vmem:[#allocation2 + $0xe8] sm:$0xf]
        %v2235 = vld [vmem:[#allocation2 + $0xec] sm:$0x1]
        %v2236 = vld [vmem:[#allocation2 + $0xf4] sm:$0xf]
        %v2237 = vld [vmem:[#allocation2 + $0xf8] sm:$0xf]
        %v2238 = vld [vmem:[#allocation2 + $0xfc] sm:$0x1]
        %v2239 = vld [vmem:[#allocation2 + $0x104] sm:$0xf]
        %v2240 = vld [vmem:[#allocation2 + $0x108] sm:$0xf]
        %v2241 = vld [vmem:[#allocation2 + $0x10c] sm:$0x1]
        %v2242 = vld [vmem:[#allocation2 + $0x114] sm:$0xf]
        %v2243 = vld [vmem:[#allocation2 + $0x118] sm:$0xf]
        %v2244 = vld [vmem:[#allocation2 + $0x11c] sm:$0x1]
        %vm2245 = vsmask.f32 3328
        %vm2246 = vsmask.f32 7440
        %vm2247 = vmor %vm2245, %vm2246
        %v2249 = vshrl.u32 %v2191, 16
        %v2251 = vrot.slane %v2249, 4
        %v2252 = vshll.u32 %v2191, 16
        %v2254 = vrot.slane %v2252, 5
        %v2255 = vor.u32 %v2251, %v2254
        %v2256 = vrot.slane %v2255, 4
        %v2258 = vshll.u32 %v2192, 16
        %v2260 = vrot.slane %v2258, 5
        %v2261 = vsel %vm2247, %v2256, %v2260
        %v2262 = vshrl.u32 %v2192, 16
        %v2264 = vrot.slane %v2262, 4
        %v2265 = vor.u32 %v2264, %v2260
        %v2266 = vrot.slane %v2265, 4
        %v2268 = vshll.u32 %v2193, 16
        %v2270 = vrot.slane %v2268, 5
        %v2271 = vsel %vm2247, %v2266, %v2270
        %v2273 = vshrl.u32 %v2194, 16
        %v2275 = vrot.slane %v2273, 4
        %v2276 = vshll.u32 %v2194, 16
        %v2278 = vrot.slane %v2276, 5
        %v2279 = vor.u32 %v2275, %v2278
        %v2280 = vrot.slane %v2279, 4
        %v2282 = vshll.u32 %v2195, 16
        %v2284 = vrot.slane %v2282, 5
        %v2285 = vsel %vm2247, %v2280, %v2284
        %v2286 = vshrl.u32 %v2195, 16
        %v2288 = vrot.slane %v2286, 4
        %v2289 = vor.u32 %v2288, %v2284
        %v2290 = vrot.slane %v2289, 4
        %v2292 = vshll.u32 %v2196, 16
        %v2294 = vrot.slane %v2292, 5
        %v2295 = vsel %vm2247, %v2290, %v2294
        %v2297 = vshrl.u32 %v2197, 16
        %v2299 = vrot.slane %v2297, 4
        %v2300 = vshll.u32 %v2197, 16
        %v2302 = vrot.slane %v2300, 5
        %v2303 = vor.u32 %v2299, %v2302
        %v2304 = vrot.slane %v2303, 4
        %v2306 = vshll.u32 %v2198, 16
        %v2308 = vrot.slane %v2306, 5
        %v2309 = vsel %vm2247, %v2304, %v2308
        %v2310 = vshrl.u32 %v2198, 16
        %v2312 = vrot.slane %v2310, 4
        %v2313 = vor.u32 %v2312, %v2308
        %v2314 = vrot.slane %v2313, 4
        %v2316 = vshll.u32 %v2199, 16
        %v2318 = vrot.slane %v2316, 5
        %v2319 = vsel %vm2247, %v2314, %v2318
        %v2321 = vshrl.u32 %v2200, 16
        %v2323 = vrot.slane %v2321, 4
        %v2324 = vshll.u32 %v2200, 16
        %v2326 = vrot.slane %v2324, 5
        %v2327 = vor.u32 %v2323, %v2326
        %v2328 = vrot.slane %v2327, 4
        %v2330 = vshll.u32 %v2201, 16
        %v2332 = vrot.slane %v2330, 5
        %v2333 = vsel %vm2247, %v2328, %v2332
        %v2334 = vshrl.u32 %v2201, 16
        %v2336 = vrot.slane %v2334, 4
        %v2337 = vor.u32 %v2336, %v2332
        %v2338 = vrot.slane %v2337, 4
        %v2340 = vshll.u32 %v2202, 16
        %v2342 = vrot.slane %v2340, 5
        %v2343 = vsel %vm2247, %v2338, %v2342
        %v2345 = vshrl.u32 %v2203, 16
        %v2347 = vrot.slane %v2345, 4
        %v2348 = vshll.u32 %v2203, 16
        %v2350 = vrot.slane %v2348, 5
        %v2351 = vor.u32 %v2347, %v2350
        %v2352 = vrot.slane %v2351, 4
        %v2354 = vshll.u32 %v2204, 16
        %v2356 = vrot.slane %v2354, 5
        %v2357 = vsel %vm2247, %v2352, %v2356
        %v2358 = vshrl.u32 %v2204, 16
        %v2360 = vrot.slane %v2358, 4
        %v2361 = vor.u32 %v2360, %v2356
        %v2362 = vrot.slane %v2361, 4
        %v2364 = vshll.u32 %v2205, 16
        %v2366 = vrot.slane %v2364, 5
        %v2367 = vsel %vm2247, %v2362, %v2366
        %v2369 = vshrl.u32 %v2206, 16
        %v2371 = vrot.slane %v2369, 4
        %v2372 = vshll.u32 %v2206, 16
        %v2374 = vrot.slane %v2372, 5
        %v2375 = vor.u32 %v2371, %v2374
        %v2376 = vrot.slane %v2375, 4
        %v2378 = vshll.u32 %v2207, 16
        %v2380 = vrot.slane %v2378, 5
        %v2381 = vsel %vm2247, %v2376, %v2380
        %v2382 = vshrl.u32 %v2207, 16
        %v2384 = vrot.slane %v2382, 4
        %v2385 = vor.u32 %v2384, %v2380
        %v2386 = vrot.slane %v2385, 4
        %v2388 = vshll.u32 %v2208, 16
        %v2390 = vrot.slane %v2388, 5
        %v2391 = vsel %vm2247, %v2386, %v2390
        %v2393 = vshrl.u32 %v2209, 16
        %v2395 = vrot.slane %v2393, 4
        %v2396 = vshll.u32 %v2209, 16
        %v2398 = vrot.slane %v2396, 5
        %v2399 = vor.u32 %v2395, %v2398
        %v2400 = vrot.slane %v2399, 4
        %v2402 = vshll.u32 %v2210, 16
        %v2404 = vrot.slane %v2402, 5
        %v2405 = vsel %vm2247, %v2400, %v2404
        %v2406 = vshrl.u32 %v2210, 16
        %v2408 = vrot.slane %v2406, 4
        %v2409 = vor.u32 %v2408, %v2404
        %v2410 = vrot.slane %v2409, 4
        %v2412 = vshll.u32 %v2211, 16
        %v2414 = vrot.slane %v2412, 5
        %v2415 = vsel %vm2247, %v2410, %v2414
        %v2417 = vshrl.u32 %v2212, 16
        %v2419 = vrot.slane %v2417, 4
        %v2420 = vshll.u32 %v2212, 16
        %v2422 = vrot.slane %v2420, 5
        %v2423 = vor.u32 %v2419, %v2422
        %v2424 = vrot.slane %v2423, 4
        %v2426 = vshll.u32 %v2213, 16
        %v2428 = vrot.slane %v2426, 5
        %v2429 = vsel %vm2247, %v2424, %v2428
        %v2430 = vshrl.u32 %v2213, 16
        %v2432 = vrot.slane %v2430, 4
        %v2433 = vor.u32 %v2432, %v2428
        %v2434 = vrot.slane %v2433, 4
        %v2436 = vshll.u32 %v2214, 16
        %v2438 = vrot.slane %v2436, 5
        %v2439 = vsel %vm2247, %v2434, %v2438
        %v2441 = vshrl.u32 %v2215, 16
        %v2443 = vrot.slane %v2441, 4
        %v2444 = vshll.u32 %v2215, 16
        %v2446 = vrot.slane %v2444, 5
        %v2447 = vor.u32 %v2443, %v2446
        %v2448 = vrot.slane %v2447, 4
        %v2450 = vshll.u32 %v2216, 16
        %v2452 = vrot.slane %v2450, 5
        %v2453 = vsel %vm2247, %v2448, %v2452
        %v2454 = vshrl.u32 %v2216, 16
        %v2456 = vrot.slane %v2454, 4
        %v2457 = vor.u32 %v2456, %v2452
        %v2458 = vrot.slane %v2457, 4
        %v2460 = vshll.u32 %v2217, 16
        %v2462 = vrot.slane %v2460, 5
        %v2463 = vsel %vm2247, %v2458, %v2462
        %v2465 = vshrl.u32 %v2218, 16
        %v2467 = vrot.slane %v2465, 4
        %v2468 = vshll.u32 %v2218, 16
        %v2470 = vrot.slane %v2468, 5
        %v2471 = vor.u32 %v2467, %v2470
        %v2472 = vrot.slane %v2471, 4
        %v2474 = vshll.u32 %v2219, 16
        %v2476 = vrot.slane %v2474, 5
        %v2477 = vsel %vm2247, %v2472, %v2476
        %v2478 = vshrl.u32 %v2219, 16
        %v2480 = vrot.slane %v2478, 4
        %v2481 = vor.u32 %v2480, %v2476
        %v2482 = vrot.slane %v2481, 4
        %v2484 = vshll.u32 %v2220, 16
        %v2486 = vrot.slane %v2484, 5
        %v2487 = vsel %vm2247, %v2482, %v2486
        %v2489 = vshrl.u32 %v2221, 16
        %v2491 = vrot.slane %v2489, 4
        %v2492 = vshll.u32 %v2221, 16
        %v2494 = vrot.slane %v2492, 5
        %v2495 = vor.u32 %v2491, %v2494
        %v2496 = vrot.slane %v2495, 4
        %v2498 = vshll.u32 %v2222, 16
        %v2500 = vrot.slane %v2498, 5
        %v2501 = vsel %vm2247, %v2496, %v2500
        %v2502 = vshrl.u32 %v2222, 16
        %v2504 = vrot.slane %v2502, 4
        %v2505 = vor.u32 %v2504, %v2500
        %v2506 = vrot.slane %v2505, 4
        %v2508 = vshll.u32 %v2223, 16
        %v2510 = vrot.slane %v2508, 5
        %v2511 = vsel %vm2247, %v2506, %v2510
        %v2513 = vshrl.u32 %v2224, 16
        %v2515 = vrot.slane %v2513, 4
        %v2516 = vshll.u32 %v2224, 16
        %v2518 = vrot.slane %v2516, 5
        %v2519 = vor.u32 %v2515, %v2518
        %v2520 = vrot.slane %v2519, 4
        %v2522 = vshll.u32 %v2225, 16
        %v2524 = vrot.slane %v2522, 5
        %v2525 = vsel %vm2247, %v2520, %v2524
        %v2526 = vshrl.u32 %v2225, 16
        %v2528 = vrot.slane %v2526, 4
        %v2529 = vor.u32 %v2528, %v2524
        %v2530 = vrot.slane %v2529, 4
        %v2532 = vshll.u32 %v2226, 16
        %v2534 = vrot.slane %v2532, 5
        %v2535 = vsel %vm2247, %v2530, %v2534
        %v2537 = vshrl.u32 %v2227, 16
        %v2539 = vrot.slane %v2537, 4
        %v2540 = vshll.u32 %v2227, 16
        %v2542 = vrot.slane %v2540, 5
        %v2543 = vor.u32 %v2539, %v2542
        %v2544 = vrot.slane %v2543, 4
        %v2546 = vshll.u32 %v2228, 16
        %v2548 = vrot.slane %v2546, 5
        %v2549 = vsel %vm2247, %v2544, %v2548
        %v2550 = vshrl.u32 %v2228, 16
        %v2552 = vrot.slane %v2550, 4
        %v2553 = vor.u32 %v2552, %v2548
        %v2554 = vrot.slane %v2553, 4
        %v2556 = vshll.u32 %v2229, 16
        %v2558 = vrot.slane %v2556, 5
        %v2559 = vsel %vm2247, %v2554, %v2558
        %v2561 = vshrl.u32 %v2230, 16
        %v2563 = vrot.slane %v2561, 4
        %v2564 = vshll.u32 %v2230, 16
        %v2566 = vrot.slane %v2564, 5
        %v2567 = vor.u32 %v2563, %v2566
        %v2568 = vrot.slane %v2567, 4
        %v2570 = vshll.u32 %v2231, 16
        %v2572 = vrot.slane %v2570, 5
        %v2573 = vsel %vm2247, %v2568, %v2572
        %v2574 = vshrl.u32 %v2231, 16
        %v2576 = vrot.slane %v2574, 4
        %v2577 = vor.u32 %v2576, %v2572
        %v2578 = vrot.slane %v2577, 4
        %v2580 = vshll.u32 %v2232, 16
        %v2582 = vrot.slane %v2580, 5
        %v2583 = vsel %vm2247, %v2578, %v2582
        %v2585 = vshrl.u32 %v2233, 16
        %v2587 = vrot.slane %v2585, 4
        %v2588 = vshll.u32 %v2233, 16
        %v2590 = vrot.slane %v2588, 5
        %v2591 = vor.u32 %v2587, %v2590
        %v2592 = vrot.slane %v2591, 4
        %v2594 = vshll.u32 %v2234, 16
        %v2596 = vrot.slane %v2594, 5
        %v2597 = vsel %vm2247, %v2592, %v2596
        %v2598 = vshrl.u32 %v2234, 16
        %v2600 = vrot.slane %v2598, 4
        %v2601 = vor.u32 %v2600, %v2596
        %v2602 = vrot.slane %v2601, 4
        %v2604 = vshll.u32 %v2235, 16
        %v2606 = vrot.slane %v2604, 5
        %v2607 = vsel %vm2247, %v2602, %v2606
        %v2609 = vshrl.u32 %v2236, 16
        %v2611 = vrot.slane %v2609, 4
        %v2612 = vshll.u32 %v2236, 16
        %v2614 = vrot.slane %v2612, 5
        %v2615 = vor.u32 %v2611, %v2614
        %v2616 = vrot.slane %v2615, 4
        %v2618 = vshll.u32 %v2237, 16
        %v2620 = vrot.slane %v2618, 5
        %v2621 = vsel %vm2247, %v2616, %v2620
        %v2622 = vshrl.u32 %v2237, 16
        %v2624 = vrot.slane %v2622, 4
        %v2625 = vor.u32 %v2624, %v2620
        %v2626 = vrot.slane %v2625, 4
        %v2628 = vshll.u32 %v2238, 16
        %v2630 = vrot.slane %v2628, 5
        %v2631 = vsel %vm2247, %v2626, %v2630
        %v2633 = vshrl.u32 %v2239, 16
        %v2635 = vrot.slane %v2633, 4
        %v2636 = vshll.u32 %v2239, 16
        %v2638 = vrot.slane %v2636, 5
        %v2639 = vor.u32 %v2635, %v2638
        %v2640 = vrot.slane %v2639, 4
        %v2642 = vshll.u32 %v2240, 16
        %v2644 = vrot.slane %v2642, 5
        %v2645 = vsel %vm2247, %v2640, %v2644
        %v2646 = vshrl.u32 %v2240, 16
        %v2648 = vrot.slane %v2646, 4
        %v2649 = vor.u32 %v2648, %v2644
        %v2650 = vrot.slane %v2649, 4
        %v2652 = vshll.u32 %v2241, 16
        %v2654 = vrot.slane %v2652, 5
        %v2655 = vsel %vm2247, %v2650, %v2654
        %v2657 = vshrl.u32 %v2242, 16
        %v2659 = vrot.slane %v2657, 4
        %v2660 = vshll.u32 %v2242, 16
        %v2662 = vrot.slane %v2660, 5
        %v2663 = vor.u32 %v2659, %v2662
        %v2664 = vrot.slane %v2663, 4
        %v2666 = vshll.u32 %v2243, 16
        %v2668 = vrot.slane %v2666, 5
        %v2669 = vsel %vm2247, %v2664, %v2668
        %v2670 = vshrl.u32 %v2243, 16
        %v2672 = vrot.slane %v2670, 4
        %v2673 = vor.u32 %v2672, %v2668
        %v2674 = vrot.slane %v2673, 4
        %v2676 = vshll.u32 %v2244, 16
        %v2678 = vrot.slane %v2676, 5
        %v2679 = vsel %vm2247, %v2674, %v2678
        %s2680 = scalar_lea.vmem %s1, 128
        %v2681 = vld [vmem:[%s2680] sm:$0xf]
        %v2682 = vld [vmem:[%s2680 + $0x4] sm:$0xf]
        %v2683 = vld [vmem:[%s2680 + $0x8] sm:$0xf]
        %v2684 = vld [vmem:[%s2680 + $0xc] sm:$0xf]
        %v2685 = vld [vmem:[%s2680 + $0x10] sm:$0xf]
        %v2686 = vld [vmem:[%s2680 + $0x14] sm:$0xf]
        %v2687 = vld [vmem:[%s2680 + $0x18] sm:$0xf]
        %v2688 = vld [vmem:[%s2680 + $0x1c] sm:$0xf]
        %v2689 = vld [vmem:[%s2680 + $0x20] sm:$0xf]
        %v2690 = vld [vmem:[%s2680 + $0x24] sm:$0xf]
        %v2691 = vld [vmem:[%s2680 + $0x28] sm:$0xf]
        %v2692 = vld [vmem:[%s2680 + $0x2c] sm:$0xf]
        %v2693 = vld [vmem:[%s2680 + $0x30] sm:$0xf]
        %v2694 = vld [vmem:[%s2680 + $0x34] sm:$0xf]
        %v2695 = vld [vmem:[%s2680 + $0x38] sm:$0xf]
        %v2696 = vld [vmem:[%s2680 + $0x3c] sm:$0xf]
        %v2697 = vunpack.c.l.b16 %v2261
        %v2698 = vunpack.c.l.b16 %v2271
        %v2699 = vunpack.c.l.b16 %v2285
        %v2700 = vunpack.c.l.b16 %v2295
        %v2701 = vunpack.c.l.b16 %v2309
        %v2702 = vunpack.c.l.b16 %v2319
        %v2703 = vunpack.c.l.b16 %v2333
        %v2704 = vunpack.c.l.b16 %v2343
        %v2705 = vunpack.c.l.b16 %v2357
        %v2706 = vunpack.c.l.b16 %v2367
        %v2707 = vunpack.c.l.b16 %v2381
        %v2708 = vunpack.c.l.b16 %v2391
        %v2709 = vunpack.c.l.b16 %v2405
        %v2710 = vunpack.c.l.b16 %v2415
        %v2711 = vunpack.c.l.b16 %v2429
        %v2712 = vunpack.c.l.b16 %v2439
        %v2713 = vunpack.c.l.b16 %v2453
        %v2714 = vunpack.c.l.b16 %v2463
        %v2715 = vunpack.c.l.b16 %v2477
        %v2716 = vunpack.c.l.b16 %v2487
        %v2717 = vunpack.c.l.b16 %v2501
        %v2718 = vunpack.c.l.b16 %v2511
        %v2719 = vunpack.c.l.b16 %v2525
        %v2720 = vunpack.c.l.b16 %v2535
        %v2721 = vunpack.c.l.b16 %v2549
        %v2722 = vunpack.c.l.b16 %v2559
        %v2723 = vunpack.c.l.b16 %v2573
        %v2724 = vunpack.c.l.b16 %v2583
        %v2725 = vunpack.c.l.b16 %v2597
        %v2726 = vunpack.c.l.b16 %v2607
        %v2727 = vunpack.c.l.b16 %v2621
        %v2728 = vunpack.c.l.b16 %v2631
        %v2729 = vpack.c.b16 %v2698, %v2697
        %v2730 = vpack.c.b16 %v2700, %v2699
        %v2731 = vpack.c.b16 %v2702, %v2701
        %v2732 = vpack.c.b16 %v2704, %v2703
        %v2733 = vpack.c.b16 %v2706, %v2705
        %v2734 = vpack.c.b16 %v2708, %v2707
        %v2735 = vpack.c.b16 %v2710, %v2709
        %v2736 = vpack.c.b16 %v2712, %v2711
        %v2737 = vpack.c.b16 %v2714, %v2713
        %v2738 = vpack.c.b16 %v2716, %v2715
        %v2739 = vpack.c.b16 %v2718, %v2717
        %v2740 = vpack.c.b16 %v2720, %v2719
        %v2741 = vpack.c.b16 %v2722, %v2721
        %v2742 = vpack.c.b16 %v2724, %v2723
        %v2743 = vpack.c.b16 %v2726, %v2725
        %v2744 = vpack.c.b16 %v2728, %v2727
        %v2777 = vunpack.c.l.b16 %v2681
        %v2778 = vunpack.c.l.b16 %v2682
        %v2779 = vunpack.c.l.b16 %v2683
        %v2780 = vunpack.c.l.b16 %v2684
        %v2781 = vunpack.c.l.b16 %v2685
        %v2782 = vunpack.c.l.b16 %v2686
        %v2783 = vunpack.c.l.b16 %v2687
        %v2784 = vunpack.c.l.b16 %v2688
        %v2785 = vunpack.c.l.b16 %v2689
        %v2786 = vunpack.c.l.b16 %v2690
        %v2787 = vunpack.c.l.b16 %v2691
        %v2788 = vunpack.c.l.b16 %v2692
        %v2789 = vunpack.c.l.b16 %v2693
        %v2790 = vunpack.c.l.b16 %v2694
        %v2791 = vunpack.c.l.b16 %v2695
        %v2792 = vunpack.c.l.b16 %v2696
        %v2793 = vpack.c.b16 %v2778, %v2777
        %v2794 = vpack.c.b16 %v2780, %v2779
        %v2795 = vpack.c.b16 %v2782, %v2781
        %v2796 = vpack.c.b16 %v2784, %v2783
        %v2797 = vpack.c.b16 %v2786, %v2785
        %v2798 = vpack.c.b16 %v2788, %v2787
        %v2799 = vpack.c.b16 %v2790, %v2789
        %v2800 = vpack.c.b16 %v2792, %v2791
        %2809 = vmatpush.bf16.msra.mxu0 %v2800
        %2810 = vmatpush.bf16.msra.mxu0 %v2799
        %2811 = vmatpush.bf16.msra.mxu0 %v2798
        %2812 = vmatpush.bf16.msra.mxu0 %v2797
        %2813 = vmatpush.bf16.msra.mxu0 %v2796
        %2814 = vmatpush.bf16.msra.mxu0 %v2795
        %2815 = vmatpush.bf16.msra.mxu0 %v2794
        %2816 = vmatpush.bf16.msra.mxu0 %v2793
        %2817 = vmatmul.bf16.gmra.mxu0 %v2729
        %v2818 = vpop.f32.mrf.mxu0
        %v2819 = vadd.f32 0.0, %v2818
        %v2820 = vpop.f32.mrf.mxu0
        %v2821 = vadd.f32 0.0, %v2820
        %2822 = vmatmul.bf16.gmra.mxu0 %v2730
        %v2823 = vpop.f32.mrf.mxu0
        %v2824 = vadd.f32 0.0, %v2823
        %v2825 = vpop.f32.mrf.mxu0
        %v2826 = vadd.f32 0.0, %v2825
        %2827 = vmatmul.bf16.gmra.mxu0 %v2731
        %v2828 = vpop.f32.mrf.mxu0
        %v2829 = vadd.f32 0.0, %v2828
        %v2830 = vpop.f32.mrf.mxu0
        %v2831 = vadd.f32 0.0, %v2830
        %2832 = vmatmul.bf16.gmra.mxu0 %v2732
        %v2833 = vpop.f32.mrf.mxu0
        %v2834 = vadd.f32 0.0, %v2833
        %v2835 = vpop.f32.mrf.mxu0
        %v2836 = vadd.f32 0.0, %v2835
        %2837 = vmatmul.bf16.gmra.mxu0 %v2733
        %v2838 = vpop.f32.mrf.mxu0
        %v2839 = vadd.f32 0.0, %v2838
        %v2840 = vpop.f32.mrf.mxu0
        %v2841 = vadd.f32 0.0, %v2840
        %2842 = vmatmul.bf16.gmra.mxu0 %v2734
        %v2843 = vpop.f32.mrf.mxu0
        %v2844 = vadd.f32 0.0, %v2843
        %v2845 = vpop.f32.mrf.mxu0
        %v2846 = vadd.f32 0.0, %v2845
        %2847 = vmatmul.bf16.gmra.mxu0 %v2735
        %v2848 = vpop.f32.mrf.mxu0
        %v2849 = vadd.f32 0.0, %v2848
        %v2850 = vpop.f32.mrf.mxu0
        %v2851 = vadd.f32 0.0, %v2850
        %2852 = vmatmul.bf16.gmra.mxu0 %v2736
        %v2853 = vpop.f32.mrf.mxu0
        %v2854 = vadd.f32 0.0, %v2853
        %v2855 = vpop.f32.mrf.mxu0
        %v2856 = vadd.f32 0.0, %v2855
        %2857 = vmatmul.bf16.gmra.mxu0 %v2737
        %v2858 = vpop.f32.mrf.mxu0
        %v2859 = vadd.f32 0.0, %v2858
        %v2860 = vpop.f32.mrf.mxu0
        %v2861 = vadd.f32 0.0, %v2860
        %2862 = vmatmul.bf16.gmra.mxu0 %v2738
        %v2863 = vpop.f32.mrf.mxu0
        %v2864 = vadd.f32 0.0, %v2863
        %v2865 = vpop.f32.mrf.mxu0
        %v2866 = vadd.f32 0.0, %v2865
        %2867 = vmatmul.bf16.gmra.mxu0 %v2739
        %v2868 = vpop.f32.mrf.mxu0
        %v2869 = vadd.f32 0.0, %v2868
        %v2870 = vpop.f32.mrf.mxu0
        %v2871 = vadd.f32 0.0, %v2870
        %2872 = vmatmul.bf16.gmra.mxu0 %v2740
        %v2873 = vpop.f32.mrf.mxu0
        %v2874 = vadd.f32 0.0, %v2873
        %v2875 = vpop.f32.mrf.mxu0
        %v2876 = vadd.f32 0.0, %v2875
        %2877 = vmatmul.bf16.gmra.mxu0 %v2741
        %v2878 = vpop.f32.mrf.mxu0
        %v2879 = vadd.f32 0.0, %v2878
        %v2880 = vpop.f32.mrf.mxu0
        %v2881 = vadd.f32 0.0, %v2880
        %2882 = vmatmul.bf16.gmra.mxu0 %v2742
        %v2883 = vpop.f32.mrf.mxu0
        %v2884 = vadd.f32 0.0, %v2883
        %v2885 = vpop.f32.mrf.mxu0
        %v2886 = vadd.f32 0.0, %v2885
        %2887 = vmatmul.bf16.gmra.mxu0 %v2743
        %v2888 = vpop.f32.mrf.mxu0
        %v2889 = vadd.f32 0.0, %v2888
        %v2890 = vpop.f32.mrf.mxu0
        %v2891 = vadd.f32 0.0, %v2890
        %2892 = vmatmul.bf16.gmra.mxu0 %v2744
        %v2893 = vpop.f32.mrf.mxu0
        %v2894 = vadd.f32 0.0, %v2893
        %v2895 = vpop.f32.mrf.mxu0
        %v2896 = vadd.f32 0.0, %v2895
        %2897 = vdwg.mxu0
        %v2898 = vadd.f32 %v2159, %v2819
        %v2899 = vadd.f32 %v2160, %v2821
        %v2900 = vadd.f32 %v2161, %v2824
        %v2901 = vadd.f32 %v2162, %v2826
        %v2902 = vadd.f32 %v2163, %v2829
        %v2903 = vadd.f32 %v2164, %v2831
        %v2904 = vadd.f32 %v2165, %v2834
        %v2905 = vadd.f32 %v2166, %v2836
        %v2906 = vadd.f32 %v2167, %v2839
        %v2907 = vadd.f32 %v2168, %v2841
        %v2908 = vadd.f32 %v2169, %v2844
        %v2909 = vadd.f32 %v2170, %v2846
        %v2910 = vadd.f32 %v2171, %v2849
        %v2911 = vadd.f32 %v2172, %v2851
        %v2912 = vadd.f32 %v2173, %v2854
        %v2913 = vadd.f32 %v2174, %v2856
        %v2914 = vadd.f32 %v2175, %v2859
        %v2915 = vadd.f32 %v2176, %v2861
        %v2916 = vadd.f32 %v2177, %v2864
        %v2917 = vadd.f32 %v2178, %v2866
        %v2918 = vadd.f32 %v2179, %v2869
        %v2919 = vadd.f32 %v2180, %v2871
        %v2920 = vadd.f32 %v2181, %v2874
        %v2921 = vadd.f32 %v2182, %v2876
        %v2922 = vadd.f32 %v2183, %v2879
        %v2923 = vadd.f32 %v2184, %v2881
        %v2924 = vadd.f32 %v2185, %v2884
        %v2925 = vadd.f32 %v2186, %v2886
        %v2926 = vadd.f32 %v2187, %v2889
        %v2927 = vadd.f32 %v2188, %v2891
        %v2928 = vadd.f32 %v2189, %v2894
        %v2929 = vadd.f32 %v2190, %v2896
        %s2930 = scalar_lea.vmem %s1, 320
        %v2931 = vld [vmem:[%s2930] sm:$0xf]
        %v2932 = vld [vmem:[%s2930 + $0x4] sm:$0xf]
        %v2933 = vld [vmem:[%s2930 + $0x8] sm:$0xf]
        %v2934 = vld [vmem:[%s2930 + $0xc] sm:$0xf]
        %v2935 = vld [vmem:[%s2930 + $0x10] sm:$0xf]
        %v2936 = vld [vmem:[%s2930 + $0x14] sm:$0xf]
        %v2937 = vld [vmem:[%s2930 + $0x18] sm:$0xf]
        %v2938 = vld [vmem:[%s2930 + $0x1c] sm:$0xf]
        %v2939 = vld [vmem:[%s2930 + $0x20] sm:$0xf]
        %v2940 = vld [vmem:[%s2930 + $0x24] sm:$0xf]
        %v2941 = vld [vmem:[%s2930 + $0x28] sm:$0xf]
        %v2942 = vld [vmem:[%s2930 + $0x2c] sm:$0xf]
        %v2943 = vld [vmem:[%s2930 + $0x30] sm:$0xf]
        %v2944 = vld [vmem:[%s2930 + $0x34] sm:$0xf]
        %v2945 = vld [vmem:[%s2930 + $0x38] sm:$0xf]
        %v2946 = vld [vmem:[%s2930 + $0x3c] sm:$0xf]
        %v2947 = vunpack.c.l.b16 %v2645
        %v2948 = vunpack.c.l.b16 %v2655
        %v2949 = vpack.c.b16 %v2948, %v2947
        %v2967 = vunpack.c.l.b16 %v2931
        %v2968 = vunpack.c.l.b16 %v2932
        %v2969 = vunpack.c.l.b16 %v2933
        %v2970 = vunpack.c.l.b16 %v2934
        %v2971 = vunpack.c.l.b16 %v2935
        %v2972 = vunpack.c.l.b16 %v2936
        %v2973 = vunpack.c.l.b16 %v2937
        %v2974 = vunpack.c.l.b16 %v2938
        %v2975 = vunpack.c.l.b16 %v2939
        %v2976 = vunpack.c.l.b16 %v2940
        %v2977 = vunpack.c.l.b16 %v2941
        %v2978 = vunpack.c.l.b16 %v2942
        %v2979 = vunpack.c.l.b16 %v2943
        %v2980 = vunpack.c.l.b16 %v2944
        %v2981 = vunpack.c.l.b16 %v2945
        %v2982 = vunpack.c.l.b16 %v2946
        %v2983 = vpack.c.b16 %v2968, %v2967
        %v2984 = vpack.c.b16 %v2970, %v2969
        %v2985 = vpack.c.b16 %v2972, %v2971
        %v2986 = vpack.c.b16 %v2974, %v2973
        %v2987 = vpack.c.b16 %v2976, %v2975
        %v2988 = vpack.c.b16 %v2978, %v2977
        %v2989 = vpack.c.b16 %v2980, %v2979
        %v2990 = vpack.c.b16 %v2982, %v2981
        %2999 = vmatpush.bf16.msra.mxu0 %v2990
        %3000 = vmatpush.bf16.msra.mxu0 %v2989
        %3001 = vmatpush.bf16.msra.mxu0 %v2988
        %3002 = vmatpush.bf16.msra.mxu0 %v2987
        %3003 = vmatpush.bf16.msra.mxu0 %v2986
        %3004 = vmatpush.bf16.msra.mxu0 %v2985
        %3005 = vmatpush.bf16.msra.mxu0 %v2984
        %3006 = vmatpush.bf16.msra.mxu0 %v2983
        %3007 = vmatmul.bf16.gmra.mxu0 %v2730
        %v3008 = vpop.f32.mrf.mxu0
        %v3009 = vadd.f32 0.0, %v3008
        %v3010 = vpop.f32.mrf.mxu0
        %v3011 = vadd.f32 0.0, %v3010
        %3012 = vmatmul.bf16.gmra.mxu0 %v2731
        %v3013 = vpop.f32.mrf.mxu0
        %v3014 = vadd.f32 0.0, %v3013
        %v3015 = vpop.f32.mrf.mxu0
        %v3016 = vadd.f32 0.0, %v3015
        %3017 = vmatmul.bf16.gmra.mxu0 %v2732
        %v3018 = vpop.f32.mrf.mxu0
        %v3019 = vadd.f32 0.0, %v3018
        %v3020 = vpop.f32.mrf.mxu0
        %v3021 = vadd.f32 0.0, %v3020
        %3022 = vmatmul.bf16.gmra.mxu0 %v2733
        %v3023 = vpop.f32.mrf.mxu0
        %v3024 = vadd.f32 0.0, %v3023
        %v3025 = vpop.f32.mrf.mxu0
        %v3026 = vadd.f32 0.0, %v3025
        %3027 = vmatmul.bf16.gmra.mxu0 %v2734
        %v3028 = vpop.f32.mrf.mxu0
        %v3029 = vadd.f32 0.0, %v3028
        %v3030 = vpop.f32.mrf.mxu0
        %v3031 = vadd.f32 0.0, %v3030
        %3032 = vmatmul.bf16.gmra.mxu0 %v2735
        %v3033 = vpop.f32.mrf.mxu0
        %v3034 = vadd.f32 0.0, %v3033
        %v3035 = vpop.f32.mrf.mxu0
        %v3036 = vadd.f32 0.0, %v3035
        %3037 = vmatmul.bf16.gmra.mxu0 %v2736
        %v3038 = vpop.f32.mrf.mxu0
        %v3039 = vadd.f32 0.0, %v3038
        %v3040 = vpop.f32.mrf.mxu0
        %v3041 = vadd.f32 0.0, %v3040
        %3042 = vmatmul.bf16.gmra.mxu0 %v2737
        %v3043 = vpop.f32.mrf.mxu0
        %v3044 = vadd.f32 0.0, %v3043
        %v3045 = vpop.f32.mrf.mxu0
        %v3046 = vadd.f32 0.0, %v3045
        %3047 = vmatmul.bf16.gmra.mxu0 %v2738
        %v3048 = vpop.f32.mrf.mxu0
        %v3049 = vadd.f32 0.0, %v3048
        %v3050 = vpop.f32.mrf.mxu0
        %v3051 = vadd.f32 0.0, %v3050
        %3052 = vmatmul.bf16.gmra.mxu0 %v2739
        %v3053 = vpop.f32.mrf.mxu0
        %v3054 = vadd.f32 0.0, %v3053
        %v3055 = vpop.f32.mrf.mxu0
        %v3056 = vadd.f32 0.0, %v3055
        %3057 = vmatmul.bf16.gmra.mxu0 %v2740
        %v3058 = vpop.f32.mrf.mxu0
        %v3059 = vadd.f32 0.0, %v3058
        %v3060 = vpop.f32.mrf.mxu0
        %v3061 = vadd.f32 0.0, %v3060
        %3062 = vmatmul.bf16.gmra.mxu0 %v2741
        %v3063 = vpop.f32.mrf.mxu0
        %v3064 = vadd.f32 0.0, %v3063
        %v3065 = vpop.f32.mrf.mxu0
        %v3066 = vadd.f32 0.0, %v3065
        %3067 = vmatmul.bf16.gmra.mxu0 %v2742
        %v3068 = vpop.f32.mrf.mxu0
        %v3069 = vadd.f32 0.0, %v3068
        %v3070 = vpop.f32.mrf.mxu0
        %v3071 = vadd.f32 0.0, %v3070
        %3072 = vmatmul.bf16.gmra.mxu0 %v2743
        %v3073 = vpop.f32.mrf.mxu0
        %v3074 = vadd.f32 0.0, %v3073
        %v3075 = vpop.f32.mrf.mxu0
        %v3076 = vadd.f32 0.0, %v3075
        %3077 = vmatmul.bf16.gmra.mxu0 %v2744
        %v3078 = vpop.f32.mrf.mxu0
        %v3079 = vadd.f32 0.0, %v3078
        %v3080 = vpop.f32.mrf.mxu0
        %v3081 = vadd.f32 0.0, %v3080
        %3082 = vmatmul.bf16.gmra.mxu0 %v2949
        %v3083 = vpop.f32.mrf.mxu0
        %v3084 = vadd.f32 0.0, %v3083
        %v3085 = vpop.f32.mrf.mxu0
        %v3086 = vadd.f32 0.0, %v3085
        %3087 = vdwg.mxu0
        %v3088 = vadd.f32 %v2898, %v3009
        %v3089 = vadd.f32 %v2899, %v3011
        %v3090 = vadd.f32 %v2900, %v3014
        %v3091 = vadd.f32 %v2901, %v3016
        %v3092 = vadd.f32 %v2902, %v3019
        %v3093 = vadd.f32 %v2903, %v3021
        %v3094 = vadd.f32 %v2904, %v3024
        %v3095 = vadd.f32 %v2905, %v3026
        %v3096 = vadd.f32 %v2906, %v3029
        %v3097 = vadd.f32 %v2907, %v3031
        %v3098 = vadd.f32 %v2908, %v3034
        %v3099 = vadd.f32 %v2909, %v3036
        %v3100 = vadd.f32 %v2910, %v3039
        %v3101 = vadd.f32 %v2911, %v3041
        %v3102 = vadd.f32 %v2912, %v3044
        %v3103 = vadd.f32 %v2913, %v3046
        %v3104 = vadd.f32 %v2914, %v3049
        %v3105 = vadd.f32 %v2915, %v3051
        %v3106 = vadd.f32 %v2916, %v3054
        %v3107 = vadd.f32 %v2917, %v3056
        %v3108 = vadd.f32 %v2918, %v3059
        %v3109 = vadd.f32 %v2919, %v3061
        %v3110 = vadd.f32 %v2920, %v3064
        %v3111 = vadd.f32 %v2921, %v3066
        %v3112 = vadd.f32 %v2922, %v3069
        %v3113 = vadd.f32 %v2923, %v3071
        %v3114 = vadd.f32 %v2924, %v3074
        %v3115 = vadd.f32 %v2925, %v3076
        %v3116 = vadd.f32 %v2926, %v3079
        %v3117 = vadd.f32 %v2927, %v3081
        %v3118 = vadd.f32 %v2928, %v3084
        %v3119 = vadd.f32 %v2929, %v3086
        %s3120 = scalar_lea.vmem %s1, 512
        %v3121 = vld [vmem:[%s3120] sm:$0xf]
        %v3122 = vld [vmem:[%s3120 + $0x4] sm:$0xf]
        %v3123 = vld [vmem:[%s3120 + $0x8] sm:$0xf]
        %v3124 = vld [vmem:[%s3120 + $0xc] sm:$0xf]
        %v3125 = vld [vmem:[%s3120 + $0x10] sm:$0xf]
        %v3126 = vld [vmem:[%s3120 + $0x14] sm:$0xf]
        %v3127 = vld [vmem:[%s3120 + $0x18] sm:$0xf]
        %v3128 = vld [vmem:[%s3120 + $0x1c] sm:$0xf]
        %v3129 = vld [vmem:[%s3120 + $0x20] sm:$0xf]
        %v3130 = vld [vmem:[%s3120 + $0x24] sm:$0xf]
        %v3131 = vld [vmem:[%s3120 + $0x28] sm:$0xf]
        %v3132 = vld [vmem:[%s3120 + $0x2c] sm:$0xf]
        %v3133 = vld [vmem:[%s3120 + $0x30] sm:$0xf]
        %v3134 = vld [vmem:[%s3120 + $0x34] sm:$0xf]
        %v3135 = vld [vmem:[%s3120 + $0x38] sm:$0xf]
        %v3136 = vld [vmem:[%s3120 + $0x3c] sm:$0xf]
        %v3137 = vunpack.c.l.b16 %v2669
        %v3138 = vunpack.c.l.b16 %v2679
        %v3139 = vpack.c.b16 %v3138, %v3137
        %v3157 = vunpack.c.l.b16 %v3121
        %v3158 = vunpack.c.l.b16 %v3122
        %v3159 = vunpack.c.l.b16 %v3123
        %v3160 = vunpack.c.l.b16 %v3124
        %v3161 = vunpack.c.l.b16 %v3125
        %v3162 = vunpack.c.l.b16 %v3126
        %v3163 = vunpack.c.l.b16 %v3127
        %v3164 = vunpack.c.l.b16 %v3128
        %v3165 = vunpack.c.l.b16 %v3129
        %v3166 = vunpack.c.l.b16 %v3130
        %v3167 = vunpack.c.l.b16 %v3131
        %v3168 = vunpack.c.l.b16 %v3132
        %v3169 = vunpack.c.l.b16 %v3133
        %v3170 = vunpack.c.l.b16 %v3134
        %v3171 = vunpack.c.l.b16 %v3135
        %v3172 = vunpack.c.l.b16 %v3136
        %v3173 = vpack.c.b16 %v3158, %v3157
        %v3174 = vpack.c.b16 %v3160, %v3159
        %v3175 = vpack.c.b16 %v3162, %v3161
        %v3176 = vpack.c.b16 %v3164, %v3163
        %v3177 = vpack.c.b16 %v3166, %v3165
        %v3178 = vpack.c.b16 %v3168, %v3167
        %v3179 = vpack.c.b16 %v3170, %v3169
        %v3180 = vpack.c.b16 %v3172, %v3171
        %3189 = vmatpush.bf16.msra.mxu0 %v3180
        %3190 = vmatpush.bf16.msra.mxu0 %v3179
        %3191 = vmatpush.bf16.msra.mxu0 %v3178
        %3192 = vmatpush.bf16.msra.mxu0 %v3177
        %3193 = vmatpush.bf16.msra.mxu0 %v3176
        %3194 = vmatpush.bf16.msra.mxu0 %v3175
        %3195 = vmatpush.bf16.msra.mxu0 %v3174
        %3196 = vmatpush.bf16.msra.mxu0 %v3173
        %3197 = vmatmul.bf16.gmra.mxu0 %v2731
        %v3198 = vpop.f32.mrf.mxu0
        %v3199 = vadd.f32 0.0, %v3198
        %v3200 = vpop.f32.mrf.mxu0
        %v3201 = vadd.f32 0.0, %v3200
        %3202 = vmatmul.bf16.gmra.mxu0 %v2732
        %v3203 = vpop.f32.mrf.mxu0
        %v3204 = vadd.f32 0.0, %v3203
        %v3205 = vpop.f32.mrf.mxu0
        %v3206 = vadd.f32 0.0, %v3205
        %3207 = vmatmul.bf16.gmra.mxu0 %v2733
        %v3208 = vpop.f32.mrf.mxu0
        %v3209 = vadd.f32 0.0, %v3208
        %v3210 = vpop.f32.mrf.mxu0
        %v3211 = vadd.f32 0.0, %v3210
        %3212 = vmatmul.bf16.gmra.mxu0 %v2734
        %v3213 = vpop.f32.mrf.mxu0
        %v3214 = vadd.f32 0.0, %v3213
        %v3215 = vpop.f32.mrf.mxu0
        %v3216 = vadd.f32 0.0, %v3215
        %3217 = vmatmul.bf16.gmra.mxu0 %v2735
        %v3218 = vpop.f32.mrf.mxu0
        %v3219 = vadd.f32 0.0, %v3218
        %v3220 = vpop.f32.mrf.mxu0
        %v3221 = vadd.f32 0.0, %v3220
        %3222 = vmatmul.bf16.gmra.mxu0 %v2736
        %v3223 = vpop.f32.mrf.mxu0
        %v3224 = vadd.f32 0.0, %v3223
        %v3225 = vpop.f32.mrf.mxu0
        %v3226 = vadd.f32 0.0, %v3225
        %3227 = vmatmul.bf16.gmra.mxu0 %v2737
        %v3228 = vpop.f32.mrf.mxu0
        %v3229 = vadd.f32 0.0, %v3228
        %v3230 = vpop.f32.mrf.mxu0
        %v3231 = vadd.f32 0.0, %v3230
        %3232 = vmatmul.bf16.gmra.mxu0 %v2738
        %v3233 = vpop.f32.mrf.mxu0
        %v3234 = vadd.f32 0.0, %v3233
        %v3235 = vpop.f32.mrf.mxu0
        %v3236 = vadd.f32 0.0, %v3235
        %3237 = vmatmul.bf16.gmra.mxu0 %v2739
        %v3238 = vpop.f32.mrf.mxu0
        %v3239 = vadd.f32 0.0, %v3238
        %v3240 = vpop.f32.mrf.mxu0
        %v3241 = vadd.f32 0.0, %v3240
        %3242 = vmatmul.bf16.gmra.mxu0 %v2740
        %v3243 = vpop.f32.mrf.mxu0
        %v3244 = vadd.f32 0.0, %v3243
        %v3245 = vpop.f32.mrf.mxu0
        %v3246 = vadd.f32 0.0, %v3245
        %3247 = vmatmul.bf16.gmra.mxu0 %v2741
        %v3248 = vpop.f32.mrf.mxu0
        %v3249 = vadd.f32 0.0, %v3248
        %v3250 = vpop.f32.mrf.mxu0
        %v3251 = vadd.f32 0.0, %v3250
        %3252 = vmatmul.bf16.gmra.mxu0 %v2742
        %v3253 = vpop.f32.mrf.mxu0
        %v3254 = vadd.f32 0.0, %v3253
        %v3255 = vpop.f32.mrf.mxu0
        %v3256 = vadd.f32 0.0, %v3255
        %3257 = vmatmul.bf16.gmra.mxu0 %v2743
        %v3258 = vpop.f32.mrf.mxu0
        %v3259 = vadd.f32 0.0, %v3258
        %v3260 = vpop.f32.mrf.mxu0
        %v3261 = vadd.f32 0.0, %v3260
        %3262 = vmatmul.bf16.gmra.mxu0 %v2744
        %v3263 = vpop.f32.mrf.mxu0
        %v3264 = vadd.f32 0.0, %v3263
        %v3265 = vpop.f32.mrf.mxu0
        %v3266 = vadd.f32 0.0, %v3265
        %3267 = vmatmul.bf16.gmra.mxu0 %v2949
        %v3268 = vpop.f32.mrf.mxu0
        %v3269 = vadd.f32 0.0, %v3268
        %v3270 = vpop.f32.mrf.mxu0
        %v3271 = vadd.f32 0.0, %v3270
        %3272 = vmatmul.bf16.gmra.mxu0 %v3139
        %v3273 = vpop.f32.mrf.mxu0
        %v3274 = vadd.f32 0.0, %v3273
        %v3275 = vpop.f32.mrf.mxu0
        %v3276 = vadd.f32 0.0, %v3275
        %3277 = vdwg.mxu0
        %v3278 = vadd.f32 %v3088, %v3199
        %v3279 = vadd.f32 %v3089, %v3201
        %v3280 = vadd.f32 %v3090, %v3204
        %v3281 = vadd.f32 %v3091, %v3206
        %v3282 = vadd.f32 %v3092, %v3209
        %v3283 = vadd.f32 %v3093, %v3211
        %v3284 = vadd.f32 %v3094, %v3214
        %v3285 = vadd.f32 %v3095, %v3216
        %v3286 = vadd.f32 %v3096, %v3219
        %v3287 = vadd.f32 %v3097, %v3221
        %v3288 = vadd.f32 %v3098, %v3224
        %v3289 = vadd.f32 %v3099, %v3226
        %v3290 = vadd.f32 %v3100, %v3229
        %v3291 = vadd.f32 %v3101, %v3231
        %v3292 = vadd.f32 %v3102, %v3234
        %v3293 = vadd.f32 %v3103, %v3236
        %v3294 = vadd.f32 %v3104, %v3239
        %v3295 = vadd.f32 %v3105, %v3241
        %v3296 = vadd.f32 %v3106, %v3244
        %v3297 = vadd.f32 %v3107, %v3246
        %v3298 = vadd.f32 %v3108, %v3249
        %v3299 = vadd.f32 %v3109, %v3251
        %v3300 = vadd.f32 %v3110, %v3254
        %v3301 = vadd.f32 %v3111, %v3256
        %v3302 = vadd.f32 %v3112, %v3259
        %v3303 = vadd.f32 %v3113, %v3261
        %v3304 = vadd.f32 %v3114, %v3264
        %v3305 = vadd.f32 %v3115, %v3266
        %v3306 = vadd.f32 %v3116, %v3269
        %v3307 = vadd.f32 %v3117, %v3271
        %v3308 = vadd.f32 %v3118, %v3274
        %v3309 = vadd.f32 %v3119, %v3276
        %v3310 = vld [vmem:[%s2] sm:$0x1]
        %v3312 = vperm.slane %v3310, 0
        %v3314 = vadd.f32 %v3278, %v3312
        %v3315 = vadd.f32 %v3279, %v3312
        %v3316 = vadd.f32 %v3280, %v3312
        %v3317 = vadd.f32 %v3281, %v3312
        %v3318 = vadd.f32 %v3282, %v3312
        %v3319 = vadd.f32 %v3283, %v3312
        %v3320 = vadd.f32 %v3284, %v3312
        %v3321 = vadd.f32 %v3285, %v3312
        %v3322 = vadd.f32 %v3286, %v3312
        %v3323 = vadd.f32 %v3287, %v3312
        %v3324 = vadd.f32 %v3288, %v3312
        %v3325 = vadd.f32 %v3289, %v3312
        %v3326 = vadd.f32 %v3290, %v3312
        %v3327 = vadd.f32 %v3291, %v3312
        %v3328 = vadd.f32 %v3292, %v3312
        %v3329 = vadd.f32 %v3293, %v3312
        %v3330 = vadd.f32 %v3294, %v3312
        %v3331 = vadd.f32 %v3295, %v3312
        %v3332 = vadd.f32 %v3296, %v3312
        %v3333 = vadd.f32 %v3297, %v3312
        %v3334 = vadd.f32 %v3298, %v3312
        %v3335 = vadd.f32 %v3299, %v3312
        %v3336 = vadd.f32 %v3300, %v3312
        %v3337 = vadd.f32 %v3301, %v3312
        %v3338 = vadd.f32 %v3302, %v3312
        %v3339 = vadd.f32 %v3303, %v3312
        %v3340 = vadd.f32 %v3304, %v3312
        %v3341 = vadd.f32 %v3305, %v3312
        %v3342 = vadd.f32 %v3306, %v3312
        %v3343 = vadd.f32 %v3307, %v3312
        %v3344 = vadd.f32 %v3308, %v3312
        %v3345 = vadd.f32 %v3309, %v3312
        %v3346 = vmax.f32 %v3314, 0.0
        %v3347 = vmax.f32 %v3315, 0.0
        %v3348 = vmax.f32 %v3316, 0.0
        %v3349 = vmax.f32 %v3317, 0.0
        %v3350 = vmax.f32 %v3318, 0.0
        %v3351 = vmax.f32 %v3319, 0.0
        %v3352 = vmax.f32 %v3320, 0.0
        %v3353 = vmax.f32 %v3321, 0.0
        %v3354 = vmax.f32 %v3322, 0.0
        %v3355 = vmax.f32 %v3323, 0.0
        %v3356 = vmax.f32 %v3324, 0.0
        %v3357 = vmax.f32 %v3325, 0.0
        %v3358 = vmax.f32 %v3326, 0.0
        %v3359 = vmax.f32 %v3327, 0.0
        %v3360 = vmax.f32 %v3328, 0.0
        %v3361 = vmax.f32 %v3329, 0.0
        %v3362 = vmax.f32 %v3330, 0.0
        %v3363 = vmax.f32 %v3331, 0.0
        %v3364 = vmax.f32 %v3332, 0.0
        %v3365 = vmax.f32 %v3333, 0.0
        %v3366 = vmax.f32 %v3334, 0.0
        %v3367 = vmax.f32 %v3335, 0.0
        %v3368 = vmax.f32 %v3336, 0.0
        %v3369 = vmax.f32 %v3337, 0.0
        %v3370 = vmax.f32 %v3338, 0.0
        %v3371 = vmax.f32 %v3339, 0.0
        %v3372 = vmax.f32 %v3340, 0.0
        %v3373 = vmax.f32 %v3341, 0.0
        %v3374 = vmax.f32 %v3342, 0.0
        %v3375 = vmax.f32 %v3343, 0.0
        %v3376 = vmax.f32 %v3344, 0.0
        %v3377 = vmax.f32 %v3345, 0.0
        %s3378 = scalar_lea.vmem [#allocation3], 32
        %3379 = vst.msk [vmem:[%s3378 + $0x8] sm:$0xff] %vm434, %v3346
        %3380 = vst.msk [vmem:[%s3378 + $0x10] sm:$0xff] %vm434, %v3347
        %3381 = vst.msk [vmem:[%s3378 + $0x28] sm:$0xff] %vm434, %v3348
        %3382 = vst.msk [vmem:[%s3378 + $0x30] sm:$0xff] %vm434, %v3349
        %3383 = vst.msk [vmem:[%s3378 + $0x48] sm:$0xff] %vm434, %v3350
        %3384 = vst.msk [vmem:[%s3378 + $0x50] sm:$0xff] %vm434, %v3351
        %3385 = vst.msk [vmem:[%s3378 + $0x68] sm:$0xff] %vm434, %v3352
        %3386 = vst.msk [vmem:[%s3378 + $0x70] sm:$0xff] %vm434, %v3353
        %3387 = vst.msk [vmem:[%s3378 + $0x88] sm:$0xff] %vm434, %v3354
        %3388 = vst.msk [vmem:[%s3378 + $0x90] sm:$0xff] %vm434, %v3355
        %3389 = vst.msk [vmem:[%s3378 + $0xa8] sm:$0xff] %vm434, %v3356
        %3390 = vst.msk [vmem:[%s3378 + $0xb0] sm:$0xff] %vm434, %v3357
        %3391 = vst.msk [vmem:[%s3378 + $0xc8] sm:$0xff] %vm434, %v3358
        %3392 = vst.msk [vmem:[%s3378 + $0xd0] sm:$0xff] %vm434, %v3359
        %3393 = vst.msk [vmem:[%s3378 + $0xe8] sm:$0xff] %vm434, %v3360
        %3394 = vst.msk [vmem:[%s3378 + $0xf0] sm:$0xff] %vm434, %v3361
        %3395 = vst.msk [vmem:[%s3378 + $0x108] sm:$0xff] %vm434, %v3362
        %3396 = vst.msk [vmem:[%s3378 + $0x110] sm:$0xff] %vm434, %v3363
        %3397 = vst.msk [vmem:[%s3378 + $0x128] sm:$0xff] %vm434, %v3364
        %3398 = vst.msk [vmem:[%s3378 + $0x130] sm:$0xff] %vm434, %v3365
        %3399 = vst.msk [vmem:[%s3378 + $0x148] sm:$0xff] %vm434, %v3366
        %3400 = vst.msk [vmem:[%s3378 + $0x150] sm:$0xff] %vm434, %v3367
        %3401 = vst.msk [vmem:[%s3378 + $0x168] sm:$0xff] %vm434, %v3368
        %3402 = vst.msk [vmem:[%s3378 + $0x170] sm:$0xff] %vm434, %v3369
        %3403 = vst.msk [vmem:[%s3378 + $0x188] sm:$0xff] %vm434, %v3370
        %3404 = vst.msk [vmem:[%s3378 + $0x190] sm:$0xff] %vm434, %v3371
        %3405 = vst.msk [vmem:[%s3378 + $0x1a8] sm:$0xff] %vm434, %v3372
        %3406 = vst.msk [vmem:[%s3378 + $0x1b0] sm:$0xff] %vm434, %v3373
        %3407 = vst.msk [vmem:[%s3378 + $0x1c8] sm:$0xff] %vm434, %v3374
        %3408 = vst.msk [vmem:[%s3378 + $0x1d0] sm:$0xff] %vm434, %v3375
        %3409 = vst.msk [vmem:[%s3378 + $0x1e8] sm:$0xff] %vm434, %v3376
        %3410 = vst.msk [vmem:[%s3378 + $0x1f0] sm:$0xff] %vm434, %v3377
        %v3411 = vld [vmem:[#allocation3 + $0x7] sm:$0xff]
        %v3412 = vld [vmem:[#allocation3 + $0xf] sm:$0xff]
        %v3413 = vld [vmem:[#allocation3 + $0x27] sm:$0xff]
        %v3414 = vld [vmem:[#allocation3 + $0x2f] sm:$0xff]
        %v3415 = vld [vmem:[#allocation3 + $0x47] sm:$0xff]
        %v3416 = vld [vmem:[#allocation3 + $0x4f] sm:$0xff]
        %v3417 = vld [vmem:[#allocation3 + $0x67] sm:$0xff]
        %v3418 = vld [vmem:[#allocation3 + $0x6f] sm:$0xff]
        %v3419 = vld [vmem:[#allocation3 + $0x87] sm:$0xff]
        %v3420 = vld [vmem:[#allocation3 + $0x8f] sm:$0xff]
        %v3421 = vld [vmem:[#allocation3 + $0xa7] sm:$0xff]
        %v3422 = vld [vmem:[#allocation3 + $0xaf] sm:$0xff]
        %v3423 = vld [vmem:[#allocation3 + $0xc7] sm:$0xff]
        %v3424 = vld [vmem:[#allocation3 + $0xcf] sm:$0xff]
        %v3425 = vld [vmem:[#allocation3 + $0xe7] sm:$0xff]
        %v3426 = vld [vmem:[#allocation3 + $0xef] sm:$0xff]
        %v3427 = vld [vmem:[#allocation3 + $0x107] sm:$0xff]
        %v3428 = vld [vmem:[#allocation3 + $0x10f] sm:$0xff]
        %v3429 = vld [vmem:[#allocation3 + $0x127] sm:$0xff]
        %v3430 = vld [vmem:[#allocation3 + $0x12f] sm:$0xff]
        %v3431 = vld [vmem:[#allocation3 + $0x147] sm:$0xff]
        %v3432 = vld [vmem:[#allocation3 + $0x14f] sm:$0xff]
        %v3433 = vld [vmem:[#allocation3 + $0x167] sm:$0xff]
        %v3434 = vld [vmem:[#allocation3 + $0x16f] sm:$0xff]
        %v3435 = vld [vmem:[#allocation3 + $0x187] sm:$0xff]
        %v3436 = vld [vmem:[#allocation3 + $0x18f] sm:$0xff]
        %v3437 = vld [vmem:[#allocation3 + $0x1a7] sm:$0xff]
        %v3438 = vld [vmem:[#allocation3 + $0x1af] sm:$0xff]
        %v3439 = vld [vmem:[#allocation3 + $0x1c7] sm:$0xff]
        %v3440 = vld [vmem:[#allocation3 + $0x1cf] sm:$0xff]
        %v3441 = vld [vmem:[#allocation3 + $0x1e7] sm:$0xff]
        %v3442 = vld [vmem:[#allocation3 + $0x1ef] sm:$0xff]
        %v3443 = vld [vmem:[#allocation3 + $0x207] sm:$0xff]
        %v3444 = vld [vmem:[#allocation3 + $0x20f] sm:$0xff]
        %v3445 = vld [vmem:[#allocation3 + $0x227] sm:$0xff]
        %v3446 = vld [vmem:[#allocation3 + $0x22f] sm:$0xff]
        %v3447 = vld [vmem:[%s3] sm:$0x1]
        %v3449 = vperm.slane %v3447, 0
        %v3451 = vmul.f32 %v3411, %v3449
        %v3452 = vmul.f32 %v3412, %v3449
        %v3453 = vmul.f32 %v3413, %v3449
        %v3454 = vmul.f32 %v3414, %v3449
        %v3455 = vmul.f32 %v3415, %v3449
        %v3456 = vmul.f32 %v3416, %v3449
        %v3457 = vmul.f32 %v3417, %v3449
        %v3458 = vmul.f32 %v3418, %v3449
        %v3459 = vmul.f32 %v3419, %v3449
        %v3460 = vmul.f32 %v3420, %v3449
        %v3461 = vmul.f32 %v3421, %v3449
        %v3462 = vmul.f32 %v3422, %v3449
        %v3463 = vmul.f32 %v3423, %v3449
        %v3464 = vmul.f32 %v3424, %v3449
        %v3465 = vmul.f32 %v3425, %v3449
        %v3466 = vmul.f32 %v3426, %v3449
        %v3467 = vmul.f32 %v3427, %v3449
        %v3468 = vmul.f32 %v3428, %v3449
        %v3469 = vmul.f32 %v3429, %v3449
        %v3470 = vmul.f32 %v3430, %v3449
        %v3471 = vmul.f32 %v3431, %v3449
        %v3472 = vmul.f32 %v3432, %v3449
        %v3473 = vmul.f32 %v3433, %v3449
        %v3474 = vmul.f32 %v3434, %v3449
        %v3475 = vmul.f32 %v3435, %v3449
        %v3476 = vmul.f32 %v3436, %v3449
        %v3477 = vmul.f32 %v3437, %v3449
        %v3478 = vmul.f32 %v3438, %v3449
        %v3479 = vmul.f32 %v3439, %v3449
        %v3480 = vmul.f32 %v3440, %v3449
        %v3481 = vmul.f32 %v3441, %v3449
        %v3482 = vmul.f32 %v3442, %v3449
        %v3483 = vadd.f32 %v3451, 0.0
        %v3484 = vadd.f32 %v3452, 0.0
        %v3485 = vadd.f32 %v3453, 0.0
        %v3486 = vadd.f32 %v3454, 0.0
        %v3487 = vadd.f32 %v3455, 0.0
        %v3488 = vadd.f32 %v3456, 0.0
        %v3489 = vadd.f32 %v3457, 0.0
        %v3490 = vadd.f32 %v3458, 0.0
        %v3491 = vadd.f32 %v3459, 0.0
        %v3492 = vadd.f32 %v3460, 0.0
        %v3493 = vadd.f32 %v3461, 0.0
        %v3494 = vadd.f32 %v3462, 0.0
        %v3495 = vadd.f32 %v3463, 0.0
        %v3496 = vadd.f32 %v3464, 0.0
        %v3497 = vadd.f32 %v3465, 0.0
        %v3498 = vadd.f32 %v3466, 0.0
        %v3499 = vadd.f32 %v3467, 0.0
        %v3500 = vadd.f32 %v3468, 0.0
        %v3501 = vadd.f32 %v3469, 0.0
        %v3502 = vadd.f32 %v3470, 0.0
        %v3503 = vadd.f32 %v3471, 0.0
        %v3504 = vadd.f32 %v3472, 0.0
        %v3505 = vadd.f32 %v3473, 0.0
        %v3506 = vadd.f32 %v3474, 0.0
        %v3507 = vadd.f32 %v3475, 0.0
        %v3508 = vadd.f32 %v3476, 0.0
        %v3509 = vadd.f32 %v3477, 0.0
        %v3510 = vadd.f32 %v3478, 0.0
        %v3511 = vadd.f32 %v3479, 0.0
        %v3512 = vadd.f32 %v3480, 0.0
        %v3513 = vadd.f32 %v3481, 0.0
        %v3514 = vadd.f32 %v3482, 0.0
        %s3515 = scalar_lea.vmem %s3, 3
        %v3516 = vld [vmem:[%s3515] sm:$0x1]
        %v3518 = vperm.slane %v3516, 0
        %v3520 = vmul.f32 %v3413, %v3518
        %v3521 = vmul.f32 %v3414, %v3518
        %v3522 = vmul.f32 %v3415, %v3518
        %v3523 = vmul.f32 %v3416, %v3518
        %v3524 = vmul.f32 %v3417, %v3518
        %v3525 = vmul.f32 %v3418, %v3518
        %v3526 = vmul.f32 %v3419, %v3518
        %v3527 = vmul.f32 %v3420, %v3518
        %v3528 = vmul.f32 %v3421, %v3518
        %v3529 = vmul.f32 %v3422, %v3518
        %v3530 = vmul.f32 %v3423, %v3518
        %v3531 = vmul.f32 %v3424, %v3518
        %v3532 = vmul.f32 %v3425, %v3518
        %v3533 = vmul.f32 %v3426, %v3518
        %v3534 = vmul.f32 %v3427, %v3518
        %v3535 = vmul.f32 %v3428, %v3518
        %v3536 = vmul.f32 %v3429, %v3518
        %v3537 = vmul.f32 %v3430, %v3518
        %v3538 = vmul.f32 %v3431, %v3518
        %v3539 = vmul.f32 %v3432, %v3518
        %v3540 = vmul.f32 %v3433, %v3518
        %v3541 = vmul.f32 %v3434, %v3518
        %v3542 = vmul.f32 %v3435, %v3518
        %v3543 = vmul.f32 %v3436, %v3518
        %v3544 = vmul.f32 %v3437, %v3518
        %v3545 = vmul.f32 %v3438, %v3518
        %v3546 = vmul.f32 %v3439, %v3518
        %v3547 = vmul.f32 %v3440, %v3518
        %v3548 = vmul.f32 %v3441, %v3518
        %v3549 = vmul.f32 %v3442, %v3518
        %v3550 = vmul.f32 %v3443, %v3518
        %v3551 = vmul.f32 %v3444, %v3518
        %v3552 = vadd.f32 %v3483, %v3520
        %v3553 = vadd.f32 %v3484, %v3521
        %v3554 = vadd.f32 %v3485, %v3522
        %v3555 = vadd.f32 %v3486, %v3523
        %v3556 = vadd.f32 %v3487, %v3524
        %v3557 = vadd.f32 %v3488, %v3525
        %v3558 = vadd.f32 %v3489, %v3526
        %v3559 = vadd.f32 %v3490, %v3527
        %v3560 = vadd.f32 %v3491, %v3528
        %v3561 = vadd.f32 %v3492, %v3529
        %v3562 = vadd.f32 %v3493, %v3530
        %v3563 = vadd.f32 %v3494, %v3531
        %v3564 = vadd.f32 %v3495, %v3532
        %v3565 = vadd.f32 %v3496, %v3533
        %v3566 = vadd.f32 %v3497, %v3534
        %v3567 = vadd.f32 %v3498, %v3535
        %v3568 = vadd.f32 %v3499, %v3536
        %v3569 = vadd.f32 %v3500, %v3537
        %v3570 = vadd.f32 %v3501, %v3538
        %v3571 = vadd.f32 %v3502, %v3539
        %v3572 = vadd.f32 %v3503, %v3540
        %v3573 = vadd.f32 %v3504, %v3541
        %v3574 = vadd.f32 %v3505, %v3542
        %v3575 = vadd.f32 %v3506, %v3543
        %v3576 = vadd.f32 %v3507, %v3544
        %v3577 = vadd.f32 %v3508, %v3545
        %v3578 = vadd.f32 %v3509, %v3546
        %v3579 = vadd.f32 %v3510, %v3547
        %v3580 = vadd.f32 %v3511, %v3548
        %v3581 = vadd.f32 %v3512, %v3549
        %v3582 = vadd.f32 %v3513, %v3550
        %v3583 = vadd.f32 %v3514, %v3551
        %s3584 = scalar_lea.vmem %s3, 6
        %v3585 = vld [vmem:[%s3584] sm:$0x1]
        %v3587 = vperm.slane %v3585, 0
        %v3589 = vmul.f32 %v3415, %v3587
        %v3590 = vmul.f32 %v3416, %v3587
        %v3591 = vmul.f32 %v3417, %v3587
        %v3592 = vmul.f32 %v3418, %v3587
        %v3593 = vmul.f32 %v3419, %v3587
        %v3594 = vmul.f32 %v3420, %v3587
        %v3595 = vmul.f32 %v3421, %v3587
        %v3596 = vmul.f32 %v3422, %v3587
        %v3597 = vmul.f32 %v3423, %v3587
        %v3598 = vmul.f32 %v3424, %v3587
        %v3599 = vmul.f32 %v3425, %v3587
        %v3600 = vmul.f32 %v3426, %v3587
        %v3601 = vmul.f32 %v3427, %v3587
        %v3602 = vmul.f32 %v3428, %v3587
        %v3603 = vmul.f32 %v3429, %v3587
        %v3604 = vmul.f32 %v3430, %v3587
        %v3605 = vmul.f32 %v3431, %v3587
        %v3606 = vmul.f32 %v3432, %v3587
        %v3607 = vmul.f32 %v3433, %v3587
        %v3608 = vmul.f32 %v3434, %v3587
        %v3609 = vmul.f32 %v3435, %v3587
        %v3610 = vmul.f32 %v3436, %v3587
        %v3611 = vmul.f32 %v3437, %v3587
        %v3612 = vmul.f32 %v3438, %v3587
        %v3613 = vmul.f32 %v3439, %v3587
        %v3614 = vmul.f32 %v3440, %v3587
        %v3615 = vmul.f32 %v3441, %v3587
        %v3616 = vmul.f32 %v3442, %v3587
        %v3617 = vmul.f32 %v3443, %v3587
        %v3618 = vmul.f32 %v3444, %v3587
        %v3619 = vmul.f32 %v3445, %v3587
        %v3620 = vmul.f32 %v3446, %v3587
        %v3621 = vadd.f32 %v3552, %v3589
        %v3622 = vadd.f32 %v3553, %v3590
        %v3623 = vadd.f32 %v3554, %v3591
        %v3624 = vadd.f32 %v3555, %v3592
        %v3625 = vadd.f32 %v3556, %v3593
        %v3626 = vadd.f32 %v3557, %v3594
        %v3627 = vadd.f32 %v3558, %v3595
        %v3628 = vadd.f32 %v3559, %v3596
        %v3629 = vadd.f32 %v3560, %v3597
        %v3630 = vadd.f32 %v3561, %v3598
        %v3631 = vadd.f32 %v3562, %v3599
        %v3632 = vadd.f32 %v3563, %v3600
        %v3633 = vadd.f32 %v3564, %v3601
        %v3634 = vadd.f32 %v3565, %v3602
        %v3635 = vadd.f32 %v3566, %v3603
        %v3636 = vadd.f32 %v3567, %v3604
        %v3637 = vadd.f32 %v3568, %v3605
        %v3638 = vadd.f32 %v3569, %v3606
        %v3639 = vadd.f32 %v3570, %v3607
        %v3640 = vadd.f32 %v3571, %v3608
        %v3641 = vadd.f32 %v3572, %v3609
        %v3642 = vadd.f32 %v3573, %v3610
        %v3643 = vadd.f32 %v3574, %v3611
        %v3644 = vadd.f32 %v3575, %v3612
        %v3645 = vadd.f32 %v3576, %v3613
        %v3646 = vadd.f32 %v3577, %v3614
        %v3647 = vadd.f32 %v3578, %v3615
        %v3648 = vadd.f32 %v3579, %v3616
        %v3649 = vadd.f32 %v3580, %v3617
        %v3650 = vadd.f32 %v3581, %v3618
        %v3651 = vadd.f32 %v3582, %v3619
        %v3652 = vadd.f32 %v3583, %v3620
        %v3653 = vld [vmem:[#allocation3 + $0x8] sm:$0xff]
        %v3654 = vld [vmem:[#allocation3 + $0x10] sm:$0xff]
        %v3655 = vld [vmem:[#allocation3 + $0x28] sm:$0xff]
        %v3656 = vld [vmem:[#allocation3 + $0x30] sm:$0xff]
        %v3657 = vld [vmem:[#allocation3 + $0x48] sm:$0xff]
        %v3658 = vld [vmem:[#allocation3 + $0x50] sm:$0xff]
        %v3659 = vld [vmem:[#allocation3 + $0x68] sm:$0xff]
        %v3660 = vld [vmem:[#allocation3 + $0x70] sm:$0xff]
        %v3661 = vld [vmem:[#allocation3 + $0x88] sm:$0xff]
        %v3662 = vld [vmem:[#allocation3 + $0x90] sm:$0xff]
        %v3663 = vld [vmem:[#allocation3 + $0xa8] sm:$0xff]
        %v3664 = vld [vmem:[#allocation3 + $0xb0] sm:$0xff]
        %v3665 = vld [vmem:[#allocation3 + $0xc8] sm:$0xff]
        %v3666 = vld [vmem:[#allocation3 + $0xd0] sm:$0xff]
        %v3667 = vld [vmem:[#allocation3 + $0xe8] sm:$0xff]
        %v3668 = vld [vmem:[#allocation3 + $0xf0] sm:$0xff]
        %v3669 = vld [vmem:[#allocation3 + $0x108] sm:$0xff]
        %v3670 = vld [vmem:[#allocation3 + $0x110] sm:$0xff]
        %v3671 = vld [vmem:[#allocation3 + $0x128] sm:$0xff]
        %v3672 = vld [vmem:[#allocation3 + $0x130] sm:$0xff]
        %v3673 = vld [vmem:[#allocation3 + $0x148] sm:$0xff]
        %v3674 = vld [vmem:[#allocation3 + $0x150] sm:$0xff]
        %v3675 = vld [vmem:[#allocation3 + $0x168] sm:$0xff]
        %v3676 = vld [vmem:[#allocation3 + $0x170] sm:$0xff]
        %v3677 = vld [vmem:[#allocation3 + $0x188] sm:$0xff]
        %v3678 = vld [vmem:[#allocation3 + $0x190] sm:$0xff]
        %v3679 = vld [vmem:[#allocation3 + $0x1a8] sm:$0xff]
        %v3680 = vld [vmem:[#allocation3 + $0x1b0] sm:$0xff]
        %v3681 = vld [vmem:[#allocation3 + $0x1c8] sm:$0xff]
        %v3682 = vld [vmem:[#allocation3 + $0x1d0] sm:$0xff]
        %v3683 = vld [vmem:[#allocation3 + $0x1e8] sm:$0xff]
        %v3684 = vld [vmem:[#allocation3 + $0x1f0] sm:$0xff]
        %v3685 = vld [vmem:[#allocation3 + $0x208] sm:$0xff]
        %v3686 = vld [vmem:[#allocation3 + $0x210] sm:$0xff]
        %v3687 = vld [vmem:[#allocation3 + $0x228] sm:$0xff]
        %v3688 = vld [vmem:[#allocation3 + $0x230] sm:$0xff]
        %s3689 = scalar_lea.vmem %s3, 1
        %v3690 = vld [vmem:[%s3689] sm:$0x1]
        %v3692 = vperm.slane %v3690, 0
        %v3694 = vmul.f32 %v3653, %v3692
        %v3695 = vmul.f32 %v3654, %v3692
        %v3696 = vmul.f32 %v3655, %v3692
        %v3697 = vmul.f32 %v3656, %v3692
        %v3698 = vmul.f32 %v3657, %v3692
        %v3699 = vmul.f32 %v3658, %v3692
        %v3700 = vmul.f32 %v3659, %v3692
        %v3701 = vmul.f32 %v3660, %v3692
        %v3702 = vmul.f32 %v3661, %v3692
        %v3703 = vmul.f32 %v3662, %v3692
        %v3704 = vmul.f32 %v3663, %v3692
        %v3705 = vmul.f32 %v3664, %v3692
        %v3706 = vmul.f32 %v3665, %v3692
        %v3707 = vmul.f32 %v3666, %v3692
        %v3708 = vmul.f32 %v3667, %v3692
        %v3709 = vmul.f32 %v3668, %v3692
        %v3710 = vmul.f32 %v3669, %v3692
        %v3711 = vmul.f32 %v3670, %v3692
        %v3712 = vmul.f32 %v3671, %v3692
        %v3713 = vmul.f32 %v3672, %v3692
        %v3714 = vmul.f32 %v3673, %v3692
        %v3715 = vmul.f32 %v3674, %v3692
        %v3716 = vmul.f32 %v3675, %v3692
        %v3717 = vmul.f32 %v3676, %v3692
        %v3718 = vmul.f32 %v3677, %v3692
        %v3719 = vmul.f32 %v3678, %v3692
        %v3720 = vmul.f32 %v3679, %v3692
        %v3721 = vmul.f32 %v3680, %v3692
        %v3722 = vmul.f32 %v3681, %v3692
        %v3723 = vmul.f32 %v3682, %v3692
        %v3724 = vmul.f32 %v3683, %v3692
        %v3725 = vmul.f32 %v3684, %v3692
        %v3726 = vadd.f32 %v3621, %v3694
        %v3727 = vadd.f32 %v3622, %v3695
        %v3728 = vadd.f32 %v3623, %v3696
        %v3729 = vadd.f32 %v3624, %v3697
        %v3730 = vadd.f32 %v3625, %v3698
        %v3731 = vadd.f32 %v3626, %v3699
        %v3732 = vadd.f32 %v3627, %v3700
        %v3733 = vadd.f32 %v3628, %v3701
        %v3734 = vadd.f32 %v3629, %v3702
        %v3735 = vadd.f32 %v3630, %v3703
        %v3736 = vadd.f32 %v3631, %v3704
        %v3737 = vadd.f32 %v3632, %v3705
        %v3738 = vadd.f32 %v3633, %v3706
        %v3739 = vadd.f32 %v3634, %v3707
        %v3740 = vadd.f32 %v3635, %v3708
        %v3741 = vadd.f32 %v3636, %v3709
        %v3742 = vadd.f32 %v3637, %v3710
        %v3743 = vadd.f32 %v3638, %v3711
        %v3744 = vadd.f32 %v3639, %v3712
        %v3745 = vadd.f32 %v3640, %v3713
        %v3746 = vadd.f32 %v3641, %v3714
        %v3747 = vadd.f32 %v3642, %v3715
        %v3748 = vadd.f32 %v3643, %v3716
        %v3749 = vadd.f32 %v3644, %v3717
        %v3750 = vadd.f32 %v3645, %v3718
        %v3751 = vadd.f32 %v3646, %v3719
        %v3752 = vadd.f32 %v3647, %v3720
        %v3753 = vadd.f32 %v3648, %v3721
        %v3754 = vadd.f32 %v3649, %v3722
        %v3755 = vadd.f32 %v3650, %v3723
        %v3756 = vadd.f32 %v3651, %v3724
        %v3757 = vadd.f32 %v3652, %v3725
        %s3758 = scalar_lea.vmem %s3, 4
        %v3759 = vld [vmem:[%s3758] sm:$0x1]
        %v3761 = vperm.slane %v3759, 0
        %v3763 = vmul.f32 %v3655, %v3761
        %v3764 = vmul.f32 %v3656, %v3761
        %v3765 = vmul.f32 %v3657, %v3761
        %v3766 = vmul.f32 %v3658, %v3761
        %v3767 = vmul.f32 %v3659, %v3761
        %v3768 = vmul.f32 %v3660, %v3761
        %v3769 = vmul.f32 %v3661, %v3761
        %v3770 = vmul.f32 %v3662, %v3761
        %v3771 = vmul.f32 %v3663, %v3761
        %v3772 = vmul.f32 %v3664, %v3761
        %v3773 = vmul.f32 %v3665, %v3761
        %v3774 = vmul.f32 %v3666, %v3761
        %v3775 = vmul.f32 %v3667, %v3761
        %v3776 = vmul.f32 %v3668, %v3761
        %v3777 = vmul.f32 %v3669, %v3761
        %v3778 = vmul.f32 %v3670, %v3761
        %v3779 = vmul.f32 %v3671, %v3761
        %v3780 = vmul.f32 %v3672, %v3761
        %v3781 = vmul.f32 %v3673, %v3761
        %v3782 = vmul.f32 %v3674, %v3761
        %v3783 = vmul.f32 %v3675, %v3761
        %v3784 = vmul.f32 %v3676, %v3761
        %v3785 = vmul.f32 %v3677, %v3761
        %v3786 = vmul.f32 %v3678, %v3761
        %v3787 = vmul.f32 %v3679, %v3761
        %v3788 = vmul.f32 %v3680, %v3761
        %v3789 = vmul.f32 %v3681, %v3761
        %v3790 = vmul.f32 %v3682, %v3761
        %v3791 = vmul.f32 %v3683, %v3761
        %v3792 = vmul.f32 %v3684, %v3761
        %v3793 = vmul.f32 %v3685, %v3761
        %v3794 = vmul.f32 %v3686, %v3761
        %v3795 = vadd.f32 %v3726, %v3763
        %v3796 = vadd.f32 %v3727, %v3764
        %v3797 = vadd.f32 %v3728, %v3765
        %v3798 = vadd.f32 %v3729, %v3766
        %v3799 = vadd.f32 %v3730, %v3767
        %v3800 = vadd.f32 %v3731, %v3768
        %v3801 = vadd.f32 %v3732, %v3769
        %v3802 = vadd.f32 %v3733, %v3770
        %v3803 = vadd.f32 %v3734, %v3771
        %v3804 = vadd.f32 %v3735, %v3772
        %v3805 = vadd.f32 %v3736, %v3773
        %v3806 = vadd.f32 %v3737, %v3774
        %v3807 = vadd.f32 %v3738, %v3775
        %v3808 = vadd.f32 %v3739, %v3776
        %v3809 = vadd.f32 %v3740, %v3777
        %v3810 = vadd.f32 %v3741, %v3778
        %v3811 = vadd.f32 %v3742, %v3779
        %v3812 = vadd.f32 %v3743, %v3780
        %v3813 = vadd.f32 %v3744, %v3781
        %v3814 = vadd.f32 %v3745, %v3782
        %v3815 = vadd.f32 %v3746, %v3783
        %v3816 = vadd.f32 %v3747, %v3784
        %v3817 = vadd.f32 %v3748, %v3785
        %v3818 = vadd.f32 %v3749, %v3786
        %v3819 = vadd.f32 %v3750, %v3787
        %v3820 = vadd.f32 %v3751, %v3788
        %v3821 = vadd.f32 %v3752, %v3789
        %v3822 = vadd.f32 %v3753, %v3790
        %v3823 = vadd.f32 %v3754, %v3791
        %v3824 = vadd.f32 %v3755, %v3792
        %v3825 = vadd.f32 %v3756, %v3793
        %v3826 = vadd.f32 %v3757, %v3794
        %s3827 = scalar_lea.vmem %s3, 7
        %v3828 = vld [vmem:[%s3827] sm:$0x1]
        %v3830 = vperm.slane %v3828, 0
        %v3832 = vmul.f32 %v3657, %v3830
        %v3833 = vmul.f32 %v3658, %v3830
        %v3834 = vmul.f32 %v3659, %v3830
        %v3835 = vmul.f32 %v3660, %v3830
        %v3836 = vmul.f32 %v3661, %v3830
        %v3837 = vmul.f32 %v3662, %v3830
        %v3838 = vmul.f32 %v3663, %v3830
        %v3839 = vmul.f32 %v3664, %v3830
        %v3840 = vmul.f32 %v3665, %v3830
        %v3841 = vmul.f32 %v3666, %v3830
        %v3842 = vmul.f32 %v3667, %v3830
        %v3843 = vmul.f32 %v3668, %v3830
        %v3844 = vmul.f32 %v3669, %v3830
        %v3845 = vmul.f32 %v3670, %v3830
        %v3846 = vmul.f32 %v3671, %v3830
        %v3847 = vmul.f32 %v3672, %v3830
        %v3848 = vmul.f32 %v3673, %v3830
        %v3849 = vmul.f32 %v3674, %v3830
        %v3850 = vmul.f32 %v3675, %v3830
        %v3851 = vmul.f32 %v3676, %v3830
        %v3852 = vmul.f32 %v3677, %v3830
        %v3853 = vmul.f32 %v3678, %v3830
        %v3854 = vmul.f32 %v3679, %v3830
        %v3855 = vmul.f32 %v3680, %v3830
        %v3856 = vmul.f32 %v3681, %v3830
        %v3857 = vmul.f32 %v3682, %v3830
        %v3858 = vmul.f32 %v3683, %v3830
        %v3859 = vmul.f32 %v3684, %v3830
        %v3860 = vmul.f32 %v3685, %v3830
        %v3861 = vmul.f32 %v3686, %v3830
        %v3862 = vmul.f32 %v3687, %v3830
        %v3863 = vmul.f32 %v3688, %v3830
        %v3864 = vadd.f32 %v3795, %v3832
        %v3865 = vadd.f32 %v3796, %v3833
        %v3866 = vadd.f32 %v3797, %v3834
        %v3867 = vadd.f32 %v3798, %v3835
        %v3868 = vadd.f32 %v3799, %v3836
        %v3869 = vadd.f32 %v3800, %v3837
        %v3870 = vadd.f32 %v3801, %v3838
        %v3871 = vadd.f32 %v3802, %v3839
        %v3872 = vadd.f32 %v3803, %v3840
        %v3873 = vadd.f32 %v3804, %v3841
        %v3874 = vadd.f32 %v3805, %v3842
        %v3875 = vadd.f32 %v3806, %v3843
        %v3876 = vadd.f32 %v3807, %v3844
        %v3877 = vadd.f32 %v3808, %v3845
        %v3878 = vadd.f32 %v3809, %v3846
        %v3879 = vadd.f32 %v3810, %v3847
        %v3880 = vadd.f32 %v3811, %v3848
        %v3881 = vadd.f32 %v3812, %v3849
        %v3882 = vadd.f32 %v3813, %v3850
        %v3883 = vadd.f32 %v3814, %v3851
        %v3884 = vadd.f32 %v3815, %v3852
        %v3885 = vadd.f32 %v3816, %v3853
        %v3886 = vadd.f32 %v3817, %v3854
        %v3887 = vadd.f32 %v3818, %v3855
        %v3888 = vadd.f32 %v3819, %v3856
        %v3889 = vadd.f32 %v3820, %v3857
        %v3890 = vadd.f32 %v3821, %v3858
        %v3891 = vadd.f32 %v3822, %v3859
        %v3892 = vadd.f32 %v3823, %v3860
        %v3893 = vadd.f32 %v3824, %v3861
        %v3894 = vadd.f32 %v3825, %v3862
        %v3895 = vadd.f32 %v3826, %v3863
        %v3896 = vld [vmem:[#allocation3 + $0x9] sm:$0xff]
        %v3897 = vld [vmem:[#allocation3 + $0x11] sm:$0xff]
        %v3898 = vld [vmem:[#allocation3 + $0x29] sm:$0xff]
        %v3899 = vld [vmem:[#allocation3 + $0x31] sm:$0xff]
        %v3900 = vld [vmem:[#allocation3 + $0x49] sm:$0xff]
        %v3901 = vld [vmem:[#allocation3 + $0x51] sm:$0xff]
        %v3902 = vld [vmem:[#allocation3 + $0x69] sm:$0xff]
        %v3903 = vld [vmem:[#allocation3 + $0x71] sm:$0xff]
        %v3904 = vld [vmem:[#allocation3 + $0x89] sm:$0xff]
        %v3905 = vld [vmem:[#allocation3 + $0x91] sm:$0xff]
        %v3906 = vld [vmem:[#allocation3 + $0xa9] sm:$0xff]
        %v3907 = vld [vmem:[#allocation3 + $0xb1] sm:$0xff]
        %v3908 = vld [vmem:[#allocation3 + $0xc9] sm:$0xff]
        %v3909 = vld [vmem:[#allocation3 + $0xd1] sm:$0xff]
        %v3910 = vld [vmem:[#allocation3 + $0xe9] sm:$0xff]
        %v3911 = vld [vmem:[#allocation3 + $0xf1] sm:$0xff]
        %v3912 = vld [vmem:[#allocation3 + $0x109] sm:$0xff]
        %v3913 = vld [vmem:[#allocation3 + $0x111] sm:$0xff]
        %v3914 = vld [vmem:[#allocation3 + $0x129] sm:$0xff]
        %v3915 = vld [vmem:[#allocation3 + $0x131] sm:$0xff]
        %v3916 = vld [vmem:[#allocation3 + $0x149] sm:$0xff]
        %v3917 = vld [vmem:[#allocation3 + $0x151] sm:$0xff]
        %v3918 = vld [vmem:[#allocation3 + $0x169] sm:$0xff]
        %v3919 = vld [vmem:[#allocation3 + $0x171] sm:$0xff]
        %v3920 = vld [vmem:[#allocation3 + $0x189] sm:$0xff]
        %v3921 = vld [vmem:[#allocation3 + $0x191] sm:$0xff]
        %v3922 = vld [vmem:[#allocation3 + $0x1a9] sm:$0xff]
        %v3923 = vld [vmem:[#allocation3 + $0x1b1] sm:$0xff]
        %v3924 = vld [vmem:[#allocation3 + $0x1c9] sm:$0xff]
        %v3925 = vld [vmem:[#allocation3 + $0x1d1] sm:$0xff]
        %v3926 = vld [vmem:[#allocation3 + $0x1e9] sm:$0xff]
        %v3927 = vld [vmem:[#allocation3 + $0x1f1] sm:$0xff]
        %v3928 = vld [vmem:[#allocation3 + $0x209] sm:$0xff]
        %v3929 = vld [vmem:[#allocation3 + $0x211] sm:$0xff]
        %v3930 = vld [vmem:[#allocation3 + $0x229] sm:$0xff]
        %v3931 = vld [vmem:[#allocation3 + $0x231] sm:$0xff]
        %s3932 = scalar_lea.vmem %s3, 2
        %v3933 = vld [vmem:[%s3932] sm:$0x1]
        %v3935 = vperm.slane %v3933, 0
        %v3937 = vmul.f32 %v3896, %v3935
        %v3938 = vmul.f32 %v3897, %v3935
        %v3939 = vmul.f32 %v3898, %v3935
        %v3940 = vmul.f32 %v3899, %v3935
        %v3941 = vmul.f32 %v3900, %v3935
        %v3942 = vmul.f32 %v3901, %v3935
        %v3943 = vmul.f32 %v3902, %v3935
        %v3944 = vmul.f32 %v3903, %v3935
        %v3945 = vmul.f32 %v3904, %v3935
        %v3946 = vmul.f32 %v3905, %v3935
        %v3947 = vmul.f32 %v3906, %v3935
        %v3948 = vmul.f32 %v3907, %v3935
        %v3949 = vmul.f32 %v3908, %v3935
        %v3950 = vmul.f32 %v3909, %v3935
        %v3951 = vmul.f32 %v3910, %v3935
        %v3952 = vmul.f32 %v3911, %v3935
        %v3953 = vmul.f32 %v3912, %v3935
        %v3954 = vmul.f32 %v3913, %v3935
        %v3955 = vmul.f32 %v3914, %v3935
        %v3956 = vmul.f32 %v3915, %v3935
        %v3957 = vmul.f32 %v3916, %v3935
        %v3958 = vmul.f32 %v3917, %v3935
        %v3959 = vmul.f32 %v3918, %v3935
        %v3960 = vmul.f32 %v3919, %v3935
        %v3961 = vmul.f32 %v3920, %v3935
        %v3962 = vmul.f32 %v3921, %v3935
        %v3963 = vmul.f32 %v3922, %v3935
        %v3964 = vmul.f32 %v3923, %v3935
        %v3965 = vmul.f32 %v3924, %v3935
        %v3966 = vmul.f32 %v3925, %v3935
        %v3967 = vmul.f32 %v3926, %v3935
        %v3968 = vmul.f32 %v3927, %v3935
        %v3969 = vadd.f32 %v3864, %v3937
        %v3970 = vadd.f32 %v3865, %v3938
        %v3971 = vadd.f32 %v3866, %v3939
        %v3972 = vadd.f32 %v3867, %v3940
        %v3973 = vadd.f32 %v3868, %v3941
        %v3974 = vadd.f32 %v3869, %v3942
        %v3975 = vadd.f32 %v3870, %v3943
        %v3976 = vadd.f32 %v3871, %v3944
        %v3977 = vadd.f32 %v3872, %v3945
        %v3978 = vadd.f32 %v3873, %v3946
        %v3979 = vadd.f32 %v3874, %v3947
        %v3980 = vadd.f32 %v3875, %v3948
        %v3981 = vadd.f32 %v3876, %v3949
        %v3982 = vadd.f32 %v3877, %v3950
        %v3983 = vadd.f32 %v3878, %v3951
        %v3984 = vadd.f32 %v3879, %v3952
        %v3985 = vadd.f32 %v3880, %v3953
        %v3986 = vadd.f32 %v3881, %v3954
        %v3987 = vadd.f32 %v3882, %v3955
        %v3988 = vadd.f32 %v3883, %v3956
        %v3989 = vadd.f32 %v3884, %v3957
        %v3990 = vadd.f32 %v3885, %v3958
        %v3991 = vadd.f32 %v3886, %v3959
        %v3992 = vadd.f32 %v3887, %v3960
        %v3993 = vadd.f32 %v3888, %v3961
        %v3994 = vadd.f32 %v3889, %v3962
        %v3995 = vadd.f32 %v3890, %v3963
        %v3996 = vadd.f32 %v3891, %v3964
        %v3997 = vadd.f32 %v3892, %v3965
        %v3998 = vadd.f32 %v3893, %v3966
        %v3999 = vadd.f32 %v3894, %v3967
        %v4000 = vadd.f32 %v3895, %v3968
        %s4001 = scalar_lea.vmem %s3, 5
        %v4002 = vld [vmem:[%s4001] sm:$0x1]
        %v4004 = vperm.slane %v4002, 0
        %v4006 = vmul.f32 %v3898, %v4004
        %v4007 = vmul.f32 %v3899, %v4004
        %v4008 = vmul.f32 %v3900, %v4004
        %v4009 = vmul.f32 %v3901, %v4004
        %v4010 = vmul.f32 %v3902, %v4004
        %v4011 = vmul.f32 %v3903, %v4004
        %v4012 = vmul.f32 %v3904, %v4004
        %v4013 = vmul.f32 %v3905, %v4004
        %v4014 = vmul.f32 %v3906, %v4004
        %v4015 = vmul.f32 %v3907, %v4004
        %v4016 = vmul.f32 %v3908, %v4004
        %v4017 = vmul.f32 %v3909, %v4004
        %v4018 = vmul.f32 %v3910, %v4004
        %v4019 = vmul.f32 %v3911, %v4004
        %v4020 = vmul.f32 %v3912, %v4004
        %v4021 = vmul.f32 %v3913, %v4004
        %v4022 = vmul.f32 %v3914, %v4004
        %v4023 = vmul.f32 %v3915, %v4004
        %v4024 = vmul.f32 %v3916, %v4004
        %v4025 = vmul.f32 %v3917, %v4004
        %v4026 = vmul.f32 %v3918, %v4004
        %v4027 = vmul.f32 %v3919, %v4004
        %v4028 = vmul.f32 %v3920, %v4004
        %v4029 = vmul.f32 %v3921, %v4004
        %v4030 = vmul.f32 %v3922, %v4004
        %v4031 = vmul.f32 %v3923, %v4004
        %v4032 = vmul.f32 %v3924, %v4004
        %v4033 = vmul.f32 %v3925, %v4004
        %v4034 = vmul.f32 %v3926, %v4004
        %v4035 = vmul.f32 %v3927, %v4004
        %v4036 = vmul.f32 %v3928, %v4004
        %v4037 = vmul.f32 %v3929, %v4004
        %v4038 = vadd.f32 %v3969, %v4006
        %v4039 = vadd.f32 %v3970, %v4007
        %v4040 = vadd.f32 %v3971, %v4008
        %v4041 = vadd.f32 %v3972, %v4009
        %v4042 = vadd.f32 %v3973, %v4010
        %v4043 = vadd.f32 %v3974, %v4011
        %v4044 = vadd.f32 %v3975, %v4012
        %v4045 = vadd.f32 %v3976, %v4013
        %v4046 = vadd.f32 %v3977, %v4014
        %v4047 = vadd.f32 %v3978, %v4015
        %v4048 = vadd.f32 %v3979, %v4016
        %v4049 = vadd.f32 %v3980, %v4017
        %v4050 = vadd.f32 %v3981, %v4018
        %v4051 = vadd.f32 %v3982, %v4019
        %v4052 = vadd.f32 %v3983, %v4020
        %v4053 = vadd.f32 %v3984, %v4021
        %v4054 = vadd.f32 %v3985, %v4022
        %v4055 = vadd.f32 %v3986, %v4023
        %v4056 = vadd.f32 %v3987, %v4024
        %v4057 = vadd.f32 %v3988, %v4025
        %v4058 = vadd.f32 %v3989, %v4026
        %v4059 = vadd.f32 %v3990, %v4027
        %v4060 = vadd.f32 %v3991, %v4028
        %v4061 = vadd.f32 %v3992, %v4029
        %v4062 = vadd.f32 %v3993, %v4030
        %v4063 = vadd.f32 %v3994, %v4031
        %v4064 = vadd.f32 %v3995, %v4032
        %v4065 = vadd.f32 %v3996, %v4033
        %v4066 = vadd.f32 %v3997, %v4034
        %v4067 = vadd.f32 %v3998, %v4035
        %v4068 = vadd.f32 %v3999, %v4036
        %v4069 = vadd.f32 %v4000, %v4037
        %s4070 = scalar_lea.vmem %s3, 8
        %v4071 = vld [vmem:[%s4070] sm:$0x1]
        %v4073 = vperm.slane %v4071, 0
        %v4075 = vmul.f32 %v3900, %v4073
        %v4076 = vmul.f32 %v3901, %v4073
        %v4077 = vmul.f32 %v3902, %v4073
        %v4078 = vmul.f32 %v3903, %v4073
        %v4079 = vmul.f32 %v3904, %v4073
        %v4080 = vmul.f32 %v3905, %v4073
        %v4081 = vmul.f32 %v3906, %v4073
        %v4082 = vmul.f32 %v3907, %v4073
        %v4083 = vmul.f32 %v3908, %v4073
        %v4084 = vmul.f32 %v3909, %v4073
        %v4085 = vmul.f32 %v3910, %v4073
        %v4086 = vmul.f32 %v3911, %v4073
        %v4087 = vmul.f32 %v3912, %v4073
        %v4088 = vmul.f32 %v3913, %v4073
        %v4089 = vmul.f32 %v3914, %v4073
        %v4090 = vmul.f32 %v3915, %v4073
        %v4091 = vmul.f32 %v3916, %v4073
        %v4092 = vmul.f32 %v3917, %v4073
        %v4093 = vmul.f32 %v3918, %v4073
        %v4094 = vmul.f32 %v3919, %v4073
        %v4095 = vmul.f32 %v3920, %v4073
        %v4096 = vmul.f32 %v3921, %v4073
        %v4097 = vmul.f32 %v3922, %v4073
        %v4098 = vmul.f32 %v3923, %v4073
        %v4099 = vmul.f32 %v3924, %v4073
        %v4100 = vmul.f32 %v3925, %v4073
        %v4101 = vmul.f32 %v3926, %v4073
        %v4102 = vmul.f32 %v3927, %v4073
        %v4103 = vmul.f32 %v3928, %v4073
        %v4104 = vmul.f32 %v3929, %v4073
        %v4105 = vmul.f32 %v3930, %v4073
        %v4106 = vmul.f32 %v3931, %v4073
        %v4107 = vadd.f32 %v4038, %v4075
        %v4108 = vadd.f32 %v4039, %v4076
        %v4109 = vadd.f32 %v4040, %v4077
        %v4110 = vadd.f32 %v4041, %v4078
        %v4111 = vadd.f32 %v4042, %v4079
        %v4112 = vadd.f32 %v4043, %v4080
        %v4113 = vadd.f32 %v4044, %v4081
        %v4114 = vadd.f32 %v4045, %v4082
        %v4115 = vadd.f32 %v4046, %v4083
        %v4116 = vadd.f32 %v4047, %v4084
        %v4117 = vadd.f32 %v4048, %v4085
        %v4118 = vadd.f32 %v4049, %v4086
        %v4119 = vadd.f32 %v4050, %v4087
        %v4120 = vadd.f32 %v4051, %v4088
        %v4121 = vadd.f32 %v4052, %v4089
        %v4122 = vadd.f32 %v4053, %v4090
        %v4123 = vadd.f32 %v4054, %v4091
        %v4124 = vadd.f32 %v4055, %v4092
        %v4125 = vadd.f32 %v4056, %v4093
        %v4126 = vadd.f32 %v4057, %v4094
        %v4127 = vadd.f32 %v4058, %v4095
        %v4128 = vadd.f32 %v4059, %v4096
        %v4129 = vadd.f32 %v4060, %v4097
        %v4130 = vadd.f32 %v4061, %v4098
        %v4131 = vadd.f32 %v4062, %v4099
        %v4132 = vadd.f32 %v4063, %v4100
        %v4133 = vadd.f32 %v4064, %v4101
        %v4134 = vadd.f32 %v4065, %v4102
        %v4135 = vadd.f32 %v4066, %v4103
        %v4136 = vadd.f32 %v4067, %v4104
        %v4137 = vadd.f32 %v4068, %v4105
        %v4138 = vadd.f32 %v4069, %v4106
        %v4139 = vsel %vm434, %v4107, 0.0
        %4140 = vadd.xlane.f32.xlu0 %v4139
        %v4141 = vpop.xlane.xlu0 %4140
        %v4142 = vsel %vm434, %v4108, 0.0
        %4143 = vadd.xlane.f32.xlu0 %v4142
        %v4144 = vpop.xlane.xlu0 %4143
        %v4145 = vsel %vm434, %v4109, 0.0
        %4146 = vadd.xlane.f32.xlu0 %v4145
        %v4147 = vpop.xlane.xlu0 %4146
        %v4148 = vsel %vm434, %v4110, 0.0
        %4149 = vadd.xlane.f32.xlu0 %v4148
        %v4150 = vpop.xlane.xlu0 %4149
        %v4151 = vsel %vm434, %v4111, 0.0
        %4152 = vadd.xlane.f32.xlu0 %v4151
        %v4153 = vpop.xlane.xlu0 %4152
        %v4154 = vsel %vm434, %v4112, 0.0
        %4155 = vadd.xlane.f32.xlu0 %v4154
        %v4156 = vpop.xlane.xlu0 %4155
        %v4157 = vsel %vm434, %v4113, 0.0
        %4158 = vadd.xlane.f32.xlu0 %v4157
        %v4159 = vpop.xlane.xlu0 %4158
        %v4160 = vsel %vm434, %v4114, 0.0
        %4161 = vadd.xlane.f32.xlu0 %v4160
        %v4162 = vpop.xlane.xlu0 %4161
        %v4163 = vsel %vm434, %v4115, 0.0
        %4164 = vadd.xlane.f32.xlu0 %v4163
        %v4165 = vpop.xlane.xlu0 %4164
        %v4166 = vsel %vm434, %v4116, 0.0
        %4167 = vadd.xlane.f32.xlu0 %v4166
        %v4168 = vpop.xlane.xlu0 %4167
        %v4169 = vsel %vm434, %v4117, 0.0
        %4170 = vadd.xlane.f32.xlu0 %v4169
        %v4171 = vpop.xlane.xlu0 %4170
        %v4172 = vsel %vm434, %v4118, 0.0
        %4173 = vadd.xlane.f32.xlu0 %v4172
        %v4174 = vpop.xlane.xlu0 %4173
        %v4175 = vsel %vm434, %v4119, 0.0
        %4176 = vadd.xlane.f32.xlu0 %v4175
        %v4177 = vpop.xlane.xlu0 %4176
        %v4178 = vsel %vm434, %v4120, 0.0
        %4179 = vadd.xlane.f32.xlu0 %v4178
        %v4180 = vpop.xlane.xlu0 %4179
        %v4181 = vsel %vm434, %v4121, 0.0
        %4182 = vadd.xlane.f32.xlu0 %v4181
        %v4183 = vpop.xlane.xlu0 %4182
        %v4184 = vsel %vm434, %v4122, 0.0
        %4185 = vadd.xlane.f32.xlu0 %v4184
        %v4186 = vpop.xlane.xlu0 %4185
        %v4187 = vsel %vm434, %v4123, 0.0
        %4188 = vadd.xlane.f32.xlu0 %v4187
        %v4189 = vpop.xlane.xlu0 %4188
        %v4190 = vsel %vm434, %v4124, 0.0
        %4191 = vadd.xlane.f32.xlu0 %v4190
        %v4192 = vpop.xlane.xlu0 %4191
        %v4193 = vsel %vm434, %v4125, 0.0
        %4194 = vadd.xlane.f32.xlu0 %v4193
        %v4195 = vpop.xlane.xlu0 %4194
        %v4196 = vsel %vm434, %v4126, 0.0
        %4197 = vadd.xlane.f32.xlu0 %v4196
        %v4198 = vpop.xlane.xlu0 %4197
        %v4199 = vsel %vm434, %v4127, 0.0
        %4200 = vadd.xlane.f32.xlu0 %v4199
        %v4201 = vpop.xlane.xlu0 %4200
        %v4202 = vsel %vm434, %v4128, 0.0
        %4203 = vadd.xlane.f32.xlu0 %v4202
        %v4204 = vpop.xlane.xlu0 %4203
        %v4205 = vsel %vm434, %v4129, 0.0
        %4206 = vadd.xlane.f32.xlu0 %v4205
        %v4207 = vpop.xlane.xlu0 %4206
        %v4208 = vsel %vm434, %v4130, 0.0
        %4209 = vadd.xlane.f32.xlu0 %v4208
        %v4210 = vpop.xlane.xlu0 %4209
        %v4211 = vsel %vm434, %v4131, 0.0
        %4212 = vadd.xlane.f32.xlu0 %v4211
        %v4213 = vpop.xlane.xlu0 %4212
        %v4214 = vsel %vm434, %v4132, 0.0
        %4215 = vadd.xlane.f32.xlu0 %v4214
        %v4216 = vpop.xlane.xlu0 %4215
        %v4217 = vsel %vm434, %v4133, 0.0
        %4218 = vadd.xlane.f32.xlu0 %v4217
        %v4219 = vpop.xlane.xlu0 %4218
        %v4220 = vsel %vm434, %v4134, 0.0
        %4221 = vadd.xlane.f32.xlu0 %v4220
        %v4222 = vpop.xlane.xlu0 %4221
        %v4223 = vsel %vm434, %v4135, 0.0
        %4224 = vadd.xlane.f32.xlu0 %v4223
        %v4225 = vpop.xlane.xlu0 %4224
        %v4226 = vsel %vm434, %v4136, 0.0
        %4227 = vadd.xlane.f32.xlu0 %v4226
        %v4228 = vpop.xlane.xlu0 %4227
        %v4229 = vsel %vm434, %v4137, 0.0
        %4230 = vadd.xlane.f32.xlu0 %v4229
        %v4231 = vpop.xlane.xlu0 %4230
        %v4232 = vsel %vm434, %v4138, 0.0
        %4233 = vadd.xlane.f32.xlu0 %v4232
        %v4234 = vpop.xlane.xlu0 %4233
        %v4235 = vld [vmem:[#allocation4] sm:$0x1]
        %v4237 = vperm.slane %v4235, 0
        %v4239 = vadd.f32 %v4141, %v4237
        %v4240 = vadd.f32 %v4144, %v4237
        %v4241 = vadd.f32 %v4147, %v4237
        %v4242 = vadd.f32 %v4150, %v4237
        %v4243 = vadd.f32 %v4153, %v4237
        %v4244 = vadd.f32 %v4156, %v4237
        %v4245 = vadd.f32 %v4159, %v4237
        %v4246 = vadd.f32 %v4162, %v4237
        %v4247 = vadd.f32 %v4165, %v4237
        %v4248 = vadd.f32 %v4168, %v4237
        %v4249 = vadd.f32 %v4171, %v4237
        %v4250 = vadd.f32 %v4174, %v4237
        %v4251 = vadd.f32 %v4177, %v4237
        %v4252 = vadd.f32 %v4180, %v4237
        %v4253 = vadd.f32 %v4183, %v4237
        %v4254 = vadd.f32 %v4186, %v4237
        %v4255 = vadd.f32 %v4189, %v4237
        %v4256 = vadd.f32 %v4192, %v4237
        %v4257 = vadd.f32 %v4195, %v4237
        %v4258 = vadd.f32 %v4198, %v4237
        %v4259 = vadd.f32 %v4201, %v4237
        %v4260 = vadd.f32 %v4204, %v4237
        %v4261 = vadd.f32 %v4207, %v4237
        %v4262 = vadd.f32 %v4210, %v4237
        %v4263 = vadd.f32 %v4213, %v4237
        %v4264 = vadd.f32 %v4216, %v4237
        %v4265 = vadd.f32 %v4219, %v4237
        %v4266 = vadd.f32 %v4222, %v4237
        %v4267 = vadd.f32 %v4225, %v4237
        %v4268 = vadd.f32 %v4228, %v4237
        %v4269 = vadd.f32 %v4231, %v4237
        %v4270 = vadd.f32 %v4234, %v4237
        %v4271 = vxor.u32 %v4239, 2147483648
        %v4272 = vxor.u32 %v4240, 2147483648
        %v4273 = vxor.u32 %v4241, 2147483648
        %v4274 = vxor.u32 %v4242, 2147483648
        %v4275 = vxor.u32 %v4243, 2147483648
        %v4276 = vxor.u32 %v4244, 2147483648
        %v4277 = vxor.u32 %v4245, 2147483648
        %v4278 = vxor.u32 %v4246, 2147483648
        %v4279 = vxor.u32 %v4247, 2147483648
        %v4280 = vxor.u32 %v4248, 2147483648
        %v4281 = vxor.u32 %v4249, 2147483648
        %v4282 = vxor.u32 %v4250, 2147483648
        %v4283 = vxor.u32 %v4251, 2147483648
        %v4284 = vxor.u32 %v4252, 2147483648
        %v4285 = vxor.u32 %v4253, 2147483648
        %v4286 = vxor.u32 %v4254, 2147483648
        %v4287 = vxor.u32 %v4255, 2147483648
        %v4288 = vxor.u32 %v4256, 2147483648
        %v4289 = vxor.u32 %v4257, 2147483648
        %v4290 = vxor.u32 %v4258, 2147483648
        %v4291 = vxor.u32 %v4259, 2147483648
        %v4292 = vxor.u32 %v4260, 2147483648
        %v4293 = vxor.u32 %v4261, 2147483648
        %v4294 = vxor.u32 %v4262, 2147483648
        %v4295 = vxor.u32 %v4263, 2147483648
        %v4296 = vxor.u32 %v4264, 2147483648
        %v4297 = vxor.u32 %v4265, 2147483648
        %v4298 = vxor.u32 %v4266, 2147483648
        %v4299 = vxor.u32 %v4267, 2147483648
        %v4300 = vxor.u32 %v4268, 2147483648
        %v4301 = vxor.u32 %v4269, 2147483648
        %v4302 = vxor.u32 %v4270, 2147483648
        %v4303 = vmul.f32 %v4271, 1.442695
        %v4304 = vpow.pop %v4303
        %v4305 = vmul.f32 %v4272, 1.442695
        %v4306 = vpow.pop %v4305
        %v4307 = vmul.f32 %v4273, 1.442695
        %v4308 = vpow.pop %v4307
        %v4309 = vmul.f32 %v4274, 1.442695
        %v4310 = vpow.pop %v4309
        %v4311 = vmul.f32 %v4275, 1.442695
        %v4312 = vpow.pop %v4311
        %v4313 = vmul.f32 %v4276, 1.442695
        %v4314 = vpow.pop %v4313
        %v4315 = vmul.f32 %v4277, 1.442695
        %v4316 = vpow.pop %v4315
        %v4317 = vmul.f32 %v4278, 1.442695
        %v4318 = vpow.pop %v4317
        %v4319 = vmul.f32 %v4279, 1.442695
        %v4320 = vpow.pop %v4319
        %v4321 = vmul.f32 %v4280, 1.442695
        %v4322 = vpow.pop %v4321
        %v4323 = vmul.f32 %v4281, 1.442695
        %v4324 = vpow.pop %v4323
        %v4325 = vmul.f32 %v4282, 1.442695
        %v4326 = vpow.pop %v4325
        %v4327 = vmul.f32 %v4283, 1.442695
        %v4328 = vpow.pop %v4327
        %v4329 = vmul.f32 %v4284, 1.442695
        %v4330 = vpow.pop %v4329
        %v4331 = vmul.f32 %v4285, 1.442695
        %v4332 = vpow.pop %v4331
        %v4333 = vmul.f32 %v4286, 1.442695
        %v4334 = vpow.pop %v4333
        %v4335 = vmul.f32 %v4287, 1.442695
        %v4336 = vpow.pop %v4335
        %v4337 = vmul.f32 %v4288, 1.442695
        %v4338 = vpow.pop %v4337
        %v4339 = vmul.f32 %v4289, 1.442695
        %v4340 = vpow.pop %v4339
        %v4341 = vmul.f32 %v4290, 1.442695
        %v4342 = vpow.pop %v4341
        %v4343 = vmul.f32 %v4291, 1.442695
        %v4344 = vpow.pop %v4343
        %v4345 = vmul.f32 %v4292, 1.442695
        %v4346 = vpow.pop %v4345
        %v4347 = vmul.f32 %v4293, 1.442695
        %v4348 = vpow.pop %v4347
        %v4349 = vmul.f32 %v4294, 1.442695
        %v4350 = vpow.pop %v4349
        %v4351 = vmul.f32 %v4295, 1.442695
        %v4352 = vpow.pop %v4351
        %v4353 = vmul.f32 %v4296, 1.442695
        %v4354 = vpow.pop %v4353
        %v4355 = vmul.f32 %v4297, 1.442695
        %v4356 = vpow.pop %v4355
        %v4357 = vmul.f32 %v4298, 1.442695
        %v4358 = vpow.pop %v4357
        %v4359 = vmul.f32 %v4299, 1.442695
        %v4360 = vpow.pop %v4359
        %v4361 = vmul.f32 %v4300, 1.442695
        %v4362 = vpow.pop %v4361
        %v4363 = vmul.f32 %v4301, 1.442695
        %v4364 = vpow.pop %v4363
        %v4365 = vmul.f32 %v4302, 1.442695
        %v4366 = vpow.pop %v4365
        %v4367 = vadd.f32 %v4304, 1.0
        %v4368 = vadd.f32 %v4306, 1.0
        %v4369 = vadd.f32 %v4308, 1.0
        %v4370 = vadd.f32 %v4310, 1.0
        %v4371 = vadd.f32 %v4312, 1.0
        %v4372 = vadd.f32 %v4314, 1.0
        %v4373 = vadd.f32 %v4316, 1.0
        %v4374 = vadd.f32 %v4318, 1.0
        %v4375 = vadd.f32 %v4320, 1.0
        %v4376 = vadd.f32 %v4322, 1.0
        %v4377 = vadd.f32 %v4324, 1.0
        %v4378 = vadd.f32 %v4326, 1.0
        %v4379 = vadd.f32 %v4328, 1.0
        %v4380 = vadd.f32 %v4330, 1.0
        %v4381 = vadd.f32 %v4332, 1.0
        %v4382 = vadd.f32 %v4334, 1.0
        %v4383 = vadd.f32 %v4336, 1.0
        %v4384 = vadd.f32 %v4338, 1.0
        %v4385 = vadd.f32 %v4340, 1.0
        %v4386 = vadd.f32 %v4342, 1.0
        %v4387 = vadd.f32 %v4344, 1.0
        %v4388 = vadd.f32 %v4346, 1.0
        %v4389 = vadd.f32 %v4348, 1.0
        %v4390 = vadd.f32 %v4350, 1.0
        %v4391 = vadd.f32 %v4352, 1.0
        %v4392 = vadd.f32 %v4354, 1.0
        %v4393 = vadd.f32 %v4356, 1.0
        %v4394 = vadd.f32 %v4358, 1.0
        %v4395 = vadd.f32 %v4360, 1.0
        %v4396 = vadd.f32 %v4362, 1.0
        %v4397 = vadd.f32 %v4364, 1.0
        %v4398 = vadd.f32 %v4366, 1.0
        %v4399 = vrcp.pop %v4367
        %v4400 = vmul.f32 %v4367, %v4399
        %v4401 = vsub.f32 1.0, %v4400
        %v4402 = vmul.f32 %v4399, %v4401
        %v4403 = vadd.f32 %v4399, %v4402
        %vm4404 = vweird.f32 %v4367
        %vm4405 = vweird.f32 %v4399
        %vm4406 = vmor %vm4404, %vm4405
        %v4407 = vsel %vm4406, %v4399, %v4403
        %v4408 = vand.u32 2147483647, %v4367
        %vm4409 = vcmp.eq.f32.partialorder %v4408, 8.507059e+37
        %v4410 = vand.u32 %v4367, 2147483648
        %v4411 = vor.u32 1.1754944e-38, %v4410
        %v4412 = vsel %vm4409, %v4411, %v4407
        %v4413 = vmul.f32 1.0, %v4412
        %v4414 = vrcp.pop %v4368
        %v4415 = vmul.f32 %v4368, %v4414
        %v4416 = vsub.f32 1.0, %v4415
        %v4417 = vmul.f32 %v4414, %v4416
        %v4418 = vadd.f32 %v4414, %v4417
        %vm4419 = vweird.f32 %v4368
        %vm4420 = vweird.f32 %v4414
        %vm4421 = vmor %vm4419, %vm4420
        %v4422 = vsel %vm4421, %v4414, %v4418
        %v4423 = vand.u32 2147483647, %v4368
        %vm4424 = vcmp.eq.f32.partialorder %v4423, 8.507059e+37
        %v4425 = vand.u32 %v4368, 2147483648
        %v4426 = vor.u32 1.1754944e-38, %v4425
        %v4427 = vsel %vm4424, %v4426, %v4422
        %v4428 = vmul.f32 1.0, %v4427
        %v4429 = vrcp.pop %v4369
        %v4430 = vmul.f32 %v4369, %v4429
        %v4431 = vsub.f32 1.0, %v4430
        %v4432 = vmul.f32 %v4429, %v4431
        %v4433 = vadd.f32 %v4429, %v4432
        %vm4434 = vweird.f32 %v4369
        %vm4435 = vweird.f32 %v4429
        %vm4436 = vmor %vm4434, %vm4435
        %v4437 = vsel %vm4436, %v4429, %v4433
        %v4438 = vand.u32 2147483647, %v4369
        %vm4439 = vcmp.eq.f32.partialorder %v4438, 8.507059e+37
        %v4440 = vand.u32 %v4369, 2147483648
        %v4441 = vor.u32 1.1754944e-38, %v4440
        %v4442 = vsel %vm4439, %v4441, %v4437
        %v4443 = vmul.f32 1.0, %v4442
        %v4444 = vrcp.pop %v4370
        %v4445 = vmul.f32 %v4370, %v4444
        %v4446 = vsub.f32 1.0, %v4445
        %v4447 = vmul.f32 %v4444, %v4446
        %v4448 = vadd.f32 %v4444, %v4447
        %vm4449 = vweird.f32 %v4370
        %vm4450 = vweird.f32 %v4444
        %vm4451 = vmor %vm4449, %vm4450
        %v4452 = vsel %vm4451, %v4444, %v4448
        %v4453 = vand.u32 2147483647, %v4370
        %vm4454 = vcmp.eq.f32.partialorder %v4453, 8.507059e+37
        %v4455 = vand.u32 %v4370, 2147483648
        %v4456 = vor.u32 1.1754944e-38, %v4455
        %v4457 = vsel %vm4454, %v4456, %v4452
        %v4458 = vmul.f32 1.0, %v4457
        %v4459 = vrcp.pop %v4371
        %v4460 = vmul.f32 %v4371, %v4459
        %v4461 = vsub.f32 1.0, %v4460
        %v4462 = vmul.f32 %v4459, %v4461
        %v4463 = vadd.f32 %v4459, %v4462
        %vm4464 = vweird.f32 %v4371
        %vm4465 = vweird.f32 %v4459
        %vm4466 = vmor %vm4464, %vm4465
        %v4467 = vsel %vm4466, %v4459, %v4463
        %v4468 = vand.u32 2147483647, %v4371
        %vm4469 = vcmp.eq.f32.partialorder %v4468, 8.507059e+37
        %v4470 = vand.u32 %v4371, 2147483648
        %v4471 = vor.u32 1.1754944e-38, %v4470
        %v4472 = vsel %vm4469, %v4471, %v4467
        %v4473 = vmul.f32 1.0, %v4472
        %v4474 = vrcp.pop %v4372
        %v4475 = vmul.f32 %v4372, %v4474
        %v4476 = vsub.f32 1.0, %v4475
        %v4477 = vmul.f32 %v4474, %v4476
        %v4478 = vadd.f32 %v4474, %v4477
        %vm4479 = vweird.f32 %v4372
        %vm4480 = vweird.f32 %v4474
        %vm4481 = vmor %vm4479, %vm4480
        %v4482 = vsel %vm4481, %v4474, %v4478
        %v4483 = vand.u32 2147483647, %v4372
        %vm4484 = vcmp.eq.f32.partialorder %v4483, 8.507059e+37
        %v4485 = vand.u32 %v4372, 2147483648
        %v4486 = vor.u32 1.1754944e-38, %v4485
        %v4487 = vsel %vm4484, %v4486, %v4482
        %v4488 = vmul.f32 1.0, %v4487
        %v4489 = vrcp.pop %v4373
        %v4490 = vmul.f32 %v4373, %v4489
        %v4491 = vsub.f32 1.0, %v4490
        %v4492 = vmul.f32 %v4489, %v4491
        %v4493 = vadd.f32 %v4489, %v4492
        %vm4494 = vweird.f32 %v4373
        %vm4495 = vweird.f32 %v4489
        %vm4496 = vmor %vm4494, %vm4495
        %v4497 = vsel %vm4496, %v4489, %v4493
        %v4498 = vand.u32 2147483647, %v4373
        %vm4499 = vcmp.eq.f32.partialorder %v4498, 8.507059e+37
        %v4500 = vand.u32 %v4373, 2147483648
        %v4501 = vor.u32 1.1754944e-38, %v4500
        %v4502 = vsel %vm4499, %v4501, %v4497
        %v4503 = vmul.f32 1.0, %v4502
        %v4504 = vrcp.pop %v4374
        %v4505 = vmul.f32 %v4374, %v4504
        %v4506 = vsub.f32 1.0, %v4505
        %v4507 = vmul.f32 %v4504, %v4506
        %v4508 = vadd.f32 %v4504, %v4507
        %vm4509 = vweird.f32 %v4374
        %vm4510 = vweird.f32 %v4504
        %vm4511 = vmor %vm4509, %vm4510
        %v4512 = vsel %vm4511, %v4504, %v4508
        %v4513 = vand.u32 2147483647, %v4374
        %vm4514 = vcmp.eq.f32.partialorder %v4513, 8.507059e+37
        %v4515 = vand.u32 %v4374, 2147483648
        %v4516 = vor.u32 1.1754944e-38, %v4515
        %v4517 = vsel %vm4514, %v4516, %v4512
        %v4518 = vmul.f32 1.0, %v4517
        %v4519 = vrcp.pop %v4375
        %v4520 = vmul.f32 %v4375, %v4519
        %v4521 = vsub.f32 1.0, %v4520
        %v4522 = vmul.f32 %v4519, %v4521
        %v4523 = vadd.f32 %v4519, %v4522
        %vm4524 = vweird.f32 %v4375
        %vm4525 = vweird.f32 %v4519
        %vm4526 = vmor %vm4524, %vm4525
        %v4527 = vsel %vm4526, %v4519, %v4523
        %v4528 = vand.u32 2147483647, %v4375
        %vm4529 = vcmp.eq.f32.partialorder %v4528, 8.507059e+37
        %v4530 = vand.u32 %v4375, 2147483648
        %v4531 = vor.u32 1.1754944e-38, %v4530
        %v4532 = vsel %vm4529, %v4531, %v4527
        %v4533 = vmul.f32 1.0, %v4532
        %v4534 = vrcp.pop %v4376
        %v4535 = vmul.f32 %v4376, %v4534
        %v4536 = vsub.f32 1.0, %v4535
        %v4537 = vmul.f32 %v4534, %v4536
        %v4538 = vadd.f32 %v4534, %v4537
        %vm4539 = vweird.f32 %v4376
        %vm4540 = vweird.f32 %v4534
        %vm4541 = vmor %vm4539, %vm4540
        %v4542 = vsel %vm4541, %v4534, %v4538
        %v4543 = vand.u32 2147483647, %v4376
        %vm4544 = vcmp.eq.f32.partialorder %v4543, 8.507059e+37
        %v4545 = vand.u32 %v4376, 2147483648
        %v4546 = vor.u32 1.1754944e-38, %v4545
        %v4547 = vsel %vm4544, %v4546, %v4542
        %v4548 = vmul.f32 1.0, %v4547
        %v4549 = vrcp.pop %v4377
        %v4550 = vmul.f32 %v4377, %v4549
        %v4551 = vsub.f32 1.0, %v4550
        %v4552 = vmul.f32 %v4549, %v4551
        %v4553 = vadd.f32 %v4549, %v4552
        %vm4554 = vweird.f32 %v4377
        %vm4555 = vweird.f32 %v4549
        %vm4556 = vmor %vm4554, %vm4555
        %v4557 = vsel %vm4556, %v4549, %v4553
        %v4558 = vand.u32 2147483647, %v4377
        %vm4559 = vcmp.eq.f32.partialorder %v4558, 8.507059e+37
        %v4560 = vand.u32 %v4377, 2147483648
        %v4561 = vor.u32 1.1754944e-38, %v4560
        %v4562 = vsel %vm4559, %v4561, %v4557
        %v4563 = vmul.f32 1.0, %v4562
        %v4564 = vrcp.pop %v4378
        %v4565 = vmul.f32 %v4378, %v4564
        %v4566 = vsub.f32 1.0, %v4565
        %v4567 = vmul.f32 %v4564, %v4566
        %v4568 = vadd.f32 %v4564, %v4567
        %vm4569 = vweird.f32 %v4378
        %vm4570 = vweird.f32 %v4564
        %vm4571 = vmor %vm4569, %vm4570
        %v4572 = vsel %vm4571, %v4564, %v4568
        %v4573 = vand.u32 2147483647, %v4378
        %vm4574 = vcmp.eq.f32.partialorder %v4573, 8.507059e+37
        %v4575 = vand.u32 %v4378, 2147483648
        %v4576 = vor.u32 1.1754944e-38, %v4575
        %v4577 = vsel %vm4574, %v4576, %v4572
        %v4578 = vmul.f32 1.0, %v4577
        %v4579 = vrcp.pop %v4379
        %v4580 = vmul.f32 %v4379, %v4579
        %v4581 = vsub.f32 1.0, %v4580
        %v4582 = vmul.f32 %v4579, %v4581
        %v4583 = vadd.f32 %v4579, %v4582
        %vm4584 = vweird.f32 %v4379
        %vm4585 = vweird.f32 %v4579
        %vm4586 = vmor %vm4584, %vm4585
        %v4587 = vsel %vm4586, %v4579, %v4583
        %v4588 = vand.u32 2147483647, %v4379
        %vm4589 = vcmp.eq.f32.partialorder %v4588, 8.507059e+37
        %v4590 = vand.u32 %v4379, 2147483648
        %v4591 = vor.u32 1.1754944e-38, %v4590
        %v4592 = vsel %vm4589, %v4591, %v4587
        %v4593 = vmul.f32 1.0, %v4592
        %v4594 = vrcp.pop %v4380
        %v4595 = vmul.f32 %v4380, %v4594
        %v4596 = vsub.f32 1.0, %v4595
        %v4597 = vmul.f32 %v4594, %v4596
        %v4598 = vadd.f32 %v4594, %v4597
        %vm4599 = vweird.f32 %v4380
        %vm4600 = vweird.f32 %v4594
        %vm4601 = vmor %vm4599, %vm4600
        %v4602 = vsel %vm4601, %v4594, %v4598
        %v4603 = vand.u32 2147483647, %v4380
        %vm4604 = vcmp.eq.f32.partialorder %v4603, 8.507059e+37
        %v4605 = vand.u32 %v4380, 2147483648
        %v4606 = vor.u32 1.1754944e-38, %v4605
        %v4607 = vsel %vm4604, %v4606, %v4602
        %v4608 = vmul.f32 1.0, %v4607
        %v4609 = vrcp.pop %v4381
        %v4610 = vmul.f32 %v4381, %v4609
        %v4611 = vsub.f32 1.0, %v4610
        %v4612 = vmul.f32 %v4609, %v4611
        %v4613 = vadd.f32 %v4609, %v4612
        %vm4614 = vweird.f32 %v4381
        %vm4615 = vweird.f32 %v4609
        %vm4616 = vmor %vm4614, %vm4615
        %v4617 = vsel %vm4616, %v4609, %v4613
        %v4618 = vand.u32 2147483647, %v4381
        %vm4619 = vcmp.eq.f32.partialorder %v4618, 8.507059e+37
        %v4620 = vand.u32 %v4381, 2147483648
        %v4621 = vor.u32 1.1754944e-38, %v4620
        %v4622 = vsel %vm4619, %v4621, %v4617
        %v4623 = vmul.f32 1.0, %v4622
        %v4624 = vrcp.pop %v4382
        %v4625 = vmul.f32 %v4382, %v4624
        %v4626 = vsub.f32 1.0, %v4625
        %v4627 = vmul.f32 %v4624, %v4626
        %v4628 = vadd.f32 %v4624, %v4627
        %vm4629 = vweird.f32 %v4382
        %vm4630 = vweird.f32 %v4624
        %vm4631 = vmor %vm4629, %vm4630
        %v4632 = vsel %vm4631, %v4624, %v4628
        %v4633 = vand.u32 2147483647, %v4382
        %vm4634 = vcmp.eq.f32.partialorder %v4633, 8.507059e+37
        %v4635 = vand.u32 %v4382, 2147483648
        %v4636 = vor.u32 1.1754944e-38, %v4635
        %v4637 = vsel %vm4634, %v4636, %v4632
        %v4638 = vmul.f32 1.0, %v4637
        %v4639 = vrcp.pop %v4383
        %v4640 = vmul.f32 %v4383, %v4639
        %v4641 = vsub.f32 1.0, %v4640
        %v4642 = vmul.f32 %v4639, %v4641
        %v4643 = vadd.f32 %v4639, %v4642
        %vm4644 = vweird.f32 %v4383
        %vm4645 = vweird.f32 %v4639
        %vm4646 = vmor %vm4644, %vm4645
        %v4647 = vsel %vm4646, %v4639, %v4643
        %v4648 = vand.u32 2147483647, %v4383
        %vm4649 = vcmp.eq.f32.partialorder %v4648, 8.507059e+37
        %v4650 = vand.u32 %v4383, 2147483648
        %v4651 = vor.u32 1.1754944e-38, %v4650
        %v4652 = vsel %vm4649, %v4651, %v4647
        %v4653 = vmul.f32 1.0, %v4652
        %v4654 = vrcp.pop %v4384
        %v4655 = vmul.f32 %v4384, %v4654
        %v4656 = vsub.f32 1.0, %v4655
        %v4657 = vmul.f32 %v4654, %v4656
        %v4658 = vadd.f32 %v4654, %v4657
        %vm4659 = vweird.f32 %v4384
        %vm4660 = vweird.f32 %v4654
        %vm4661 = vmor %vm4659, %vm4660
        %v4662 = vsel %vm4661, %v4654, %v4658
        %v4663 = vand.u32 2147483647, %v4384
        %vm4664 = vcmp.eq.f32.partialorder %v4663, 8.507059e+37
        %v4665 = vand.u32 %v4384, 2147483648
        %v4666 = vor.u32 1.1754944e-38, %v4665
        %v4667 = vsel %vm4664, %v4666, %v4662
        %v4668 = vmul.f32 1.0, %v4667
        %v4669 = vrcp.pop %v4385
        %v4670 = vmul.f32 %v4385, %v4669
        %v4671 = vsub.f32 1.0, %v4670
        %v4672 = vmul.f32 %v4669, %v4671
        %v4673 = vadd.f32 %v4669, %v4672
        %vm4674 = vweird.f32 %v4385
        %vm4675 = vweird.f32 %v4669
        %vm4676 = vmor %vm4674, %vm4675
        %v4677 = vsel %vm4676, %v4669, %v4673
        %v4678 = vand.u32 2147483647, %v4385
        %vm4679 = vcmp.eq.f32.partialorder %v4678, 8.507059e+37
        %v4680 = vand.u32 %v4385, 2147483648
        %v4681 = vor.u32 1.1754944e-38, %v4680
        %v4682 = vsel %vm4679, %v4681, %v4677
        %v4683 = vmul.f32 1.0, %v4682
        %v4684 = vrcp.pop %v4386
        %v4685 = vmul.f32 %v4386, %v4684
        %v4686 = vsub.f32 1.0, %v4685
        %v4687 = vmul.f32 %v4684, %v4686
        %v4688 = vadd.f32 %v4684, %v4687
        %vm4689 = vweird.f32 %v4386
        %vm4690 = vweird.f32 %v4684
        %vm4691 = vmor %vm4689, %vm4690
        %v4692 = vsel %vm4691, %v4684, %v4688
        %v4693 = vand.u32 2147483647, %v4386
        %vm4694 = vcmp.eq.f32.partialorder %v4693, 8.507059e+37
        %v4695 = vand.u32 %v4386, 2147483648
        %v4696 = vor.u32 1.1754944e-38, %v4695
        %v4697 = vsel %vm4694, %v4696, %v4692
        %v4698 = vmul.f32 1.0, %v4697
        %v4699 = vrcp.pop %v4387
        %v4700 = vmul.f32 %v4387, %v4699
        %v4701 = vsub.f32 1.0, %v4700
        %v4702 = vmul.f32 %v4699, %v4701
        %v4703 = vadd.f32 %v4699, %v4702
        %vm4704 = vweird.f32 %v4387
        %vm4705 = vweird.f32 %v4699
        %vm4706 = vmor %vm4704, %vm4705
        %v4707 = vsel %vm4706, %v4699, %v4703
        %v4708 = vand.u32 2147483647, %v4387
        %vm4709 = vcmp.eq.f32.partialorder %v4708, 8.507059e+37
        %v4710 = vand.u32 %v4387, 2147483648
        %v4711 = vor.u32 1.1754944e-38, %v4710
        %v4712 = vsel %vm4709, %v4711, %v4707
        %v4713 = vmul.f32 1.0, %v4712
        %v4714 = vrcp.pop %v4388
        %v4715 = vmul.f32 %v4388, %v4714
        %v4716 = vsub.f32 1.0, %v4715
        %v4717 = vmul.f32 %v4714, %v4716
        %v4718 = vadd.f32 %v4714, %v4717
        %vm4719 = vweird.f32 %v4388
        %vm4720 = vweird.f32 %v4714
        %vm4721 = vmor %vm4719, %vm4720
        %v4722 = vsel %vm4721, %v4714, %v4718
        %v4723 = vand.u32 2147483647, %v4388
        %vm4724 = vcmp.eq.f32.partialorder %v4723, 8.507059e+37
        %v4725 = vand.u32 %v4388, 2147483648
        %v4726 = vor.u32 1.1754944e-38, %v4725
        %v4727 = vsel %vm4724, %v4726, %v4722
        %v4728 = vmul.f32 1.0, %v4727
        %v4729 = vrcp.pop %v4389
        %v4730 = vmul.f32 %v4389, %v4729
        %v4731 = vsub.f32 1.0, %v4730
        %v4732 = vmul.f32 %v4729, %v4731
        %v4733 = vadd.f32 %v4729, %v4732
        %vm4734 = vweird.f32 %v4389
        %vm4735 = vweird.f32 %v4729
        %vm4736 = vmor %vm4734, %vm4735
        %v4737 = vsel %vm4736, %v4729, %v4733
        %v4738 = vand.u32 2147483647, %v4389
        %vm4739 = vcmp.eq.f32.partialorder %v4738, 8.507059e+37
        %v4740 = vand.u32 %v4389, 2147483648
        %v4741 = vor.u32 1.1754944e-38, %v4740
        %v4742 = vsel %vm4739, %v4741, %v4737
        %v4743 = vmul.f32 1.0, %v4742
        %v4744 = vrcp.pop %v4390
        %v4745 = vmul.f32 %v4390, %v4744
        %v4746 = vsub.f32 1.0, %v4745
        %v4747 = vmul.f32 %v4744, %v4746
        %v4748 = vadd.f32 %v4744, %v4747
        %vm4749 = vweird.f32 %v4390
        %vm4750 = vweird.f32 %v4744
        %vm4751 = vmor %vm4749, %vm4750
        %v4752 = vsel %vm4751, %v4744, %v4748
        %v4753 = vand.u32 2147483647, %v4390
        %vm4754 = vcmp.eq.f32.partialorder %v4753, 8.507059e+37
        %v4755 = vand.u32 %v4390, 2147483648
        %v4756 = vor.u32 1.1754944e-38, %v4755
        %v4757 = vsel %vm4754, %v4756, %v4752
        %v4758 = vmul.f32 1.0, %v4757
        %v4759 = vrcp.pop %v4391
        %v4760 = vmul.f32 %v4391, %v4759
        %v4761 = vsub.f32 1.0, %v4760
        %v4762 = vmul.f32 %v4759, %v4761
        %v4763 = vadd.f32 %v4759, %v4762
        %vm4764 = vweird.f32 %v4391
        %vm4765 = vweird.f32 %v4759
        %vm4766 = vmor %vm4764, %vm4765
        %v4767 = vsel %vm4766, %v4759, %v4763
        %v4768 = vand.u32 2147483647, %v4391
        %vm4769 = vcmp.eq.f32.partialorder %v4768, 8.507059e+37
        %v4770 = vand.u32 %v4391, 2147483648
        %v4771 = vor.u32 1.1754944e-38, %v4770
        %v4772 = vsel %vm4769, %v4771, %v4767
        %v4773 = vmul.f32 1.0, %v4772
        %v4774 = vrcp.pop %v4392
        %v4775 = vmul.f32 %v4392, %v4774
        %v4776 = vsub.f32 1.0, %v4775
        %v4777 = vmul.f32 %v4774, %v4776
        %v4778 = vadd.f32 %v4774, %v4777
        %vm4779 = vweird.f32 %v4392
        %vm4780 = vweird.f32 %v4774
        %vm4781 = vmor %vm4779, %vm4780
        %v4782 = vsel %vm4781, %v4774, %v4778
        %v4783 = vand.u32 2147483647, %v4392
        %vm4784 = vcmp.eq.f32.partialorder %v4783, 8.507059e+37
        %v4785 = vand.u32 %v4392, 2147483648
        %v4786 = vor.u32 1.1754944e-38, %v4785
        %v4787 = vsel %vm4784, %v4786, %v4782
        %v4788 = vmul.f32 1.0, %v4787
        %v4789 = vrcp.pop %v4393
        %v4790 = vmul.f32 %v4393, %v4789
        %v4791 = vsub.f32 1.0, %v4790
        %v4792 = vmul.f32 %v4789, %v4791
        %v4793 = vadd.f32 %v4789, %v4792
        %vm4794 = vweird.f32 %v4393
        %vm4795 = vweird.f32 %v4789
        %vm4796 = vmor %vm4794, %vm4795
        %v4797 = vsel %vm4796, %v4789, %v4793
        %v4798 = vand.u32 2147483647, %v4393
        %vm4799 = vcmp.eq.f32.partialorder %v4798, 8.507059e+37
        %v4800 = vand.u32 %v4393, 2147483648
        %v4801 = vor.u32 1.1754944e-38, %v4800
        %v4802 = vsel %vm4799, %v4801, %v4797
        %v4803 = vmul.f32 1.0, %v4802
        %v4804 = vrcp.pop %v4394
        %v4805 = vmul.f32 %v4394, %v4804
        %v4806 = vsub.f32 1.0, %v4805
        %v4807 = vmul.f32 %v4804, %v4806
        %v4808 = vadd.f32 %v4804, %v4807
        %vm4809 = vweird.f32 %v4394
        %vm4810 = vweird.f32 %v4804
        %vm4811 = vmor %vm4809, %vm4810
        %v4812 = vsel %vm4811, %v4804, %v4808
        %v4813 = vand.u32 2147483647, %v4394
        %vm4814 = vcmp.eq.f32.partialorder %v4813, 8.507059e+37
        %v4815 = vand.u32 %v4394, 2147483648
        %v4816 = vor.u32 1.1754944e-38, %v4815
        %v4817 = vsel %vm4814, %v4816, %v4812
        %v4818 = vmul.f32 1.0, %v4817
        %v4819 = vrcp.pop %v4395
        %v4820 = vmul.f32 %v4395, %v4819
        %v4821 = vsub.f32 1.0, %v4820
        %v4822 = vmul.f32 %v4819, %v4821
        %v4823 = vadd.f32 %v4819, %v4822
        %vm4824 = vweird.f32 %v4395
        %vm4825 = vweird.f32 %v4819
        %vm4826 = vmor %vm4824, %vm4825
        %v4827 = vsel %vm4826, %v4819, %v4823
        %v4828 = vand.u32 2147483647, %v4395
        %vm4829 = vcmp.eq.f32.partialorder %v4828, 8.507059e+37
        %v4830 = vand.u32 %v4395, 2147483648
        %v4831 = vor.u32 1.1754944e-38, %v4830
        %v4832 = vsel %vm4829, %v4831, %v4827
        %v4833 = vmul.f32 1.0, %v4832
        %v4834 = vrcp.pop %v4396
        %v4835 = vmul.f32 %v4396, %v4834
        %v4836 = vsub.f32 1.0, %v4835
        %v4837 = vmul.f32 %v4834, %v4836
        %v4838 = vadd.f32 %v4834, %v4837
        %vm4839 = vweird.f32 %v4396
        %vm4840 = vweird.f32 %v4834
        %vm4841 = vmor %vm4839, %vm4840
        %v4842 = vsel %vm4841, %v4834, %v4838
        %v4843 = vand.u32 2147483647, %v4396
        %vm4844 = vcmp.eq.f32.partialorder %v4843, 8.507059e+37
        %v4845 = vand.u32 %v4396, 2147483648
        %v4846 = vor.u32 1.1754944e-38, %v4845
        %v4847 = vsel %vm4844, %v4846, %v4842
        %v4848 = vmul.f32 1.0, %v4847
        %v4849 = vrcp.pop %v4397
        %v4850 = vmul.f32 %v4397, %v4849
        %v4851 = vsub.f32 1.0, %v4850
        %v4852 = vmul.f32 %v4849, %v4851
        %v4853 = vadd.f32 %v4849, %v4852
        %vm4854 = vweird.f32 %v4397
        %vm4855 = vweird.f32 %v4849
        %vm4856 = vmor %vm4854, %vm4855
        %v4857 = vsel %vm4856, %v4849, %v4853
        %v4858 = vand.u32 2147483647, %v4397
        %vm4859 = vcmp.eq.f32.partialorder %v4858, 8.507059e+37
        %v4860 = vand.u32 %v4397, 2147483648
        %v4861 = vor.u32 1.1754944e-38, %v4860
        %v4862 = vsel %vm4859, %v4861, %v4857
        %v4863 = vmul.f32 1.0, %v4862
        %v4864 = vrcp.pop %v4398
        %v4865 = vmul.f32 %v4398, %v4864
        %v4866 = vsub.f32 1.0, %v4865
        %v4867 = vmul.f32 %v4864, %v4866
        %v4868 = vadd.f32 %v4864, %v4867
        %vm4869 = vweird.f32 %v4398
        %vm4870 = vweird.f32 %v4864
        %vm4871 = vmor %vm4869, %vm4870
        %v4872 = vsel %vm4871, %v4864, %v4868
        %v4873 = vand.u32 2147483647, %v4398
        %vm4874 = vcmp.eq.f32.partialorder %v4873, 8.507059e+37
        %v4875 = vand.u32 %v4398, 2147483648
        %v4876 = vor.u32 1.1754944e-38, %v4875
        %v4877 = vsel %vm4874, %v4876, %v4872
        %v4878 = vmul.f32 1.0, %v4877
        %4880 = vset.pattern.permute.xlu0 0
        %4881 = vperm.xlu0 %4880, %v4413
        %v4882 = vpop.permute.xlu0 %4881
        %4885 = vset.pattern.permute.xlu0 0
        %4886 = vperm.xlu0 %4885, %v4428
        %v4887 = vpop.permute.xlu0 %4886
        %4890 = vset.pattern.permute.xlu0 0
        %4891 = vperm.xlu0 %4890, %v4443
        %v4892 = vpop.permute.xlu0 %4891
        %4895 = vset.pattern.permute.xlu0 0
        %4896 = vperm.xlu0 %4895, %v4458
        %v4897 = vpop.permute.xlu0 %4896
        %4900 = vset.pattern.permute.xlu0 0
        %4901 = vperm.xlu0 %4900, %v4473
        %v4902 = vpop.permute.xlu0 %4901
        %4905 = vset.pattern.permute.xlu0 0
        %4906 = vperm.xlu0 %4905, %v4488
        %v4907 = vpop.permute.xlu0 %4906
        %4910 = vset.pattern.permute.xlu0 0
        %4911 = vperm.xlu0 %4910, %v4503
        %v4912 = vpop.permute.xlu0 %4911
        %4915 = vset.pattern.permute.xlu0 0
        %4916 = vperm.xlu0 %4915, %v4518
        %v4917 = vpop.permute.xlu0 %4916
        %4920 = vset.pattern.permute.xlu0 0
        %4921 = vperm.xlu0 %4920, %v4533
        %v4922 = vpop.permute.xlu0 %4921
        %4925 = vset.pattern.permute.xlu0 0
        %4926 = vperm.xlu0 %4925, %v4548
        %v4927 = vpop.permute.xlu0 %4926
        %4930 = vset.pattern.permute.xlu0 0
        %4931 = vperm.xlu0 %4930, %v4563
        %v4932 = vpop.permute.xlu0 %4931
        %4935 = vset.pattern.permute.xlu0 0
        %4936 = vperm.xlu0 %4935, %v4578
        %v4937 = vpop.permute.xlu0 %4936
        %4940 = vset.pattern.permute.xlu0 0
        %4941 = vperm.xlu0 %4940, %v4593
        %v4942 = vpop.permute.xlu0 %4941
        %4945 = vset.pattern.permute.xlu0 0
        %4946 = vperm.xlu0 %4945, %v4608
        %v4947 = vpop.permute.xlu0 %4946
        %4950 = vset.pattern.permute.xlu0 0
        %4951 = vperm.xlu0 %4950, %v4623
        %v4952 = vpop.permute.xlu0 %4951
        %4955 = vset.pattern.permute.xlu0 0
        %4956 = vperm.xlu0 %4955, %v4638
        %v4957 = vpop.permute.xlu0 %4956
        %4960 = vset.pattern.permute.xlu0 0
        %4961 = vperm.xlu0 %4960, %v4653
        %v4962 = vpop.permute.xlu0 %4961
        %4965 = vset.pattern.permute.xlu0 0
        %4966 = vperm.xlu0 %4965, %v4668
        %v4967 = vpop.permute.xlu0 %4966
        %4970 = vset.pattern.permute.xlu0 0
        %4971 = vperm.xlu0 %4970, %v4683
        %v4972 = vpop.permute.xlu0 %4971
        %4975 = vset.pattern.permute.xlu0 0
        %4976 = vperm.xlu0 %4975, %v4698
        %v4977 = vpop.permute.xlu0 %4976
        %4980 = vset.pattern.permute.xlu0 0
        %4981 = vperm.xlu0 %4980, %v4713
        %v4982 = vpop.permute.xlu0 %4981
        %4985 = vset.pattern.permute.xlu0 0
        %4986 = vperm.xlu0 %4985, %v4728
        %v4987 = vpop.permute.xlu0 %4986
        %4990 = vset.pattern.permute.xlu0 0
        %4991 = vperm.xlu0 %4990, %v4743
        %v4992 = vpop.permute.xlu0 %4991
        %4995 = vset.pattern.permute.xlu0 0
        %4996 = vperm.xlu0 %4995, %v4758
        %v4997 = vpop.permute.xlu0 %4996
        %5000 = vset.pattern.permute.xlu0 0
        %5001 = vperm.xlu0 %5000, %v4773
        %v5002 = vpop.permute.xlu0 %5001
        %5005 = vset.pattern.permute.xlu0 0
        %5006 = vperm.xlu0 %5005, %v4788
        %v5007 = vpop.permute.xlu0 %5006
        %5010 = vset.pattern.permute.xlu0 0
        %5011 = vperm.xlu0 %5010, %v4803
        %v5012 = vpop.permute.xlu0 %5011
        %5015 = vset.pattern.permute.xlu0 0
        %5016 = vperm.xlu0 %5015, %v4818
        %v5017 = vpop.permute.xlu0 %5016
        %5020 = vset.pattern.permute.xlu0 0
        %5021 = vperm.xlu0 %5020, %v4833
        %v5022 = vpop.permute.xlu0 %5021
        %5025 = vset.pattern.permute.xlu0 0
        %5026 = vperm.xlu0 %5025, %v4848
        %v5027 = vpop.permute.xlu0 %5026
        %5030 = vset.pattern.permute.xlu0 0
        %5031 = vperm.xlu0 %5030, %v4863
        %v5032 = vpop.permute.xlu0 %5031
        %5035 = vset.pattern.permute.xlu0 0
        %5036 = vperm.xlu0 %5035, %v4878
        %v5037 = vpop.permute.xlu0 %5036
        %v5039 = vmul.f32 %v4882, %v226
        %v5040 = vmul.f32 %v4887, %v227
        %v5041 = vmul.f32 %v4892, %v228
        %v5042 = vmul.f32 %v4897, %v229
        %v5043 = vmul.f32 %v4902, %v230
        %v5044 = vmul.f32 %v4907, %v231
        %v5045 = vmul.f32 %v4912, %v232
        %v5046 = vmul.f32 %v4917, %v233
        %v5047 = vmul.f32 %v4922, %v234
        %v5048 = vmul.f32 %v4927, %v235
        %v5049 = vmul.f32 %v4932, %v236
        %v5050 = vmul.f32 %v4937, %v237
        %v5051 = vmul.f32 %v4942, %v238
        %v5052 = vmul.f32 %v4947, %v239
        %v5053 = vmul.f32 %v4952, %v240
        %v5054 = vmul.f32 %v4957, %v241
        %v5055 = vmul.f32 %v4962, %v242
        %v5056 = vmul.f32 %v4967, %v243
        %v5057 = vmul.f32 %v4972, %v244
        %v5058 = vmul.f32 %v4977, %v245
        %v5059 = vmul.f32 %v4982, %v246
        %v5060 = vmul.f32 %v4987, %v247
        %v5061 = vmul.f32 %v4992, %v248
        %v5062 = vmul.f32 %v4997, %v249
        %v5063 = vmul.f32 %v5002, %v250
        %v5064 = vmul.f32 %v5007, %v251
        %v5065 = vmul.f32 %v5012, %v252
        %v5066 = vmul.f32 %v5017, %v253
        %v5067 = vmul.f32 %v5022, %v254
        %v5068 = vmul.f32 %v5027, %v255
        %v5069 = vmul.f32 %v5032, %v256
        %v5070 = vmul.f32 %v5037, %v257
        %5071 = vst [vmem:[%s219] sm:$0xff] %v5039
        %5072 = vst [vmem:[%s219 + $0x8] sm:$0xff] %v5040
        %5073 = vst [vmem:[%s219 + $0x10] sm:$0xff] %v5041
        %5074 = vst [vmem:[%s219 + $0x18] sm:$0xff] %v5042
        %5075 = vst [vmem:[%s219 + $0x20] sm:$0xff] %v5043
        %5076 = vst [vmem:[%s219 + $0x28] sm:$0xff] %v5044
        %5077 = vst [vmem:[%s219 + $0x30] sm:$0xff] %v5045
        %5078 = vst [vmem:[%s219 + $0x38] sm:$0xff] %v5046
        %5079 = vst [vmem:[%s219 + $0x40] sm:$0xff] %v5047
        %5080 = vst [vmem:[%s219 + $0x48] sm:$0xff] %v5048
        %5081 = vst [vmem:[%s219 + $0x50] sm:$0xff] %v5049
        %5082 = vst [vmem:[%s219 + $0x58] sm:$0xff] %v5050
        %5083 = vst [vmem:[%s219 + $0x60] sm:$0xff] %v5051
        %5084 = vst [vmem:[%s219 + $0x68] sm:$0xff] %v5052
        %5085 = vst [vmem:[%s219 + $0x70] sm:$0xff] %v5053
        %5086 = vst [vmem:[%s219 + $0x78] sm:$0xff] %v5054
        %5087 = vst [vmem:[%s219 + $0x80] sm:$0xff] %v5055
        %5088 = vst [vmem:[%s219 + $0x88] sm:$0xff] %v5056
        %5089 = vst [vmem:[%s219 + $0x90] sm:$0xff] %v5057
        %5090 = vst [vmem:[%s219 + $0x98] sm:$0xff] %v5058
        %5091 = vst [vmem:[%s219 + $0xa0] sm:$0xff] %v5059
        %5092 = vst [vmem:[%s219 + $0xa8] sm:$0xff] %v5060
        %5093 = vst [vmem:[%s219 + $0xb0] sm:$0xff] %v5061
        %5094 = vst [vmem:[%s219 + $0xb8] sm:$0xff] %v5062
        %5095 = vst [vmem:[%s219 + $0xc0] sm:$0xff] %v5063
        %5096 = vst [vmem:[%s219 + $0xc8] sm:$0xff] %v5064
        %5097 = vst [vmem:[%s219 + $0xd0] sm:$0xff] %v5065
        %5098 = vst [vmem:[%s219 + $0xd8] sm:$0xff] %v5066
        %5099 = vst [vmem:[%s219 + $0xe0] sm:$0xff] %v5067
        %5100 = vst [vmem:[%s219 + $0xe8] sm:$0xff] %v5068
        %5101 = vst [vmem:[%s219 + $0xf0] sm:$0xff] %v5069
        %5102 = vst [vmem:[%s219 + $0xf8] sm:$0xff] %v5070
        %s5103 = sand.u32 %s139, 1
        %s5104 = scalar_lea.sflag [#allocation6], %s5103
        %s5105 = sand.u32 %s139, 1
        %s5106 = smul.addr %s5105, 256
        %s5107 = scalar_lea.vmem [#allocation5], %s5106
        // Predicated region
        $region41: #{sa_layer_nchw.1} parent=39 // pred_check
          %p5108 = pneg %p149
        $region42: #{sa_layer_nchw.1} parent=39 // pred_check_branch
          %5110 = sbr.rel (%p5108) target = $region44
        $region43: #{sa_layer_nchw.1} parent=39 // pred_region
          %5112 = vsyncadd %s5104, 0
          %s5113 = smul.addr %s21, 32
          %s5114 = smul.addr %s5113, 8
          %s5115 = scalar_lea.hbm %s5, %s5114
          %s5116 = sshll.u32 %s5107, 4
          %s5117 = int_to_ptr.vmem [resolvable:$true] %s5116
          %s5118 = sshll.u32 %s5115, 4
          %s5119 = int_to_ptr.hbm [resolvable:$true] %s5118
          %5124 = dma.vmem_to_hbm [thread:$0]  %s5117, 4096, %s5119, %s5104, 128, 128, 8
        $region44: #{sa_layer_nchw.1} parent=39 // pred_fallthru
          _
      $region40: #{sa_layer_nchw.1} parent=5 // pred_fallthru
        _
      %p5125 = scmp.le.s32.totalorder 2, %s16
      // Predicated region
      $region45: #{sa_layer_nchw.1} parent=5 // pred_check
        %p5126 = pneg %p5125
      $region46: #{sa_layer_nchw.1} parent=5 // pred_check_branch
        %5128 = sbr.rel (%p5126) target = $region48
      $region47: #{sa_layer_nchw.1} parent=5 // pred_region
        %s5129 = ssub.s32 %s16, 2
        // Predicated region
        $region49: #{sa_layer_nchw.1} parent=47 // pred_check
          %p5130 = pneg %p155
        $region50: #{sa_layer_nchw.1} parent=47 // pred_check_branch
          %5132 = sbr.rel (%p5130) target = $region52
        $region51: #{sa_layer_nchw.1} parent=47 // pred_region
          %s5133 = sand.u32 %s140, 1
          %s5134 = scalar_lea.sflag [#allocation6], %s5133
          %s5135 = sand.u32 %s140, 1
          %s5136 = smul.addr %s5135, 256
          %s5137 = scalar_lea.vmem [#allocation5], %s5136
          %5139 = dma.done %s5134, 4096
        $region52: #{sa_layer_nchw.1} parent=47 // pred_fallthru
          _
      $region48: #{sa_layer_nchw.1} parent=5 // pred_fallthru
        _
    $region6: #{sa_layer_nchw.1} parent=1 // loop_footer
      %s20 = sadd.s32 1, %s16
    $region7: #{sa_layer_nchw.1} parent=1 // loop_footer_branch
      %15 = sbr.rel target = $region3
    $region8: #{sa_layer_nchw.1} parent=1 // loop_exit
      _
    %5140 = vsyncpa [#allocation6], 1
    %s5141 = scalar_lea.sflag [#allocation6], 1
    %5142 = vsyncpa %s5141, 1

</llo_original>
